<compile_context>
chip_gen: v5e
topology: v5e:2x2
jax: 0.10.0
libtpu: 0.0.40
codegen_flags: <defaults>
</compile_context>

<pallas_src>
import functools
import math

import jax
import jax.numpy as jnp
from jax.experimental import pallas as pl
from jax.experimental.pallas import tpu as pltpu


# ---------------- fused Pallas kernel ----------------

def _fused_unet_kernel(xpad_ref, ctx_ref, temb_ref,
                       tw1_ref, tb1_ref, tw2_ref, tb2_ref,
                       wci_ref, bci_ref,
                       wq_ref, wk_ref, wv_ref, wo_ref, bo_ref,
                       wcoT_ref, bco_ref,
                       out_ref, hpad_ref, *, H, W, attn_scale):
    """One grid step = one element of the CFG-duplicated batch."""
    f32 = jnp.float32
    bf16 = jnp.bfloat16
    HW = H * W
    Cin = xpad_ref.shape[-1]
    ch = wq_ref.shape[0]
    Cout = wcoT_ref.shape[1]

    # ---- timestep-embedding MLP (tiny; fused prologue) ----
    t0 = jnp.dot(temb_ref[...], tw1_ref[...],
                 preferred_element_type=f32) + tb1_ref[...]
    t0 = t0 * jax.nn.sigmoid(t0)                                   # SiLU (f32)
    temb = jnp.dot(t0, tw2_ref[...],
                   preferred_element_type=f32) + tb2_ref[...]      # [1, ch]

    # ---- conv_in: 3x3 SAME conv as 9 shifted-window matmuls (in-kernel im2col) ----
    acc = jnp.zeros((HW, ch), f32)
    for k9 in range(9):
        dy, dx = divmod(k9, 3)
        xs = xpad_ref[pl.ds(dy, H), pl.ds(dx, W), :].reshape(HW, Cin)
        acc = acc + jnp.dot(xs.astype(bf16), wci_ref[k9],
                            preferred_element_type=f32)
    acc = acc + bci_ref[...] + temb               # time emb folded into the bias
    h = acc * jax.nn.sigmoid(acc)                 # SiLU (f32), [HW, ch]

    # ---- cross-attention over encoder_hidden_states (fused q/k/v/o + residual) ----
    ctx = ctx_ref[...]                                             # [S, D] bf16
    q = jnp.dot(h.astype(bf16), wq_ref[...], preferred_element_type=f32)
    k = jnp.dot(ctx, wk_ref[...], preferred_element_type=f32)
    v = jnp.dot(ctx, wv_ref[...], preferred_element_type=f32)
    s = jax.lax.dot_general(q.astype(bf16), k.astype(bf16),
                            (((1,), (1,)), ((), ())),    # contract on C (no k.T)
                            preferred_element_type=f32) * attn_scale
    m = jnp.max(s, axis=-1, keepdims=True)
    p = jnp.exp(s - m)                                             # f32 softmax
    l = jnp.sum(p, axis=-1, keepdims=True)
    p = p * pl.reciprocal(l, approx=True)
    attn = jnp.dot(p.astype(bf16), v.astype(bf16), preferred_element_type=f32)
    o = jnp.dot(attn.astype(bf16), wo_ref[...],
                preferred_element_type=f32) + bo_ref[...]
    h = h + o                                                      # residual (f32)

    # ---- conv_out: zero-pad h into VMEM scratch, then 9 shifted-window matmuls.
    # Result is produced TRANSPOSED as [Cout, HW] (trans-B dot_general, no
    # explicit transpose op), so the store is lane-dense (HW=256 lanes) and the
    # wrapper reshapes straight to NCHW.
    hpad_ref[...] = jnp.zeros((H + 2, W + 2, ch), f32)
    hpad_ref[pl.ds(1, H), pl.ds(1, W), :] = h.reshape(H, W, ch)
    out = jnp.zeros((Cout, HW), f32)
    for k9 in range(9):
        dy, dx = divmod(k9, 3)
        hs = hpad_ref[pl.ds(dy, H), pl.ds(dx, W), :].reshape(HW, ch)
        # out[co, hw] += sum_c wcoT[k9][co, c] * hs[hw, c]
        out = out + jax.lax.dot_general(wcoT_ref[k9], hs.astype(bf16),
                                        (((1,), (1,)), ((), ())),
                                        preferred_element_type=f32)
    out_ref[...] = (out + bco_ref[...]).astype(out_ref.dtype)


# ---------------- JAX glue ----------------

def timestep_embedding(t, dim):
    half = dim // 2
    freqs = jnp.exp(-math.log(10000.0) *
                    jnp.arange(half, dtype=jnp.float32) / half)
    args = jnp.asarray(t, jnp.float32) * freqs
    return jnp.concatenate([jnp.sin(args), jnp.cos(args)])[None, :]  # [1, dim]


def init_unet_params(key, in_ch=4, ch=32, ctx_dim=32, time_dim=32):
    ks = jax.random.split(key, 8)

    def w(k, shape, scale=0.1):
        return jax.random.normal(k, shape, jnp.float32) * scale

    return {
        "conv_in_w": w(ks[0], (3, 3, in_ch, ch)),      # [kh, kw, Cin, Cout]
        "conv_in_b": jnp.zeros((ch,), jnp.float32),
        "time_w1": w(ks[1], (time_dim, ch)),
        "time_b1": jnp.zeros((ch,), jnp.float32),
        "time_w2": w(ks[2], (ch, ch)),
        "time_b2": jnp.zeros((ch,), jnp.float32),
        "wq": w(ks[3], (ch, ch)),
        "wk": w(ks[4], (ctx_dim, ch)),
        "wv": w(ks[5], (ctx_dim, ch)),
        "wo": w(ks[6], (ch, ch)),
        "bo": jnp.zeros((ch,), jnp.float32),
        "conv_out_w": w(ks[7], (3, 3, ch, in_ch)),
        "conv_out_b": jnp.zeros((in_ch,), jnp.float32),
    }


def unet_apply(params, x_nchw, t, ctx):
    """Synthetic UNet: x_nchw [B2,Cin,H,W], ctx [B2,S,D] -> [B2,Cin,H,W]."""
    B2, Cin, H, W = x_nchw.shape
    ch = params["conv_in_b"].shape[0]
    time_dim = params["time_w1"].shape[0]
    S, D = ctx.shape[1], ctx.shape[2]
    HW = H * W
    f32, bf16 = jnp.float32, jnp.bfloat16

    # NCHW -> padded NHWC slab; the 2-pixel border is the only extra HBM traffic.
    x_nhwc = jnp.transpose(x_nchw, (0, 2, 3, 1)).astype(f32)
    xpad = jnp.pad(x_nhwc, ((0, 0), (1, 1), (1, 1), (0, 0)))

    temb_sin = timestep_embedding(t, time_dim)                     # [1, time_dim]
    wci = params["conv_in_w"].reshape(9, Cin, ch).astype(bf16)     # per-tap weights
    # conv_out taps pre-transposed to [9, Cout, ch] so the kernel emits [Cout, HW].
    wcoT = jnp.transpose(params["conv_out_w"].reshape(9, ch, Cin),
                         (0, 2, 1)).astype(bf16)

    kernel = functools.partial(_fused_unet_kernel, H=H, W=W,
                               attn_scale=1.0 / math.sqrt(ch))

    out_t = pl.pallas_call(
        kernel,
        out_shape=jax.ShapeDtypeStruct((B2, Cin, HW), f32),
        grid=(B2,),
        in_specs=[
            pl.BlockSpec((None, H + 2, W + 2, Cin), lambda b: (b, 0, 0, 0)),
            pl.BlockSpec((None, S, D), lambda b: (b, 0, 0)),
            pl.BlockSpec((1, time_dim), lambda b: (0, 0)),
            pl.BlockSpec((time_dim, ch), lambda b: (0, 0)),
            pl.BlockSpec((1, ch), lambda b: (0, 0)),
            pl.BlockSpec((ch, ch), lambda b: (0, 0)),
            pl.BlockSpec((1, ch), lambda b: (0, 0)),
            pl.BlockSpec((9, Cin, ch), lambda b: (0, 0, 0)),
            pl.BlockSpec((1, ch), lambda b: (0, 0)),
            pl.BlockSpec((ch, ch), lambda b: (0, 0)),
            pl.BlockSpec((D, ch), lambda b: (0, 0)),
            pl.BlockSpec((D, ch), lambda b: (0, 0)),
            pl.BlockSpec((ch, ch), lambda b: (0, 0)),
            pl.BlockSpec((1, ch), lambda b: (0, 0)),
            pl.BlockSpec((9, Cin, ch), lambda b: (0, 0, 0)),   # wcoT [9, Cout, ch]
            pl.BlockSpec((Cin, 1), lambda b: (0, 0)),          # bco  [Cout, 1]
        ],
        out_specs=pl.BlockSpec((None, Cin, HW), lambda b: (b, 0, 0)),
        scratch_shapes=[pltpu.VMEM((H + 2, W + 2, ch), f32)],
        compiler_params=pltpu.CompilerParams(
            dimension_semantics=("parallel",)),
    )(
        xpad,
        ctx.astype(bf16),
        temb_sin.astype(f32),
        params["time_w1"].astype(f32),
        params["time_b1"].reshape(1, ch).astype(f32),
        params["time_w2"].astype(f32),
        params["time_b2"].reshape(1, ch).astype(f32),
        wci,
        params["conv_in_b"].reshape(1, ch).astype(f32),
        params["wq"].astype(bf16),
        params["wk"].astype(bf16),
        params["wv"].astype(bf16),
        params["wo"].astype(bf16),
        params["bo"].reshape(1, ch).astype(f32),
        wcoT,
        params["conv_out_b"].reshape(Cin, 1).astype(f32),
    )
    # Output is already channels-first: straight reshape to NCHW (no transpose).
    return out_t.reshape(B2, Cin, H, W)


def unet_wrapper_forward(params, text_embeddings, uncond_embeddings, latents, t,
                         height=512, width=512, batch_size=1, guidance_scale=7.5):
    # torch.cat([uncond_embeddings, text_embeddings])
    text_embeddings = jnp.concatenate([uncond_embeddings, text_embeddings], axis=0)
    # torch.cat([latents] * 2) if guidance_scale > 1.0 else latents
    latent_model_input = (jnp.concatenate([latents, latents], axis=0)
                          if guidance_scale > 1.0 else latents)
    noise_pred = unet_apply(params, latent_model_input, t, text_embeddings)
    if guidance_scale > 1.0:
        half = noise_pred.shape[0] // 2
        uncond_p, text_p = noise_pred[:half], noise_pred[half:]
        # CFG combine: tiny elementwise op, fused by XLA with the reshape above.
        noise_pred = uncond_p + guidance_scale * (text_p - uncond_p)
    return noise_pred, latents, t


if __name__ == "__main__":
    key = jax.random.PRNGKey(0)
    k1, k2, k3, k4 = jax.random.split(key, 4)

    B, Cin, H, W = 1, 4, 16, 16      # batch_size=1 latents (NCHW, like PyTorch)
    S, D = 8, 32                     # encoder_hidden_states seq / hidden

    text_embeddings = jax.random.normal(k1, (B, S, D), jnp.float32)
    uncond_embeddings = jax.random.normal(k2, (B, S, D), jnp.float32)
    latents = jax.random.normal(k3, (B, Cin, H, W), jnp.float32)
    t = jnp.float32(10.0)

    params = init_unet_params(k4, in_ch=Cin, ch=32, ctx_dim=D, time_dim=32)

    fwd = jax.jit(unet_wrapper_forward,
                  static_argnames=("height", "width", "batch_size",
                                   "guidance_scale"))
    noise_pred, latents_out, t_out = fwd(
        params, text_embeddings, uncond_embeddings, latents, t,
        height=512, width=512, batch_size=1, guidance_scale=7.5)

    jax.block_until_ready(noise_pred)
    assert noise_pred.shape == (B, Cin, H, W)
    assert noise_pred.dtype == jnp.float32
    assert bool(jnp.all(jnp.isfinite(noise_pred)))
    print("KERNEL_OK")
</pallas_src>

<mosaic_0001>
module attributes {stable_mosaic.version = 11 : i64} {
  func.func @_fused_unet_kernel(%arg0: i32, %arg1: memref<1x18x18x4xf32, #tpu.memory_space<vmem>>, %arg2: memref<1x8x32xbf16, #tpu.memory_space<vmem>>, %arg3: memref<1x32xf32, #tpu.memory_space<vmem>>, %arg4: memref<32x32xf32, #tpu.memory_space<vmem>>, %arg5: memref<1x32xf32, #tpu.memory_space<vmem>>, %arg6: memref<32x32xf32, #tpu.memory_space<vmem>>, %arg7: memref<1x32xf32, #tpu.memory_space<vmem>>, %arg8: memref<9x4x32xbf16, #tpu.memory_space<vmem>>, %arg9: memref<1x32xf32, #tpu.memory_space<vmem>>, %arg10: memref<32x32xbf16, #tpu.memory_space<vmem>>, %arg11: memref<32x32xbf16, #tpu.memory_space<vmem>>, %arg12: memref<32x32xbf16, #tpu.memory_space<vmem>>, %arg13: memref<32x32xbf16, #tpu.memory_space<vmem>>, %arg14: memref<1x32xf32, #tpu.memory_space<vmem>>, %arg15: memref<9x4x32xbf16, #tpu.memory_space<vmem>>, %arg16: memref<4x1xf32, #tpu.memory_space<vmem>>, %arg17: memref<1x4x256xf32, #tpu.memory_space<vmem>>, %arg18: memref<18x18x32xf32, #tpu.memory_space<vmem>>) attributes {dimension_semantics = [#tpu.dimension_semantics<parallel>], iteration_bounds = array<i64: 2>, scalar_prefetch = 0 : i64, scratch_operands = 1 : i64, tpu.core_type = #tpu.core_type<tc>, window_params = [{transform_indices = @transform_0, window_bounds = array<i64: 1, 18, 18, 4>}, {transform_indices = @transform_1, window_bounds = array<i64: 1, 8, 32>}, {pipeline_mode = #tpu.pipeline_mode<synchronous>, transform_indices = @transform_2, window_bounds = array<i64: 1, 32>}, {pipeline_mode = #tpu.pipeline_mode<synchronous>, transform_indices = @transform_3, window_bounds = array<i64: 32, 32>}, {pipeline_mode = #tpu.pipeline_mode<synchronous>, transform_indices = @transform_4, window_bounds = array<i64: 1, 32>}, {pipeline_mode = #tpu.pipeline_mode<synchronous>, transform_indices = @transform_5, window_bounds = array<i64: 32, 32>}, {pipeline_mode = #tpu.pipeline_mode<synchronous>, transform_indices = @transform_6, window_bounds = array<i64: 1, 32>}, {pipeline_mode = #tpu.pipeline_mode<synchronous>, transform_indices = @transform_7, window_bounds = array<i64: 9, 4, 32>}, {pipeline_mode = #tpu.pipeline_mode<synchronous>, transform_indices = @transform_8, window_bounds = array<i64: 1, 32>}, {pipeline_mode = #tpu.pipeline_mode<synchronous>, transform_indices = @transform_9, window_bounds = array<i64: 32, 32>}, {pipeline_mode = #tpu.pipeline_mode<synchronous>, transform_indices = @transform_10, window_bounds = array<i64: 32, 32>}, {pipeline_mode = #tpu.pipeline_mode<synchronous>, transform_indices = @transform_11, window_bounds = array<i64: 32, 32>}, {pipeline_mode = #tpu.pipeline_mode<synchronous>, transform_indices = @transform_12, window_bounds = array<i64: 32, 32>}, {pipeline_mode = #tpu.pipeline_mode<synchronous>, transform_indices = @transform_13, window_bounds = array<i64: 1, 32>}, {pipeline_mode = #tpu.pipeline_mode<synchronous>, transform_indices = @transform_14, window_bounds = array<i64: 9, 4, 32>}, {pipeline_mode = #tpu.pipeline_mode<synchronous>, transform_indices = @transform_15, window_bounds = array<i64: 4, 1>}, {transform_indices = @transform_16, window_bounds = array<i64: 1, 4, 256>}]} {
    %c0 = arith.constant 0 : index
    %c0_0 = arith.constant 0 : index
    %0 = vector.load %arg3[%c0, %c0_0] : memref<1x32xf32, #tpu.memory_space<vmem>>, vector<1x32xf32>
    %c0_1 = arith.constant 0 : index
    %c0_2 = arith.constant 0 : index
    %1 = vector.load %arg4[%c0_1, %c0_2] : memref<32x32xf32, #tpu.memory_space<vmem>>, vector<32x32xf32>
    %cst = arith.constant dense<0.000000e+00> : vector<1x32xf32>
    %2 = tpu.matmul %0, %1, %cst {dimension_numbers = #tpu.dot_dimension_numbers<[1], [0], [0], [1], [0, 0, 1, 1], [], []>} : vector<1x32xf32>, vector<32x32xf32>, vector<1x32xf32> -> vector<1x32xf32>
    %c0_3 = arith.constant 0 : index
    %c0_4 = arith.constant 0 : index
    %3 = vector.load %arg5[%c0_3, %c0_4] : memref<1x32xf32, #tpu.memory_space<vmem>>, vector<1x32xf32>
    %4 = arith.addf %2, %3 : vector<1x32xf32>
    %5 = arith.negf %4 : vector<1x32xf32>
    %6 = math.exp %5 : vector<1x32xf32>
    %cst_5 = arith.constant 1.000000e+00 : f32
    %7 = vector.broadcast %cst_5 : f32 to vector<1x32xf32>
    %8 = arith.addf %7, %6 : vector<1x32xf32>
    %9 = arith.divf %7, %8 : vector<1x32xf32>
    %10 = arith.mulf %4, %9 : vector<1x32xf32>
    %c0_6 = arith.constant 0 : index
    %c0_7 = arith.constant 0 : index
    %11 = vector.load %arg6[%c0_6, %c0_7] : memref<32x32xf32, #tpu.memory_space<vmem>>, vector<32x32xf32>
    %cst_8 = arith.constant dense<0.000000e+00> : vector<1x32xf32>
    %12 = tpu.matmul %10, %11, %cst_8 {dimension_numbers = #tpu.dot_dimension_numbers<[1], [0], [0], [1], [0, 0, 1, 1], [], []>} : vector<1x32xf32>, vector<32x32xf32>, vector<1x32xf32> -> vector<1x32xf32>
    %c0_9 = arith.constant 0 : index
    %c0_10 = arith.constant 0 : index
    %13 = vector.load %arg7[%c0_9, %c0_10] : memref<1x32xf32, #tpu.memory_space<vmem>>, vector<1x32xf32>
    %14 = arith.addf %12, %13 : vector<1x32xf32>
    %cst_11 = arith.constant 0.000000e+00 : f32
    %15 = vector.broadcast %cst_11 : f32 to vector<256x32xf32>
    %c0_12 = arith.constant 0 : index
    %c0_13 = arith.constant 0 : index
    %c0_14 = arith.constant 0 : index
    %c0_15 = arith.constant 0 : index
    %16 = vector.load %arg1[%c0_12, %c0_13, %c0_14, %c0_15] : memref<1x18x18x4xf32, #tpu.memory_space<vmem>>, vector<1x16x16x4xf32>
    %17 = vector.shape_cast %16 : vector<1x16x16x4xf32> to vector<16x16x4xf32>
    %18 = vector.shape_cast %17 : vector<16x16x4xf32> to vector<256x4xf32>
    %19 = arith.truncf %18 : vector<256x4xf32> to vector<256x4xbf16>
    %c0_16 = arith.constant 0 : index
    %c0_17 = arith.constant 0 : index
    %c0_18 = arith.constant 0 : index
    %20 = vector.load %arg8[%c0_16, %c0_17, %c0_18] : memref<9x4x32xbf16, #tpu.memory_space<vmem>>, vector<1x4x32xbf16>
    %21 = vector.shape_cast %20 : vector<1x4x32xbf16> to vector<4x32xbf16>
    %cst_19 = arith.constant dense<0.000000e+00> : vector<256x32xf32>
    %22 = tpu.matmul %19, %21, %cst_19 {dimension_numbers = #tpu.dot_dimension_numbers<[1], [0], [0], [1], [0, 0, 1, 1], [], []>} : vector<256x4xbf16>, vector<4x32xbf16>, vector<256x32xf32> -> vector<256x32xf32>
    %23 = arith.addf %15, %22 : vector<256x32xf32>
    %c0_20 = arith.constant 0 : index
    %c0_21 = arith.constant 0 : index
    %c1 = arith.constant 1 : index
    %c0_22 = arith.constant 0 : index
    %24 = vector.load %arg1[%c0_20, %c0_21, %c1, %c0_22] : memref<1x18x18x4xf32, #tpu.memory_space<vmem>>, vector<1x16x16x4xf32>
    %25 = vector.shape_cast %24 : vector<1x16x16x4xf32> to vector<16x16x4xf32>
    %26 = vector.shape_cast %25 : vector<16x16x4xf32> to vector<256x4xf32>
    %27 = arith.truncf %26 : vector<256x4xf32> to vector<256x4xbf16>
    %c1_23 = arith.constant 1 : index
    %c0_24 = arith.constant 0 : index
    %c0_25 = arith.constant 0 : index
    %28 = vector.load %arg8[%c1_23, %c0_24, %c0_25] : memref<9x4x32xbf16, #tpu.memory_space<vmem>>, vector<1x4x32xbf16>
    %29 = vector.shape_cast %28 : vector<1x4x32xbf16> to vector<4x32xbf16>
    %cst_26 = arith.constant dense<0.000000e+00> : vector<256x32xf32>
    %30 = tpu.matmul %27, %29, %cst_26 {dimension_numbers = #tpu.dot_dimension_numbers<[1], [0], [0], [1], [0, 0, 1, 1], [], []>} : vector<256x4xbf16>, vector<4x32xbf16>, vector<256x32xf32> -> vector<256x32xf32>
    %31 = arith.addf %23, %30 : vector<256x32xf32>
    %c0_27 = arith.constant 0 : index
    %c0_28 = arith.constant 0 : index
    %c2 = arith.constant 2 : index
    %c0_29 = arith.constant 0 : index
    %32 = vector.load %arg1[%c0_27, %c0_28, %c2, %c0_29] : memref<1x18x18x4xf32, #tpu.memory_space<vmem>>, vector<1x16x16x4xf32>
    %33 = vector.shape_cast %32 : vector<1x16x16x4xf32> to vector<16x16x4xf32>
    %34 = vector.shape_cast %33 : vector<16x16x4xf32> to vector<256x4xf32>
    %35 = arith.truncf %34 : vector<256x4xf32> to vector<256x4xbf16>
    %c2_30 = arith.constant 2 : index
    %c0_31 = arith.constant 0 : index
    %c0_32 = arith.constant 0 : index
    %36 = vector.load %arg8[%c2_30, %c0_31, %c0_32] : memref<9x4x32xbf16, #tpu.memory_space<vmem>>, vector<1x4x32xbf16>
    %37 = vector.shape_cast %36 : vector<1x4x32xbf16> to vector<4x32xbf16>
    %cst_33 = arith.constant dense<0.000000e+00> : vector<256x32xf32>
    %38 = tpu.matmul %35, %37, %cst_33 {dimension_numbers = #tpu.dot_dimension_numbers<[1], [0], [0], [1], [0, 0, 1, 1], [], []>} : vector<256x4xbf16>, vector<4x32xbf16>, vector<256x32xf32> -> vector<256x32xf32>
    %39 = arith.addf %31, %38 : vector<256x32xf32>
    %c0_34 = arith.constant 0 : index
    %c1_35 = arith.constant 1 : index
    %c0_36 = arith.constant 0 : index
    %c0_37 = arith.constant 0 : index
    %40 = vector.load %arg1[%c0_34, %c1_35, %c0_36, %c0_37] : memref<1x18x18x4xf32, #tpu.memory_space<vmem>>, vector<1x16x16x4xf32>
    %41 = vector.shape_cast %40 : vector<1x16x16x4xf32> to vector<16x16x4xf32>
    %42 = vector.shape_cast %41 : vector<16x16x4xf32> to vector<256x4xf32>
    %43 = arith.truncf %42 : vector<256x4xf32> to vector<256x4xbf16>
    %c3 = arith.constant 3 : index
    %c0_38 = arith.constant 0 : index
    %c0_39 = arith.constant 0 : index
    %44 = vector.load %arg8[%c3, %c0_38, %c0_39] : memref<9x4x32xbf16, #tpu.memory_space<vmem>>, vector<1x4x32xbf16>
    %45 = vector.shape_cast %44 : vector<1x4x32xbf16> to vector<4x32xbf16>
    %cst_40 = arith.constant dense<0.000000e+00> : vector<256x32xf32>
    %46 = tpu.matmul %43, %45, %cst_40 {dimension_numbers = #tpu.dot_dimension_numbers<[1], [0], [0], [1], [0, 0, 1, 1], [], []>} : vector<256x4xbf16>, vector<4x32xbf16>, vector<256x32xf32> -> vector<256x32xf32>
    %47 = arith.addf %39, %46 : vector<256x32xf32>
    %c0_41 = arith.constant 0 : index
    %c1_42 = arith.constant 1 : index
    %c1_43 = arith.constant 1 : index
    %c0_44 = arith.constant 0 : index
    %48 = vector.load %arg1[%c0_41, %c1_42, %c1_43, %c0_44] : memref<1x18x18x4xf32, #tpu.memory_space<vmem>>, vector<1x16x16x4xf32>
    %49 = vector.shape_cast %48 : vector<1x16x16x4xf32> to vector<16x16x4xf32>
    %50 = vector.shape_cast %49 : vector<16x16x4xf32> to vector<256x4xf32>
    %51 = arith.truncf %50 : vector<256x4xf32> to vector<256x4xbf16>
    %c4 = arith.constant 4 : index
    %c0_45 = arith.constant 0 : index
    %c0_46 = arith.constant 0 : index
    %52 = vector.load %arg8[%c4, %c0_45, %c0_46] : memref<9x4x32xbf16, #tpu.memory_space<vmem>>, vector<1x4x32xbf16>
    %53 = vector.shape_cast %52 : vector<1x4x32xbf16> to vector<4x32xbf16>
    %cst_47 = arith.constant dense<0.000000e+00> : vector<256x32xf32>
    %54 = tpu.matmul %51, %53, %cst_47 {dimension_numbers = #tpu.dot_dimension_numbers<[1], [0], [0], [1], [0, 0, 1, 1], [], []>} : vector<256x4xbf16>, vector<4x32xbf16>, vector<256x32xf32> -> vector<256x32xf32>
    %55 = arith.addf %47, %54 : vector<256x32xf32>
    %c0_48 = arith.constant 0 : index
    %c1_49 = arith.constant 1 : index
    %c2_50 = arith.constant 2 : index
    %c0_51 = arith.constant 0 : index
    %56 = vector.load %arg1[%c0_48, %c1_49, %c2_50, %c0_51] : memref<1x18x18x4xf32, #tpu.memory_space<vmem>>, vector<1x16x16x4xf32>
    %57 = vector.shape_cast %56 : vector<1x16x16x4xf32> to vector<16x16x4xf32>
    %58 = vector.shape_cast %57 : vector<16x16x4xf32> to vector<256x4xf32>
    %59 = arith.truncf %58 : vector<256x4xf32> to vector<256x4xbf16>
    %c5 = arith.constant 5 : index
    %c0_52 = arith.constant 0 : index
    %c0_53 = arith.constant 0 : index
    %60 = vector.load %arg8[%c5, %c0_52, %c0_53] : memref<9x4x32xbf16, #tpu.memory_space<vmem>>, vector<1x4x32xbf16>
    %61 = vector.shape_cast %60 : vector<1x4x32xbf16> to vector<4x32xbf16>
    %cst_54 = arith.constant dense<0.000000e+00> : vector<256x32xf32>
    %62 = tpu.matmul %59, %61, %cst_54 {dimension_numbers = #tpu.dot_dimension_numbers<[1], [0], [0], [1], [0, 0, 1, 1], [], []>} : vector<256x4xbf16>, vector<4x32xbf16>, vector<256x32xf32> -> vector<256x32xf32>
    %63 = arith.addf %55, %62 : vector<256x32xf32>
    %c0_55 = arith.constant 0 : index
    %c2_56 = arith.constant 2 : index
    %c0_57 = arith.constant 0 : index
    %c0_58 = arith.constant 0 : index
    %64 = vector.load %arg1[%c0_55, %c2_56, %c0_57, %c0_58] : memref<1x18x18x4xf32, #tpu.memory_space<vmem>>, vector<1x16x16x4xf32>
    %65 = vector.shape_cast %64 : vector<1x16x16x4xf32> to vector<16x16x4xf32>
    %66 = vector.shape_cast %65 : vector<16x16x4xf32> to vector<256x4xf32>
    %67 = arith.truncf %66 : vector<256x4xf32> to vector<256x4xbf16>
    %c6 = arith.constant 6 : index
    %c0_59 = arith.constant 0 : index
    %c0_60 = arith.constant 0 : index
    %68 = vector.load %arg8[%c6, %c0_59, %c0_60] : memref<9x4x32xbf16, #tpu.memory_space<vmem>>, vector<1x4x32xbf16>
    %69 = vector.shape_cast %68 : vector<1x4x32xbf16> to vector<4x32xbf16>
    %cst_61 = arith.constant dense<0.000000e+00> : vector<256x32xf32>
    %70 = tpu.matmul %67, %69, %cst_61 {dimension_numbers = #tpu.dot_dimension_numbers<[1], [0], [0], [1], [0, 0, 1, 1], [], []>} : vector<256x4xbf16>, vector<4x32xbf16>, vector<256x32xf32> -> vector<256x32xf32>
    %71 = arith.addf %63, %70 : vector<256x32xf32>
    %c0_62 = arith.constant 0 : index
    %c2_63 = arith.constant 2 : index
    %c1_64 = arith.constant 1 : index
    %c0_65 = arith.constant 0 : index
    %72 = vector.load %arg1[%c0_62, %c2_63, %c1_64, %c0_65] : memref<1x18x18x4xf32, #tpu.memory_space<vmem>>, vector<1x16x16x4xf32>
    %73 = vector.shape_cast %72 : vector<1x16x16x4xf32> to vector<16x16x4xf32>
    %74 = vector.shape_cast %73 : vector<16x16x4xf32> to vector<256x4xf32>
    %75 = arith.truncf %74 : vector<256x4xf32> to vector<256x4xbf16>
    %c7 = arith.constant 7 : index
    %c0_66 = arith.constant 0 : index
    %c0_67 = arith.constant 0 : index
    %76 = vector.load %arg8[%c7, %c0_66, %c0_67] : memref<9x4x32xbf16, #tpu.memory_space<vmem>>, vector<1x4x32xbf16>
    %77 = vector.shape_cast %76 : vector<1x4x32xbf16> to vector<4x32xbf16>
    %cst_68 = arith.constant dense<0.000000e+00> : vector<256x32xf32>
    %78 = tpu.matmul %75, %77, %cst_68 {dimension_numbers = #tpu.dot_dimension_numbers<[1], [0], [0], [1], [0, 0, 1, 1], [], []>} : vector<256x4xbf16>, vector<4x32xbf16>, vector<256x32xf32> -> vector<256x32xf32>
    %79 = arith.addf %71, %78 : vector<256x32xf32>
    %c0_69 = arith.constant 0 : index
    %c2_70 = arith.constant 2 : index
    %c2_71 = arith.constant 2 : index
    %c0_72 = arith.constant 0 : index
    %80 = vector.load %arg1[%c0_69, %c2_70, %c2_71, %c0_72] : memref<1x18x18x4xf32, #tpu.memory_space<vmem>>, vector<1x16x16x4xf32>
    %81 = vector.shape_cast %80 : vector<1x16x16x4xf32> to vector<16x16x4xf32>
    %82 = vector.shape_cast %81 : vector<16x16x4xf32> to vector<256x4xf32>
    %83 = arith.truncf %82 : vector<256x4xf32> to vector<256x4xbf16>
    %c8 = arith.constant 8 : index
    %c0_73 = arith.constant 0 : index
    %c0_74 = arith.constant 0 : index
    %84 = vector.load %arg8[%c8, %c0_73, %c0_74] : memref<9x4x32xbf16, #tpu.memory_space<vmem>>, vector<1x4x32xbf16>
    %85 = vector.shape_cast %84 : vector<1x4x32xbf16> to vector<4x32xbf16>
    %cst_75 = arith.constant dense<0.000000e+00> : vector<256x32xf32>
    %86 = tpu.matmul %83, %85, %cst_75 {dimension_numbers = #tpu.dot_dimension_numbers<[1], [0], [0], [1], [0, 0, 1, 1], [], []>} : vector<256x4xbf16>, vector<4x32xbf16>, vector<256x32xf32> -> vector<256x32xf32>
    %87 = arith.addf %79, %86 : vector<256x32xf32>
    %c0_76 = arith.constant 0 : index
    %c0_77 = arith.constant 0 : index
    %88 = vector.load %arg9[%c0_76, %c0_77] : memref<1x32xf32, #tpu.memory_space<vmem>>, vector<1x32xf32>
    %89 = vector.broadcast %88 : vector<1x32xf32> to vector<256x32xf32>
    %90 = arith.addf %87, %89 : vector<256x32xf32>
    %91 = vector.broadcast %14 : vector<1x32xf32> to vector<256x32xf32>
    %92 = arith.addf %90, %91 : vector<256x32xf32>
    %93 = arith.negf %92 : vector<256x32xf32>
    %94 = math.exp %93 : vector<256x32xf32>
    %cst_78 = arith.constant 1.000000e+00 : f32
    %95 = vector.broadcast %cst_78 : f32 to vector<256x32xf32>
    %96 = arith.addf %95, %94 : vector<256x32xf32>
    %97 = arith.divf %95, %96 : vector<256x32xf32>
    %98 = arith.mulf %92, %97 : vector<256x32xf32>
    %c0_79 = arith.constant 0 : index
    %c0_80 = arith.constant 0 : index
    %c0_81 = arith.constant 0 : index
    %99 = vector.load %arg2[%c0_79, %c0_80, %c0_81] : memref<1x8x32xbf16, #tpu.memory_space<vmem>>, vector<1x8x32xbf16>
    %100 = vector.shape_cast %99 : vector<1x8x32xbf16> to vector<8x32xbf16>
    %101 = arith.truncf %98 : vector<256x32xf32> to vector<256x32xbf16>
    %c0_82 = arith.constant 0 : index
    %c0_83 = arith.constant 0 : index
    %102 = vector.load %arg10[%c0_82, %c0_83] : memref<32x32xbf16, #tpu.memory_space<vmem>>, vector<32x32xbf16>
    %cst_84 = arith.constant dense<0.000000e+00> : vector<256x32xf32>
    %103 = tpu.matmul %101, %102, %cst_84 {dimension_numbers = #tpu.dot_dimension_numbers<[1], [0], [0], [1], [0, 0, 1, 1], [], []>} : vector<256x32xbf16>, vector<32x32xbf16>, vector<256x32xf32> -> vector<256x32xf32>
    %c0_85 = arith.constant 0 : index
    %c0_86 = arith.constant 0 : index
    %104 = vector.load %arg11[%c0_85, %c0_86] : memref<32x32xbf16, #tpu.memory_space<vmem>>, vector<32x32xbf16>
    %cst_87 = arith.constant dense<0.000000e+00> : vector<8x32xf32>
    %105 = tpu.matmul %100, %104, %cst_87 {dimension_numbers = #tpu.dot_dimension_numbers<[1], [0], [0], [1], [0, 0, 1, 1], [], []>} : vector<8x32xbf16>, vector<32x32xbf16>, vector<8x32xf32> -> vector<8x32xf32>
    %c0_88 = arith.constant 0 : index
    %c0_89 = arith.constant 0 : index
    %106 = vector.load %arg12[%c0_88, %c0_89] : memref<32x32xbf16, #tpu.memory_space<vmem>>, vector<32x32xbf16>
    %cst_90 = arith.constant dense<0.000000e+00> : vector<8x32xf32>
    %107 = tpu.matmul %100, %106, %cst_90 {dimension_numbers = #tpu.dot_dimension_numbers<[1], [0], [0], [1], [0, 0, 1, 1], [], []>} : vector<8x32xbf16>, vector<32x32xbf16>, vector<8x32xf32> -> vector<8x32xf32>
    %108 = arith.truncf %103 : vector<256x32xf32> to vector<256x32xbf16>
    %109 = arith.truncf %105 : vector<8x32xf32> to vector<8x32xbf16>
    %cst_91 = arith.constant dense<0.000000e+00> : vector<256x8xf32>
    %110 = tpu.matmul %108, %109, %cst_91 {dimension_numbers = #tpu.dot_dimension_numbers<[1], [1], [0], [0], [0, 0, 1, 0], [], []>} : vector<256x32xbf16>, vector<8x32xbf16>, vector<256x8xf32> -> vector<256x8xf32>
    %cst_92 = arith.constant 0.176776692 : f32
    %111 = vector.broadcast %cst_92 : f32 to vector<256x8xf32>
    %112 = arith.mulf %110, %111 : vector<256x8xf32>
    %cst_93 = arith.constant dense<0xFF800000> : vector<256xf32>
    %113 = vector.multi_reduction <maximumf>, %112, %cst_93 [1] : vector<256x8xf32> to vector<256xf32>
    %114 = vector.shape_cast %113 : vector<256xf32> to vector<256x1xf32>
    %115 = vector.broadcast %114 : vector<256x1xf32> to vector<256x8xf32>
    %116 = arith.subf %112, %115 : vector<256x8xf32>
    %117 = math.exp %116 : vector<256x8xf32>
    %cst_94 = arith.constant dense<0.000000e+00> : vector<256xf32>
    %118 = vector.multi_reduction <add>, %117, %cst_94 [1] : vector<256x8xf32> to vector<256xf32>
    %119 = vector.shape_cast %118 : vector<256xf32> to vector<256x1xf32>
    %120 = tpu.reciprocal %119 {approx = true} : vector<256x1xf32> -> vector<256x1xf32>
    %121 = vector.broadcast %120 : vector<256x1xf32> to vector<256x8xf32>
    %122 = arith.mulf %117, %121 : vector<256x8xf32>
    %123 = arith.truncf %122 : vector<256x8xf32> to vector<256x8xbf16>
    %124 = arith.truncf %107 : vector<8x32xf32> to vector<8x32xbf16>
    %cst_95 = arith.constant dense<0.000000e+00> : vector<256x32xf32>
    %125 = tpu.matmul %123, %124, %cst_95 {dimension_numbers = #tpu.dot_dimension_numbers<[1], [0], [0], [1], [0, 0, 1, 1], [], []>} : vector<256x8xbf16>, vector<8x32xbf16>, vector<256x32xf32> -> vector<256x32xf32>
    %126 = arith.truncf %125 : vector<256x32xf32> to vector<256x32xbf16>
    %c0_96 = arith.constant 0 : index
    %c0_97 = arith.constant 0 : index
    %127 = vector.load %arg13[%c0_96, %c0_97] : memref<32x32xbf16, #tpu.memory_space<vmem>>, vector<32x32xbf16>
    %cst_98 = arith.constant dense<0.000000e+00> : vector<256x32xf32>
    %128 = tpu.matmul %126, %127, %cst_98 {dimension_numbers = #tpu.dot_dimension_numbers<[1], [0], [0], [1], [0, 0, 1, 1], [], []>} : vector<256x32xbf16>, vector<32x32xbf16>, vector<256x32xf32> -> vector<256x32xf32>
    %c0_99 = arith.constant 0 : index
    %c0_100 = arith.constant 0 : index
    %129 = vector.load %arg14[%c0_99, %c0_100] : memref<1x32xf32, #tpu.memory_space<vmem>>, vector<1x32xf32>
    %130 = vector.broadcast %129 : vector<1x32xf32> to vector<256x32xf32>
    %131 = arith.addf %128, %130 : vector<256x32xf32>
    %132 = arith.addf %98, %131 : vector<256x32xf32>
    %cst_101 = arith.constant 0.000000e+00 : f32
    %133 = vector.broadcast %cst_101 : f32 to vector<18x18x32xf32>
    %c0_102 = arith.constant 0 : index
    %c0_103 = arith.constant 0 : index
    %c0_104 = arith.constant 0 : index
    %134 = vector.load %arg18[%c0_102, %c0_103, %c0_104] : memref<18x18x32xf32, #tpu.memory_space<vmem>>, vector<18x18x32xf32>
    tpu.vector_store %arg18[%c0_102, %c0_103, %c0_104], %133 {strides = array<i32>} : memref<18x18x32xf32, #tpu.memory_space<vmem>>, vector<18x18x32xf32>,
    %135 = vector.shape_cast %132 : vector<256x32xf32> to vector<16x16x32xf32>
    %c1_105 = arith.constant 1 : index
    %c1_106 = arith.constant 1 : index
    %c0_107 = arith.constant 0 : index
    %136 = vector.load %arg18[%c1_105, %c1_106, %c0_107] : memref<18x18x32xf32, #tpu.memory_space<vmem>>, vector<16x16x32xf32>
    tpu.vector_store %arg18[%c1_105, %c1_106, %c0_107], %135 {strides = array<i32>} : memref<18x18x32xf32, #tpu.memory_space<vmem>>, vector<16x16x32xf32>,
    %cst_108 = arith.constant 0.000000e+00 : f32
    %137 = vector.broadcast %cst_108 : f32 to vector<4x256xf32>
    %c0_109 = arith.constant 0 : index
    %c0_110 = arith.constant 0 : index
    %c0_111 = arith.constant 0 : index
    %138 = vector.load %arg18[%c0_109, %c0_110, %c0_111] : memref<18x18x32xf32, #tpu.memory_space<vmem>>, vector<16x16x32xf32>
    %139 = vector.shape_cast %138 : vector<16x16x32xf32> to vector<256x32xf32>
    %c0_112 = arith.constant 0 : index
    %c0_113 = arith.constant 0 : index
    %c0_114 = arith.constant 0 : index
    %140 = vector.load %arg15[%c0_112, %c0_113, %c0_114] : memref<9x4x32xbf16, #tpu.memory_space<vmem>>, vector<1x4x32xbf16>
    %141 = vector.shape_cast %140 : vector<1x4x32xbf16> to vector<4x32xbf16>
    %142 = arith.truncf %139 : vector<256x32xf32> to vector<256x32xbf16>
    %cst_115 = arith.constant dense<0.000000e+00> : vector<4x256xf32>
    %143 = tpu.matmul %141, %142, %cst_115 {dimension_numbers = #tpu.dot_dimension_numbers<[1], [1], [0], [0], [0, 0, 1, 0], [], []>} : vector<4x32xbf16>, vector<256x32xbf16>, vector<4x256xf32> -> vector<4x256xf32>
    %144 = arith.addf %137, %143 : vector<4x256xf32>
    %c0_116 = arith.constant 0 : index
    %c1_117 = arith.constant 1 : index
    %c0_118 = arith.constant 0 : index
    %145 = vector.load %arg18[%c0_116, %c1_117, %c0_118] : memref<18x18x32xf32, #tpu.memory_space<vmem>>, vector<16x16x32xf32>
    %146 = vector.shape_cast %145 : vector<16x16x32xf32> to vector<256x32xf32>
    %c1_119 = arith.constant 1 : index
    %c0_120 = arith.constant 0 : index
    %c0_121 = arith.constant 0 : index
    %147 = vector.load %arg15[%c1_119, %c0_120, %c0_121] : memref<9x4x32xbf16, #tpu.memory_space<vmem>>, vector<1x4x32xbf16>
    %148 = vector.shape_cast %147 : vector<1x4x32xbf16> to vector<4x32xbf16>
    %149 = arith.truncf %146 : vector<256x32xf32> to vector<256x32xbf16>
    %cst_122 = arith.constant dense<0.000000e+00> : vector<4x256xf32>
    %150 = tpu.matmul %148, %149, %cst_122 {dimension_numbers = #tpu.dot_dimension_numbers<[1], [1], [0], [0], [0, 0, 1, 0], [], []>} : vector<4x32xbf16>, vector<256x32xbf16>, vector<4x256xf32> -> vector<4x256xf32>
    %151 = arith.addf %144, %150 : vector<4x256xf32>
    %c0_123 = arith.constant 0 : index
    %c2_124 = arith.constant 2 : index
    %c0_125 = arith.constant 0 : index
    %152 = vector.load %arg18[%c0_123, %c2_124, %c0_125] : memref<18x18x32xf32, #tpu.memory_space<vmem>>, vector<16x16x32xf32>
    %153 = vector.shape_cast %152 : vector<16x16x32xf32> to vector<256x32xf32>
    %c2_126 = arith.constant 2 : index
    %c0_127 = arith.constant 0 : index
    %c0_128 = arith.constant 0 : index
    %154 = vector.load %arg15[%c2_126, %c0_127, %c0_128] : memref<9x4x32xbf16, #tpu.memory_space<vmem>>, vector<1x4x32xbf16>
    %155 = vector.shape_cast %154 : vector<1x4x32xbf16> to vector<4x32xbf16>
    %156 = arith.truncf %153 : vector<256x32xf32> to vector<256x32xbf16>
    %cst_129 = arith.constant dense<0.000000e+00> : vector<4x256xf32>
    %157 = tpu.matmul %155, %156, %cst_129 {dimension_numbers = #tpu.dot_dimension_numbers<[1], [1], [0], [0], [0, 0, 1, 0], [], []>} : vector<4x32xbf16>, vector<256x32xbf16>, vector<4x256xf32> -> vector<4x256xf32>
    %158 = arith.addf %151, %157 : vector<4x256xf32>
    %c1_130 = arith.constant 1 : index
    %c0_131 = arith.constant 0 : index
    %c0_132 = arith.constant 0 : index
    %159 = vector.load %arg18[%c1_130, %c0_131, %c0_132] : memref<18x18x32xf32, #tpu.memory_space<vmem>>, vector<16x16x32xf32>
    %160 = vector.shape_cast %159 : vector<16x16x32xf32> to vector<256x32xf32>
    %c3_133 = arith.constant 3 : index
    %c0_134 = arith.constant 0 : index
    %c0_135 = arith.constant 0 : index
    %161 = vector.load %arg15[%c3_133, %c0_134, %c0_135] : memref<9x4x32xbf16, #tpu.memory_space<vmem>>, vector<1x4x32xbf16>
    %162 = vector.shape_cast %161 : vector<1x4x32xbf16> to vector<4x32xbf16>
    %163 = arith.truncf %160 : vector<256x32xf32> to vector<256x32xbf16>
    %cst_136 = arith.constant dense<0.000000e+00> : vector<4x256xf32>
    %164 = tpu.matmul %162, %163, %cst_136 {dimension_numbers = #tpu.dot_dimension_numbers<[1], [1], [0], [0], [0, 0, 1, 0], [], []>} : vector<4x32xbf16>, vector<256x32xbf16>, vector<4x256xf32> -> vector<4x256xf32>
    %165 = arith.addf %158, %164 : vector<4x256xf32>
    %c1_137 = arith.constant 1 : index
    %c1_138 = arith.constant 1 : index
    %c0_139 = arith.constant 0 : index
    %166 = vector.load %arg18[%c1_137, %c1_138, %c0_139] : memref<18x18x32xf32, #tpu.memory_space<vmem>>, vector<16x16x32xf32>
    %167 = vector.shape_cast %166 : vector<16x16x32xf32> to vector<256x32xf32>
    %c4_140 = arith.constant 4 : index
    %c0_141 = arith.constant 0 : index
    %c0_142 = arith.constant 0 : index
    %168 = vector.load %arg15[%c4_140, %c0_141, %c0_142] : memref<9x4x32xbf16, #tpu.memory_space<vmem>>, vector<1x4x32xbf16>
    %169 = vector.shape_cast %168 : vector<1x4x32xbf16> to vector<4x32xbf16>
    %170 = arith.truncf %167 : vector<256x32xf32> to vector<256x32xbf16>
    %cst_143 = arith.constant dense<0.000000e+00> : vector<4x256xf32>
    %171 = tpu.matmul %169, %170, %cst_143 {dimension_numbers = #tpu.dot_dimension_numbers<[1], [1], [0], [0], [0, 0, 1, 0], [], []>} : vector<4x32xbf16>, vector<256x32xbf16>, vector<4x256xf32> -> vector<4x256xf32>
    %172 = arith.addf %165, %171 : vector<4x256xf32>
    %c1_144 = arith.constant 1 : index
    %c2_145 = arith.constant 2 : index
    %c0_146 = arith.constant 0 : index
    %173 = vector.load %arg18[%c1_144, %c2_145, %c0_146] : memref<18x18x32xf32, #tpu.memory_space<vmem>>, vector<16x16x32xf32>
    %174 = vector.shape_cast %173 : vector<16x16x32xf32> to vector<256x32xf32>
    %c5_147 = arith.constant 5 : index
    %c0_148 = arith.constant 0 : index
    %c0_149 = arith.constant 0 : index
    %175 = vector.load %arg15[%c5_147, %c0_148, %c0_149] : memref<9x4x32xbf16, #tpu.memory_space<vmem>>, vector<1x4x32xbf16>
    %176 = vector.shape_cast %175 : vector<1x4x32xbf16> to vector<4x32xbf16>
    %177 = arith.truncf %174 : vector<256x32xf32> to vector<256x32xbf16>
    %cst_150 = arith.constant dense<0.000000e+00> : vector<4x256xf32>
    %178 = tpu.matmul %176, %177, %cst_150 {dimension_numbers = #tpu.dot_dimension_numbers<[1], [1], [0], [0], [0, 0, 1, 0], [], []>} : vector<4x32xbf16>, vector<256x32xbf16>, vector<4x256xf32> -> vector<4x256xf32>
    %179 = arith.addf %172, %178 : vector<4x256xf32>
    %c2_151 = arith.constant 2 : index
    %c0_152 = arith.constant 0 : index
    %c0_153 = arith.constant 0 : index
    %180 = vector.load %arg18[%c2_151, %c0_152, %c0_153] : memref<18x18x32xf32, #tpu.memory_space<vmem>>, vector<16x16x32xf32>
    %181 = vector.shape_cast %180 : vector<16x16x32xf32> to vector<256x32xf32>
    %c6_154 = arith.constant 6 : index
    %c0_155 = arith.constant 0 : index
    %c0_156 = arith.constant 0 : index
    %182 = vector.load %arg15[%c6_154, %c0_155, %c0_156] : memref<9x4x32xbf16, #tpu.memory_space<vmem>>, vector<1x4x32xbf16>
    %183 = vector.shape_cast %182 : vector<1x4x32xbf16> to vector<4x32xbf16>
    %184 = arith.truncf %181 : vector<256x32xf32> to vector<256x32xbf16>
    %cst_157 = arith.constant dense<0.000000e+00> : vector<4x256xf32>
    %185 = tpu.matmul %183, %184, %cst_157 {dimension_numbers = #tpu.dot_dimension_numbers<[1], [1], [0], [0], [0, 0, 1, 0], [], []>} : vector<4x32xbf16>, vector<256x32xbf16>, vector<4x256xf32> -> vector<4x256xf32>
    %186 = arith.addf %179, %185 : vector<4x256xf32>
    %c2_158 = arith.constant 2 : index
    %c1_159 = arith.constant 1 : index
    %c0_160 = arith.constant 0 : index
    %187 = vector.load %arg18[%c2_158, %c1_159, %c0_160] : memref<18x18x32xf32, #tpu.memory_space<vmem>>, vector<16x16x32xf32>
    %188 = vector.shape_cast %187 : vector<16x16x32xf32> to vector<256x32xf32>
    %c7_161 = arith.constant 7 : index
    %c0_162 = arith.constant 0 : index
    %c0_163 = arith.constant 0 : index
    %189 = vector.load %arg15[%c7_161, %c0_162, %c0_163] : memref<9x4x32xbf16, #tpu.memory_space<vmem>>, vector<1x4x32xbf16>
    %190 = vector.shape_cast %189 : vector<1x4x32xbf16> to vector<4x32xbf16>
    %191 = arith.truncf %188 : vector<256x32xf32> to vector<256x32xbf16>
    %cst_164 = arith.constant dense<0.000000e+00> : vector<4x256xf32>
    %192 = tpu.matmul %190, %191, %cst_164 {dimension_numbers = #tpu.dot_dimension_numbers<[1], [1], [0], [0], [0, 0, 1, 0], [], []>} : vector<4x32xbf16>, vector<256x32xbf16>, vector<4x256xf32> -> vector<4x256xf32>
    %193 = arith.addf %186, %192 : vector<4x256xf32>
    %c2_165 = arith.constant 2 : index
    %c2_166 = arith.constant 2 : index
    %c0_167 = arith.constant 0 : index
    %194 = vector.load %arg18[%c2_165, %c2_166, %c0_167] : memref<18x18x32xf32, #tpu.memory_space<vmem>>, vector<16x16x32xf32>
    %195 = vector.shape_cast %194 : vector<16x16x32xf32> to vector<256x32xf32>
    %c8_168 = arith.constant 8 : index
    %c0_169 = arith.constant 0 : index
    %c0_170 = arith.constant 0 : index
    %196 = vector.load %arg15[%c8_168, %c0_169, %c0_170] : memref<9x4x32xbf16, #tpu.memory_space<vmem>>, vector<1x4x32xbf16>
    %197 = vector.shape_cast %196 : vector<1x4x32xbf16> to vector<4x32xbf16>
    %198 = arith.truncf %195 : vector<256x32xf32> to vector<256x32xbf16>
    %cst_171 = arith.constant dense<0.000000e+00> : vector<4x256xf32>
    %199 = tpu.matmul %197, %198, %cst_171 {dimension_numbers = #tpu.dot_dimension_numbers<[1], [1], [0], [0], [0, 0, 1, 0], [], []>} : vector<4x32xbf16>, vector<256x32xbf16>, vector<4x256xf32> -> vector<4x256xf32>
    %200 = arith.addf %193, %199 : vector<4x256xf32>
    %c0_172 = arith.constant 0 : index
    %c0_173 = arith.constant 0 : index
    %201 = vector.load %arg16[%c0_172, %c0_173] : memref<4x1xf32, #tpu.memory_space<vmem>>, vector<4x1xf32>
    %202 = vector.broadcast %201 : vector<4x1xf32> to vector<4x256xf32>
    %203 = arith.addf %200, %202 : vector<4x256xf32>
    %c0_174 = arith.constant 0 : index
    %c0_175 = arith.constant 0 : index
    %c0_176 = arith.constant 0 : index
    %204 = vector.load %arg17[%c0_174, %c0_175, %c0_176] : memref<1x4x256xf32, #tpu.memory_space<vmem>>, vector<1x4x256xf32>
    %205 = vector.shape_cast %204 : vector<1x4x256xf32> to vector<4x256xf32>
    %206 = vector.shape_cast %203 : vector<4x256xf32> to vector<1x4x256xf32>
    tpu.vector_store %arg17[%c0_174, %c0_175, %c0_176], %206 {strides = array<i32>} : memref<1x4x256xf32, #tpu.memory_space<vmem>>, vector<1x4x256xf32>,
    return
  }
  func.func @transform_0(%arg0: i32) -> (i32, i32, i32, i32) {
    %c0_i32 = arith.constant 0 : i32
    %c0_i32_0 = arith.constant 0 : i32
    %c0_i32_1 = arith.constant 0 : i32
    %c0_i32_2 = arith.constant 0 : i32
    return %arg0, %c0_i32, %c0_i32_0, %c0_i32_1 : i32, i32, i32, i32
  }
  func.func @transform_1(%arg0: i32) -> (i32, i32, i32) {
    %c0_i32 = arith.constant 0 : i32
    %c0_i32_0 = arith.constant 0 : i32
    %c0_i32_1 = arith.constant 0 : i32
    return %arg0, %c0_i32, %c0_i32_0 : i32, i32, i32
  }
  func.func @transform_2(%arg0: i32) -> (i32, i32) {
    %c0_i32 = arith.constant 0 : i32
    %c0_i32_0 = arith.constant 0 : i32
    %c0_i32_1 = arith.constant 0 : i32
    return %c0_i32, %c0_i32_0 : i32, i32
  }
  func.func @transform_3(%arg0: i32) -> (i32, i32) {
    %c0_i32 = arith.constant 0 : i32
    %c0_i32_0 = arith.constant 0 : i32
    %c0_i32_1 = arith.constant 0 : i32
    return %c0_i32, %c0_i32_0 : i32, i32
  }
  func.func @transform_4(%arg0: i32) -> (i32, i32) {
    %c0_i32 = arith.constant 0 : i32
    %c0_i32_0 = arith.constant 0 : i32
    %c0_i32_1 = arith.constant 0 : i32
    return %c0_i32, %c0_i32_0 : i32, i32
  }
  func.func @transform_5(%arg0: i32) -> (i32, i32) {
    %c0_i32 = arith.constant 0 : i32
    %c0_i32_0 = arith.constant 0 : i32
    %c0_i32_1 = arith.constant 0 : i32
    return %c0_i32, %c0_i32_0 : i32, i32
  }
  func.func @transform_6(%arg0: i32) -> (i32, i32) {
    %c0_i32 = arith.constant 0 : i32
    %c0_i32_0 = arith.constant 0 : i32
    %c0_i32_1 = arith.constant 0 : i32
    return %c0_i32, %c0_i32_0 : i32, i32
  }
  func.func @transform_7(%arg0: i32) -> (i32, i32, i32) {
    %c0_i32 = arith.constant 0 : i32
    %c0_i32_0 = arith.constant 0 : i32
    %c0_i32_1 = arith.constant 0 : i32
    %c0_i32_2 = arith.constant 0 : i32
    return %c0_i32, %c0_i32_0, %c0_i32_1 : i32, i32, i32
  }
  func.func @transform_8(%arg0: i32) -> (i32, i32) {
    %c0_i32 = arith.constant 0 : i32
    %c0_i32_0 = arith.constant 0 : i32
    %c0_i32_1 = arith.constant 0 : i32
    return %c0_i32, %c0_i32_0 : i32, i32
  }
  func.func @transform_9(%arg0: i32) -> (i32, i32) {
    %c0_i32 = arith.constant 0 : i32
    %c0_i32_0 = arith.constant 0 : i32
    %c0_i32_1 = arith.constant 0 : i32
    return %c0_i32, %c0_i32_0 : i32, i32
  }
  func.func @transform_10(%arg0: i32) -> (i32, i32) {
    %c0_i32 = arith.constant 0 : i32
    %c0_i32_0 = arith.constant 0 : i32
    %c0_i32_1 = arith.constant 0 : i32
    return %c0_i32, %c0_i32_0 : i32, i32
  }
  func.func @transform_11(%arg0: i32) -> (i32, i32) {
    %c0_i32 = arith.constant 0 : i32
    %c0_i32_0 = arith.constant 0 : i32
    %c0_i32_1 = arith.constant 0 : i32
    return %c0_i32, %c0_i32_0 : i32, i32
  }
  func.func @transform_12(%arg0: i32) -> (i32, i32) {
    %c0_i32 = arith.constant 0 : i32
    %c0_i32_0 = arith.constant 0 : i32
    %c0_i32_1 = arith.constant 0 : i32
    return %c0_i32, %c0_i32_0 : i32, i32
  }
  func.func @transform_13(%arg0: i32) -> (i32, i32) {
    %c0_i32 = arith.constant 0 : i32
    %c0_i32_0 = arith.constant 0 : i32
    %c0_i32_1 = arith.constant 0 : i32
    return %c0_i32, %c0_i32_0 : i32, i32
  }
  func.func @transform_14(%arg0: i32) -> (i32, i32, i32) {
    %c0_i32 = arith.constant 0 : i32
    %c0_i32_0 = arith.constant 0 : i32
    %c0_i32_1 = arith.constant 0 : i32
    %c0_i32_2 = arith.constant 0 : i32
    return %c0_i32, %c0_i32_0, %c0_i32_1 : i32, i32, i32
  }
  func.func @transform_15(%arg0: i32) -> (i32, i32) {
    %c0_i32 = arith.constant 0 : i32
    %c0_i32_0 = arith.constant 0 : i32
    %c0_i32_1 = arith.constant 0 : i32
    return %c0_i32, %c0_i32_0 : i32, i32
  }
  func.func @transform_16(%arg0: i32) -> (i32, i32, i32) {
    %c0_i32 = arith.constant 0 : i32
    %c0_i32_0 = arith.constant 0 : i32
    %c0_i32_1 = arith.constant 0 : i32
    return %arg0, %c0_i32, %c0_i32_0 : i32, i32, i32
  }
}

</mosaic_0001>

<llo_original>
// kernel: unet_wrapper_forward.1
$region0: #{unet_wrapper_forward.1}
  #allocation0 [shape = 'u32[]', space=smem, size = 0x4, offset = 0x4, fixed_abs, tag = 'smem constant byte address 0x4 - core index']
  #allocation1 [shape = 'u32[72,128]{1,0:T(1,128)}', space=vmem, size = 0x9000, scoped, tag = 'internal scratch']
  #allocation2 [shape = 'f32[18,18,32]{2,1,0:T(8,128)}', space=vmem, size = 0x36000, scoped, tag = 'scratch operand']
  %s0 = inlined_call_operand.vmem [shape: f32[2,18,18,4], index: 0, kind: input, shape index: {}]
  %s1 = inlined_call_operand.vmem [shape: bf16[2,8,32], index: 1, kind: input, shape index: {}]
  %s2 = inlined_call_operand.vmem [shape: f32[1,32], index: 2, kind: input, shape index: {}]
  %s3 = inlined_call_operand.vmem [shape: f32[32,32], index: 3, kind: input, shape index: {}]
  %s4 = inlined_call_operand.vmem [shape: f32[1,32], index: 4, kind: input, shape index: {}]
  %s5 = inlined_call_operand.vmem [shape: f32[32,32], index: 5, kind: input, shape index: {}]
  %s6 = inlined_call_operand.vmem [shape: f32[1,32], index: 6, kind: input, shape index: {}]
  %s7 = inlined_call_operand.vmem [shape: bf16[9,4,32], index: 7, kind: input, shape index: {}]
  %s8 = inlined_call_operand.vmem [shape: f32[1,32], index: 8, kind: input, shape index: {}]
  %s9 = inlined_call_operand.vmem [shape: bf16[32,32], index: 9, kind: input, shape index: {}]
  %s10 = inlined_call_operand.vmem [shape: bf16[32,32], index: 10, kind: input, shape index: {}]
  %s11 = inlined_call_operand.vmem [shape: bf16[32,32], index: 11, kind: input, shape index: {}]
  %s12 = inlined_call_operand.vmem [shape: bf16[32,32], index: 12, kind: input, shape index: {}]
  %s13 = inlined_call_operand.vmem [shape: f32[1,32], index: 13, kind: input, shape index: {}]
  %s14 = inlined_call_operand.vmem [shape: bf16[9,4,32], index: 14, kind: input, shape index: {}]
  %s15 = inlined_call_operand.vmem [shape: f32[4,1], index: 15, kind: input, shape index: {}]
  %s16 = inlined_call_operand.vmem [shape: f32[2,4,256], index: 16, kind: output, shape index: {}]
  %s17 = sld [smem:[#allocation0]]
  $region97: #{unet_wrapper_forward.1} parent=0
    _
  %s19 = ssub.s32 1, %s17
  %s20 = scalar_select 0, %s19, %s17
  loop: start=0, step=1, limit=4
  $region2: #{unet_wrapper_forward.1} parent=0 // loop_pre_header
    _
  $region3: #{unet_wrapper_forward.1} parent=0 // loop_header
    %s22 = sphi 0, %s26
    %p23 = scmp.ge.s32.totalorder %s22, 4
    %s32 = sphi 0, %s34
    %s35 = sphi 0, %s32
    %s36 = sphi 0, %s35
    %s52 = sphi 0, %s36
    %s58 = sphi 0, %s60
    %s61 = sphi 0, %s58
    %s62 = sphi 0, %s61
    %s78 = sphi 0, %s62
    %s82 = sphi 0, %s82
    %s84 = sphi 0, %s82
    %s85 = sphi 0, %s84
    %s99 = sphi 0, %s85
    %s103 = sphi 0, %s103
    %s105 = sphi 0, %s103
    %s106 = sphi 0, %s105
    %s120 = sphi 0, %s106
    %s124 = sphi 0, %s124
    %s126 = sphi 0, %s124
    %s127 = sphi 0, %s126
    %s141 = sphi 0, %s127
    %s145 = sphi 0, %s145
    %s147 = sphi 0, %s145
    %s148 = sphi 0, %s147
    %s162 = sphi 0, %s148
    %s166 = sphi 0, %s166
    %s168 = sphi 0, %s166
    %s169 = sphi 0, %s168
    %s183 = sphi 0, %s169
    %s187 = sphi 0, %s187
    %s189 = sphi 0, %s187
    %s190 = sphi 0, %s189
    %s204 = sphi 0, %s190
    %s208 = sphi 0, %s208
    %s210 = sphi 0, %s208
    %s211 = sphi 0, %s210
    %s225 = sphi 0, %s211
    %s229 = sphi 0, %s229
    %s231 = sphi 0, %s229
    %s232 = sphi 0, %s231
    %s246 = sphi 0, %s232
    %s250 = sphi 0, %s250
    %s252 = sphi 0, %s250
    %s253 = sphi 0, %s252
    %s267 = sphi 0, %s253
    %s271 = sphi 0, %s271
    %s273 = sphi 0, %s271
    %s274 = sphi 0, %s273
    %s288 = sphi 0, %s274
    %s292 = sphi 0, %s292
    %s294 = sphi 0, %s292
    %s295 = sphi 0, %s294
    %s309 = sphi 0, %s295
    %s313 = sphi 0, %s313
    %s315 = sphi 0, %s313
    %s316 = sphi 0, %s315
    %s330 = sphi 0, %s316
    %s334 = sphi 0, %s334
    %s336 = sphi 0, %s334
    %s337 = sphi 0, %s336
    %s351 = sphi 0, %s337
    %s355 = sphi 0, %s355
    %s357 = sphi 0, %s355
    %s358 = sphi 0, %s357
    %s372 = sphi 0, %s358
    %s378 = sphi 0, %s380
    %s381 = sphi 0, %s378
    %s382 = sphi 0, %s381
    %s398 = sphi 0, %s382
  $region4: #{unet_wrapper_forward.1} parent=0 // loop_header_branch
    %25 = sbr.rel (%p23) target = $region8
  $region5: #{unet_wrapper_forward.1} parent=0 // loop_body
    %s27 = ssub.s32 %s22, 1
    %s28 = ssub.s32 %s22, 2
    %s29 = sadd.s32 %s22, 1
    %s30 = ssub.s32 %s22, %s29
    %p31 = scmp.eq.s32.totalorder %s30, 0
    %s33 = sadd.s32 %s32, 1
    %s34 = scalar_select %p31, %s32, %s33
    %p37 = pneg %p31
    %p38 = scmp.eq.s32.totalorder %s22, 1
    %p39 = por %p37, %p38
    %p40 = scmp.ne.s32.totalorder %s32, %s35
    %p41 = scmp.eq.s32.totalorder %s22, 0
    %p42 = por %p40, %p41
    %p43 = scmp.ne.s32.totalorder %s32, %s35
    %p44 = scmp.eq.s32.totalorder %s27, 1
    %p45 = por %p43, %p44
    %p46 = scmp.ne.s32.totalorder %s35, %s36
    %p47 = scmp.eq.s32.totalorder %s27, 0
    %p48 = por %p46, %p47
    %p49 = scmp.ne.s32.totalorder %s35, %s36
    %p50 = scmp.eq.s32.totalorder %s28, 1
    %p51 = por %p49, %p50
    %p53 = scmp.ne.s32.totalorder %s36, %s52
    %p54 = scmp.eq.s32.totalorder %s28, 0
    %p55 = por %p53, %p54
    %s56 = ssub.s32 %s22, %s29
    %p57 = scmp.eq.s32.totalorder %s56, 0
    %s59 = sadd.s32 %s58, 1
    %s60 = scalar_select %p57, %s58, %s59
    %p63 = pneg %p57
    %p64 = scmp.eq.s32.totalorder %s22, 1
    %p65 = por %p63, %p64
    %p66 = scmp.ne.s32.totalorder %s58, %s61
    %p67 = scmp.eq.s32.totalorder %s22, 0
    %p68 = por %p66, %p67
    %p69 = scmp.ne.s32.totalorder %s58, %s61
    %p70 = scmp.eq.s32.totalorder %s27, 1
    %p71 = por %p69, %p70
    %p72 = scmp.ne.s32.totalorder %s61, %s62
    %p73 = scmp.eq.s32.totalorder %s27, 0
    %p74 = por %p72, %p73
    %p75 = scmp.ne.s32.totalorder %s61, %s62
    %p76 = scmp.eq.s32.totalorder %s28, 1
    %p77 = por %p75, %p76
    %p79 = scmp.ne.s32.totalorder %s62, %s78
    %p80 = scmp.eq.s32.totalorder %s28, 0
    %p81 = por %p79, %p80
    %s83 = sadd.s32 %s82, 1
    %p86 = scmp.eq.s32.totalorder %s22, 1
    %p87 = scmp.ne.s32.totalorder %s82, %s84
    %p88 = scmp.eq.s32.totalorder %s22, 0
    %p89 = por %p87, %p88
    %p90 = scmp.ne.s32.totalorder %s82, %s84
    %p91 = scmp.eq.s32.totalorder %s27, 1
    %p92 = por %p90, %p91
    %p93 = scmp.ne.s32.totalorder %s84, %s85
    %p94 = scmp.eq.s32.totalorder %s27, 0
    %p95 = por %p93, %p94
    %p96 = scmp.ne.s32.totalorder %s84, %s85
    %p97 = scmp.eq.s32.totalorder %s28, 1
    %p98 = por %p96, %p97
    %p100 = scmp.ne.s32.totalorder %s85, %s99
    %p101 = scmp.eq.s32.totalorder %s28, 0
    %p102 = por %p100, %p101
    %s104 = sadd.s32 %s103, 1
    %p107 = scmp.eq.s32.totalorder %s22, 1
    %p108 = scmp.ne.s32.totalorder %s103, %s105
    %p109 = scmp.eq.s32.totalorder %s22, 0
    %p110 = por %p108, %p109
    %p111 = scmp.ne.s32.totalorder %s103, %s105
    %p112 = scmp.eq.s32.totalorder %s27, 1
    %p113 = por %p111, %p112
    %p114 = scmp.ne.s32.totalorder %s105, %s106
    %p115 = scmp.eq.s32.totalorder %s27, 0
    %p116 = por %p114, %p115
    %p117 = scmp.ne.s32.totalorder %s105, %s106
    %p118 = scmp.eq.s32.totalorder %s28, 1
    %p119 = por %p117, %p118
    %p121 = scmp.ne.s32.totalorder %s106, %s120
    %p122 = scmp.eq.s32.totalorder %s28, 0
    %p123 = por %p121, %p122
    %s125 = sadd.s32 %s124, 1
    %p128 = scmp.eq.s32.totalorder %s22, 1
    %p129 = scmp.ne.s32.totalorder %s124, %s126
    %p130 = scmp.eq.s32.totalorder %s22, 0
    %p131 = por %p129, %p130
    %p132 = scmp.ne.s32.totalorder %s124, %s126
    %p133 = scmp.eq.s32.totalorder %s27, 1
    %p134 = por %p132, %p133
    %p135 = scmp.ne.s32.totalorder %s126, %s127
    %p136 = scmp.eq.s32.totalorder %s27, 0
    %p137 = por %p135, %p136
    %p138 = scmp.ne.s32.totalorder %s126, %s127
    %p139 = scmp.eq.s32.totalorder %s28, 1
    %p140 = por %p138, %p139
    %p142 = scmp.ne.s32.totalorder %s127, %s141
    %p143 = scmp.eq.s32.totalorder %s28, 0
    %p144 = por %p142, %p143
    %s146 = sadd.s32 %s145, 1
    %p149 = scmp.eq.s32.totalorder %s22, 1
    %p150 = scmp.ne.s32.totalorder %s145, %s147
    %p151 = scmp.eq.s32.totalorder %s22, 0
    %p152 = por %p150, %p151
    %p153 = scmp.ne.s32.totalorder %s145, %s147
    %p154 = scmp.eq.s32.totalorder %s27, 1
    %p155 = por %p153, %p154
    %p156 = scmp.ne.s32.totalorder %s147, %s148
    %p157 = scmp.eq.s32.totalorder %s27, 0
    %p158 = por %p156, %p157
    %p159 = scmp.ne.s32.totalorder %s147, %s148
    %p160 = scmp.eq.s32.totalorder %s28, 1
    %p161 = por %p159, %p160
    %p163 = scmp.ne.s32.totalorder %s148, %s162
    %p164 = scmp.eq.s32.totalorder %s28, 0
    %p165 = por %p163, %p164
    %s167 = sadd.s32 %s166, 1
    %p170 = scmp.eq.s32.totalorder %s22, 1
    %p171 = scmp.ne.s32.totalorder %s166, %s168
    %p172 = scmp.eq.s32.totalorder %s22, 0
    %p173 = por %p171, %p172
    %p174 = scmp.ne.s32.totalorder %s166, %s168
    %p175 = scmp.eq.s32.totalorder %s27, 1
    %p176 = por %p174, %p175
    %p177 = scmp.ne.s32.totalorder %s168, %s169
    %p178 = scmp.eq.s32.totalorder %s27, 0
    %p179 = por %p177, %p178
    %p180 = scmp.ne.s32.totalorder %s168, %s169
    %p181 = scmp.eq.s32.totalorder %s28, 1
    %p182 = por %p180, %p181
    %p184 = scmp.ne.s32.totalorder %s169, %s183
    %p185 = scmp.eq.s32.totalorder %s28, 0
    %p186 = por %p184, %p185
    %s188 = sadd.s32 %s187, 1
    %p191 = scmp.eq.s32.totalorder %s22, 1
    %p192 = scmp.ne.s32.totalorder %s187, %s189
    %p193 = scmp.eq.s32.totalorder %s22, 0
    %p194 = por %p192, %p193
    %p195 = scmp.ne.s32.totalorder %s187, %s189
    %p196 = scmp.eq.s32.totalorder %s27, 1
    %p197 = por %p195, %p196
    %p198 = scmp.ne.s32.totalorder %s189, %s190
    %p199 = scmp.eq.s32.totalorder %s27, 0
    %p200 = por %p198, %p199
    %p201 = scmp.ne.s32.totalorder %s189, %s190
    %p202 = scmp.eq.s32.totalorder %s28, 1
    %p203 = por %p201, %p202
    %p205 = scmp.ne.s32.totalorder %s190, %s204
    %p206 = scmp.eq.s32.totalorder %s28, 0
    %p207 = por %p205, %p206
    %s209 = sadd.s32 %s208, 1
    %p212 = scmp.eq.s32.totalorder %s22, 1
    %p213 = scmp.ne.s32.totalorder %s208, %s210
    %p214 = scmp.eq.s32.totalorder %s22, 0
    %p215 = por %p213, %p214
    %p216 = scmp.ne.s32.totalorder %s208, %s210
    %p217 = scmp.eq.s32.totalorder %s27, 1
    %p218 = por %p216, %p217
    %p219 = scmp.ne.s32.totalorder %s210, %s211
    %p220 = scmp.eq.s32.totalorder %s27, 0
    %p221 = por %p219, %p220
    %p222 = scmp.ne.s32.totalorder %s210, %s211
    %p223 = scmp.eq.s32.totalorder %s28, 1
    %p224 = por %p222, %p223
    %p226 = scmp.ne.s32.totalorder %s211, %s225
    %p227 = scmp.eq.s32.totalorder %s28, 0
    %p228 = por %p226, %p227
    %s230 = sadd.s32 %s229, 1
    %p233 = scmp.eq.s32.totalorder %s22, 1
    %p234 = scmp.ne.s32.totalorder %s229, %s231
    %p235 = scmp.eq.s32.totalorder %s22, 0
    %p236 = por %p234, %p235
    %p237 = scmp.ne.s32.totalorder %s229, %s231
    %p238 = scmp.eq.s32.totalorder %s27, 1
    %p239 = por %p237, %p238
    %p240 = scmp.ne.s32.totalorder %s231, %s232
    %p241 = scmp.eq.s32.totalorder %s27, 0
    %p242 = por %p240, %p241
    %p243 = scmp.ne.s32.totalorder %s231, %s232
    %p244 = scmp.eq.s32.totalorder %s28, 1
    %p245 = por %p243, %p244
    %p247 = scmp.ne.s32.totalorder %s232, %s246
    %p248 = scmp.eq.s32.totalorder %s28, 0
    %p249 = por %p247, %p248
    %s251 = sadd.s32 %s250, 1
    %p254 = scmp.eq.s32.totalorder %s22, 1
    %p255 = scmp.ne.s32.totalorder %s250, %s252
    %p256 = scmp.eq.s32.totalorder %s22, 0
    %p257 = por %p255, %p256
    %p258 = scmp.ne.s32.totalorder %s250, %s252
    %p259 = scmp.eq.s32.totalorder %s27, 1
    %p260 = por %p258, %p259
    %p261 = scmp.ne.s32.totalorder %s252, %s253
    %p262 = scmp.eq.s32.totalorder %s27, 0
    %p263 = por %p261, %p262
    %p264 = scmp.ne.s32.totalorder %s252, %s253
    %p265 = scmp.eq.s32.totalorder %s28, 1
    %p266 = por %p264, %p265
    %p268 = scmp.ne.s32.totalorder %s253, %s267
    %p269 = scmp.eq.s32.totalorder %s28, 0
    %p270 = por %p268, %p269
    %s272 = sadd.s32 %s271, 1
    %p275 = scmp.eq.s32.totalorder %s22, 1
    %p276 = scmp.ne.s32.totalorder %s271, %s273
    %p277 = scmp.eq.s32.totalorder %s22, 0
    %p278 = por %p276, %p277
    %p279 = scmp.ne.s32.totalorder %s271, %s273
    %p280 = scmp.eq.s32.totalorder %s27, 1
    %p281 = por %p279, %p280
    %p282 = scmp.ne.s32.totalorder %s273, %s274
    %p283 = scmp.eq.s32.totalorder %s27, 0
    %p284 = por %p282, %p283
    %p285 = scmp.ne.s32.totalorder %s273, %s274
    %p286 = scmp.eq.s32.totalorder %s28, 1
    %p287 = por %p285, %p286
    %p289 = scmp.ne.s32.totalorder %s274, %s288
    %p290 = scmp.eq.s32.totalorder %s28, 0
    %p291 = por %p289, %p290
    %s293 = sadd.s32 %s292, 1
    %p296 = scmp.eq.s32.totalorder %s22, 1
    %p297 = scmp.ne.s32.totalorder %s292, %s294
    %p298 = scmp.eq.s32.totalorder %s22, 0
    %p299 = por %p297, %p298
    %p300 = scmp.ne.s32.totalorder %s292, %s294
    %p301 = scmp.eq.s32.totalorder %s27, 1
    %p302 = por %p300, %p301
    %p303 = scmp.ne.s32.totalorder %s294, %s295
    %p304 = scmp.eq.s32.totalorder %s27, 0
    %p305 = por %p303, %p304
    %p306 = scmp.ne.s32.totalorder %s294, %s295
    %p307 = scmp.eq.s32.totalorder %s28, 1
    %p308 = por %p306, %p307
    %p310 = scmp.ne.s32.totalorder %s295, %s309
    %p311 = scmp.eq.s32.totalorder %s28, 0
    %p312 = por %p310, %p311
    %s314 = sadd.s32 %s313, 1
    %p317 = scmp.eq.s32.totalorder %s22, 1
    %p318 = scmp.ne.s32.totalorder %s313, %s315
    %p319 = scmp.eq.s32.totalorder %s22, 0
    %p320 = por %p318, %p319
    %p321 = scmp.ne.s32.totalorder %s313, %s315
    %p322 = scmp.eq.s32.totalorder %s27, 1
    %p323 = por %p321, %p322
    %p324 = scmp.ne.s32.totalorder %s315, %s316
    %p325 = scmp.eq.s32.totalorder %s27, 0
    %p326 = por %p324, %p325
    %p327 = scmp.ne.s32.totalorder %s315, %s316
    %p328 = scmp.eq.s32.totalorder %s28, 1
    %p329 = por %p327, %p328
    %p331 = scmp.ne.s32.totalorder %s316, %s330
    %p332 = scmp.eq.s32.totalorder %s28, 0
    %p333 = por %p331, %p332
    %s335 = sadd.s32 %s334, 1
    %p338 = scmp.eq.s32.totalorder %s22, 1
    %p339 = scmp.ne.s32.totalorder %s334, %s336
    %p340 = scmp.eq.s32.totalorder %s22, 0
    %p341 = por %p339, %p340
    %p342 = scmp.ne.s32.totalorder %s334, %s336
    %p343 = scmp.eq.s32.totalorder %s27, 1
    %p344 = por %p342, %p343
    %p345 = scmp.ne.s32.totalorder %s336, %s337
    %p346 = scmp.eq.s32.totalorder %s27, 0
    %p347 = por %p345, %p346
    %p348 = scmp.ne.s32.totalorder %s336, %s337
    %p349 = scmp.eq.s32.totalorder %s28, 1
    %p350 = por %p348, %p349
    %p352 = scmp.ne.s32.totalorder %s337, %s351
    %p353 = scmp.eq.s32.totalorder %s28, 0
    %p354 = por %p352, %p353
    %s356 = sadd.s32 %s355, 1
    %p359 = scmp.eq.s32.totalorder %s22, 1
    %p360 = scmp.ne.s32.totalorder %s355, %s357
    %p361 = scmp.eq.s32.totalorder %s22, 0
    %p362 = por %p360, %p361
    %p363 = scmp.ne.s32.totalorder %s355, %s357
    %p364 = scmp.eq.s32.totalorder %s27, 1
    %p365 = por %p363, %p364
    %p366 = scmp.ne.s32.totalorder %s357, %s358
    %p367 = scmp.eq.s32.totalorder %s27, 0
    %p368 = por %p366, %p367
    %p369 = scmp.ne.s32.totalorder %s357, %s358
    %p370 = scmp.eq.s32.totalorder %s28, 1
    %p371 = por %p369, %p370
    %p373 = scmp.ne.s32.totalorder %s358, %s372
    %p374 = scmp.eq.s32.totalorder %s28, 0
    %p375 = por %p373, %p374
    %s376 = ssub.s32 %s22, %s29
    %p377 = scmp.eq.s32.totalorder %s376, 0
    %s379 = sadd.s32 %s378, 1
    %s380 = scalar_select %p377, %s378, %s379
    %p383 = pneg %p377
    %p384 = scmp.eq.s32.totalorder %s22, 1
    %p385 = por %p383, %p384
    %p386 = scmp.ne.s32.totalorder %s378, %s381
    %p387 = scmp.eq.s32.totalorder %s22, 0
    %p388 = por %p386, %p387
    %p389 = scmp.ne.s32.totalorder %s378, %s381
    %p390 = scmp.eq.s32.totalorder %s27, 1
    %p391 = por %p389, %p390
    %p392 = scmp.ne.s32.totalorder %s381, %s382
    %p393 = scmp.eq.s32.totalorder %s27, 0
    %p394 = por %p392, %p393
    %p395 = scmp.ne.s32.totalorder %s381, %s382
    %p396 = scmp.eq.s32.totalorder %s28, 1
    %p397 = por %p395, %p396
    %p399 = scmp.ne.s32.totalorder %s382, %s398
    %p400 = scmp.eq.s32.totalorder %s28, 0
    %p401 = por %p399, %p400
    %p402 = scmp.le.s32.totalorder 1, %s22
    %p403 = scmp.lt.s32.totalorder %s22, 3
    %p404 = pnand %p402, %p403
    %p405 = pneg %p404
    // Predicated region
    $region9: #{unet_wrapper_forward.1} parent=5 // pred_check
      _
    $region10: #{unet_wrapper_forward.1} parent=5 // pred_check_branch
      %407 = sbr.rel (%p404) target = $region12
    $region11: #{unet_wrapper_forward.1} parent=5 // pred_region
      %s408 = ssub.s32 %s22, 1
      // Predicated region
      $region13: #{unet_wrapper_forward.1} parent=11 // pred_check
        %p409 = pneg %p95
      $region14: #{unet_wrapper_forward.1} parent=11 // pred_check_branch
        %411 = sbr.rel (%p409) target = $region16
      $region15: #{unet_wrapper_forward.1} parent=11 // pred_region
        _
      $region16: #{unet_wrapper_forward.1} parent=11 // pred_fallthru
        _
      // Predicated region
      $region17: #{unet_wrapper_forward.1} parent=11 // pred_check
        %p412 = pneg %p116
      $region18: #{unet_wrapper_forward.1} parent=11 // pred_check_branch
        %414 = sbr.rel (%p412) target = $region20
      $region19: #{unet_wrapper_forward.1} parent=11 // pred_region
        _
      $region20: #{unet_wrapper_forward.1} parent=11 // pred_fallthru
        _
      // Predicated region
      $region21: #{unet_wrapper_forward.1} parent=11 // pred_check
        %p415 = pneg %p137
      $region22: #{unet_wrapper_forward.1} parent=11 // pred_check_branch
        %417 = sbr.rel (%p415) target = $region24
      $region23: #{unet_wrapper_forward.1} parent=11 // pred_region
        _
      $region24: #{unet_wrapper_forward.1} parent=11 // pred_fallthru
        _
      // Predicated region
      $region25: #{unet_wrapper_forward.1} parent=11 // pred_check
        %p418 = pneg %p158
      $region26: #{unet_wrapper_forward.1} parent=11 // pred_check_branch
        %420 = sbr.rel (%p418) target = $region28
      $region27: #{unet_wrapper_forward.1} parent=11 // pred_region
        _
      $region28: #{unet_wrapper_forward.1} parent=11 // pred_fallthru
        _
      // Predicated region
      $region29: #{unet_wrapper_forward.1} parent=11 // pred_check
        %p421 = pneg %p179
      $region30: #{unet_wrapper_forward.1} parent=11 // pred_check_branch
        %423 = sbr.rel (%p421) target = $region32
      $region31: #{unet_wrapper_forward.1} parent=11 // pred_region
        _
      $region32: #{unet_wrapper_forward.1} parent=11 // pred_fallthru
        _
      // Predicated region
      $region33: #{unet_wrapper_forward.1} parent=11 // pred_check
        %p424 = pneg %p200
      $region34: #{unet_wrapper_forward.1} parent=11 // pred_check_branch
        %426 = sbr.rel (%p424) target = $region36
      $region35: #{unet_wrapper_forward.1} parent=11 // pred_region
        _
      $region36: #{unet_wrapper_forward.1} parent=11 // pred_fallthru
        _
      // Predicated region
      $region37: #{unet_wrapper_forward.1} parent=11 // pred_check
        %p427 = pneg %p221
      $region38: #{unet_wrapper_forward.1} parent=11 // pred_check_branch
        %429 = sbr.rel (%p427) target = $region40
      $region39: #{unet_wrapper_forward.1} parent=11 // pred_region
        _
      $region40: #{unet_wrapper_forward.1} parent=11 // pred_fallthru
        _
      // Predicated region
      $region41: #{unet_wrapper_forward.1} parent=11 // pred_check
        %p430 = pneg %p242
      $region42: #{unet_wrapper_forward.1} parent=11 // pred_check_branch
        %432 = sbr.rel (%p430) target = $region44
      $region43: #{unet_wrapper_forward.1} parent=11 // pred_region
        _
      $region44: #{unet_wrapper_forward.1} parent=11 // pred_fallthru
        _
      // Predicated region
      $region45: #{unet_wrapper_forward.1} parent=11 // pred_check
        %p433 = pneg %p263
      $region46: #{unet_wrapper_forward.1} parent=11 // pred_check_branch
        %435 = sbr.rel (%p433) target = $region48
      $region47: #{unet_wrapper_forward.1} parent=11 // pred_region
        _
      $region48: #{unet_wrapper_forward.1} parent=11 // pred_fallthru
        _
      // Predicated region
      $region49: #{unet_wrapper_forward.1} parent=11 // pred_check
        %p436 = pneg %p284
      $region50: #{unet_wrapper_forward.1} parent=11 // pred_check_branch
        %438 = sbr.rel (%p436) target = $region52
      $region51: #{unet_wrapper_forward.1} parent=11 // pred_region
        _
      $region52: #{unet_wrapper_forward.1} parent=11 // pred_fallthru
        _
      // Predicated region
      $region53: #{unet_wrapper_forward.1} parent=11 // pred_check
        %p439 = pneg %p305
      $region54: #{unet_wrapper_forward.1} parent=11 // pred_check_branch
        %441 = sbr.rel (%p439) target = $region56
      $region55: #{unet_wrapper_forward.1} parent=11 // pred_region
        _
      $region56: #{unet_wrapper_forward.1} parent=11 // pred_fallthru
        _
      // Predicated region
      $region57: #{unet_wrapper_forward.1} parent=11 // pred_check
        %p442 = pneg %p326
      $region58: #{unet_wrapper_forward.1} parent=11 // pred_check_branch
        %444 = sbr.rel (%p442) target = $region60
      $region59: #{unet_wrapper_forward.1} parent=11 // pred_region
        _
      $region60: #{unet_wrapper_forward.1} parent=11 // pred_fallthru
        _
      // Predicated region
      $region61: #{unet_wrapper_forward.1} parent=11 // pred_check
        %p445 = pneg %p347
      $region62: #{unet_wrapper_forward.1} parent=11 // pred_check_branch
        %447 = sbr.rel (%p445) target = $region64
      $region63: #{unet_wrapper_forward.1} parent=11 // pred_region
        _
      $region64: #{unet_wrapper_forward.1} parent=11 // pred_fallthru
        _
      // Predicated region
      $region65: #{unet_wrapper_forward.1} parent=11 // pred_check
        %p448 = pneg %p368
      $region66: #{unet_wrapper_forward.1} parent=11 // pred_check_branch
        %450 = sbr.rel (%p448) target = $region68
      $region67: #{unet_wrapper_forward.1} parent=11 // pred_region
        _
      $region68: #{unet_wrapper_forward.1} parent=11 // pred_fallthru
        _
    $region12: #{unet_wrapper_forward.1} parent=5 // pred_fallthru
      _
    %p451 = scmp.lt.s32.totalorder %s22, 2
    // Predicated region
    $region69: #{unet_wrapper_forward.1} parent=5 // pred_check
      %p452 = pneg %p451
    $region70: #{unet_wrapper_forward.1} parent=5 // pred_check_branch
      %454 = sbr.rel (%p452) target = $region72
    $region71: #{unet_wrapper_forward.1} parent=5 // pred_region
      // Predicated region
      $region73: #{unet_wrapper_forward.1} parent=71 // pred_check
        %p455 = pneg %p42
      $region74: #{unet_wrapper_forward.1} parent=71 // pred_check_branch
        %457 = sbr.rel (%p455) target = $region76
      $region75: #{unet_wrapper_forward.1} parent=71 // pred_region
        %p458 = scmp.lt.s32.totalorder %s22, 1
        %s459 = scalar_select %p458, %s22, 1
        %s460 = smul.addr %s459, 54
        %s461 = smul.addr %s460, 8
        %s462 = scalar_lea.vmem %s0, %s461
      $region76: #{unet_wrapper_forward.1} parent=71 // pred_fallthru
        _
      // Predicated region
      $region77: #{unet_wrapper_forward.1} parent=71 // pred_check
        %p463 = pneg %p68
      $region78: #{unet_wrapper_forward.1} parent=71 // pred_check_branch
        %465 = sbr.rel (%p463) target = $region80
      $region79: #{unet_wrapper_forward.1} parent=71 // pred_region
        %p466 = scmp.lt.s32.totalorder %s22, 1
        %s467 = scalar_select %p466, %s22, 1
        %s468 = smul.addr %s467, 4
        %s469 = scalar_lea.vmem %s1, %s468
      $region80: #{unet_wrapper_forward.1} parent=71 // pred_fallthru
        _
    $region72: #{unet_wrapper_forward.1} parent=5 // pred_fallthru
      _
    %p470 = scmp.le.s32.totalorder 1, %s22
    %p471 = scmp.lt.s32.totalorder %s22, 3
    %p472 = pnand %p470, %p471
    %p473 = pneg %p472
    // Predicated region
    $region81: #{unet_wrapper_forward.1} parent=5 // pred_check
      _
    $region82: #{unet_wrapper_forward.1} parent=5 // pred_check_branch
      %475 = sbr.rel (%p472) target = $region84
    $region83: #{unet_wrapper_forward.1} parent=5 // pred_region
      %s476 = ssub.s32 %s22, 1
      %p477 = scmp.lt.s32.totalorder %s27, 1
      %s478 = scalar_select %p477, %s27, 1
      %s479 = smul.addr %s478, 54
      %s480 = smul.addr %s479, 8
      %s481 = scalar_lea.vmem %s0, %s480
      %p482 = pneg %p48
      %p483 = pneg %p45
      %p484 = scmp.lt.s32.totalorder %s27, 1
      %s485 = scalar_select %p484, %s27, 1
      %s486 = smul.addr %s485, 4
      %s487 = scalar_lea.vmem %s1, %s486
      %p488 = pneg %p74
      %p489 = pneg %p71
      %p490 = pneg %p95
      %p491 = pneg %p92
      %p492 = pneg %p116
      %p493 = pneg %p113
      %p494 = pneg %p137
      %p495 = pneg %p134
      %p496 = pneg %p158
      %p497 = pneg %p155
      %p498 = pneg %p179
      %p499 = pneg %p176
      %p500 = pneg %p200
      %p501 = pneg %p197
      %p502 = pneg %p221
      %p503 = pneg %p218
      %p504 = pneg %p242
      %p505 = pneg %p239
      %p506 = pneg %p263
      %p507 = pneg %p260
      %p508 = pneg %p284
      %p509 = pneg %p281
      %p510 = pneg %p305
      %p511 = pneg %p302
      %p512 = pneg %p326
      %p513 = pneg %p323
      %p514 = pneg %p347
      %p515 = pneg %p344
      %p516 = pneg %p368
      %p517 = pneg %p365
      %p518 = pneg %p394
      %p519 = pneg %p391
      %p520 = scmp.lt.s32.totalorder %s27, 1
      %s521 = scalar_select %p520, %s27, 1
      %s522 = smul.addr %s521, 2
      %s523 = smul.addr %s522, 4
      %s524 = scalar_lea.vmem %s16, %s523
      %p525 = scmp.lt.s32.totalorder %s27, 1
      %s526 = scalar_select %p525, %s27, 1
      %s527 = smul.addr %s526, 54
      %s528 = smul.addr %s527, 8
      %s529 = scalar_lea.vmem %s0, %s528
      %p530 = scmp.lt.s32.totalorder %s27, 1
      %s531 = scalar_select %p530, %s27, 1
      %s532 = smul.addr %s531, 4
      %s533 = scalar_lea.vmem %s1, %s532
      %p534 = scmp.lt.s32.totalorder %s27, 1
      %s535 = scalar_select %p534, %s27, 1
      %s536 = smul.addr %s535, 2
      %s537 = smul.addr %s536, 4
      %s538 = scalar_lea.vmem %s16, %s537
      %v540 = vld [vmem:[%s2] sm:$0x1]
      %v541 = vld [vmem:[%s3] sm:$0xff]
      %v542 = vld [vmem:[%s3 + $0x8] sm:$0xff]
      %v543 = vld [vmem:[%s3 + $0x10] sm:$0xff]
      %v544 = vld [vmem:[%s3 + $0x18] sm:$0xff]
      %v545 = vld [vmem:[%s4] sm:$0x1]
      %vm546 = vcmask 261120
      %v548 = vsel %vm546, %v540, 0
      %550 = vmatpush.msra.mxu0 0.0
      %551 = vmatpush.msra.mxu0 0.0
      %552 = vmatpush.msra.mxu0 0.0
      %553 = vmatpush.msra.mxu0 0.0
      %554 = vmatpush.msra.mxu0 0.0
      %555 = vmatpush.msra.mxu0 0.0
      %556 = vmatpush.msra.mxu0 0.0
      %557 = vmatpush.msra.mxu0 0.0
      %558 = vmatpush.msra.mxu0 0.0
      %559 = vmatpush.msra.mxu0 0.0
      %560 = vmatpush.msra.mxu0 0.0
      %561 = vmatpush.msra.mxu0 0.0
      %562 = vmatpush.msra.mxu0 %v544
      %563 = vmatpush.msra.mxu0 %v543
      %564 = vmatpush.msra.mxu0 %v542
      %565 = vmatpush.msra.mxu0 %v541
      %566 = vmatmul.f32.gmra.mxu0 %v548
      %v567 = vpop.f32.mrf.mxu0
      %v568 = vadd.f32 %v545, %v567
      %569 = vdwg.mxu0
      %v570 = vxor.u32 %v568, 2147483648
      %v571 = vmul.f32 %v570, 1.442695
      %v572 = vpow.pop %v571
      %v573 = vadd.f32 %v572, 1.0
      %v574 = vrcp.pop %v573
      %v575 = vmul.f32 %v573, %v574
      %v576 = vsub.f32 1.0, %v575
      %v577 = vmul.f32 %v574, %v576
      %v578 = vadd.f32 %v574, %v577
      %vm579 = vweird.f32 %v573
      %vm580 = vweird.f32 %v574
      %vm581 = vmor %vm579, %vm580
      %v582 = vsel %vm581, %v574, %v578
      %v583 = vand.u32 2147483647, %v573
      %vm584 = vcmp.eq.f32.partialorder %v583, 8.507059e+37
      %v585 = vand.u32 %v573, 2147483648
      %v586 = vor.u32 1.1754944e-38, %v585
      %v587 = vsel %vm584, %v586, %v582
      %v588 = vmul.f32 1.0, %v587
      %v589 = vmul.f32 %v568, %v588
      %v590 = vld [vmem:[%s5] sm:$0xff]
      %v591 = vld [vmem:[%s5 + $0x8] sm:$0xff]
      %v592 = vld [vmem:[%s5 + $0x10] sm:$0xff]
      %v593 = vld [vmem:[%s5 + $0x18] sm:$0xff]
      %v594 = vld [vmem:[%s6] sm:$0x1]
      %v596 = vsel %vm546, %v589, 0
      %598 = vmatpush.msra.mxu0 0.0
      %599 = vmatpush.msra.mxu0 0.0
      %600 = vmatpush.msra.mxu0 0.0
      %601 = vmatpush.msra.mxu0 0.0
      %602 = vmatpush.msra.mxu0 0.0
      %603 = vmatpush.msra.mxu0 0.0
      %604 = vmatpush.msra.mxu0 0.0
      %605 = vmatpush.msra.mxu0 0.0
      %606 = vmatpush.msra.mxu0 0.0
      %607 = vmatpush.msra.mxu0 0.0
      %608 = vmatpush.msra.mxu0 0.0
      %609 = vmatpush.msra.mxu0 0.0
      %610 = vmatpush.msra.mxu0 %v593
      %611 = vmatpush.msra.mxu0 %v592
      %612 = vmatpush.msra.mxu0 %v591
      %613 = vmatpush.msra.mxu0 %v590
      %614 = vmatmul.f32.gmra.mxu0 %v596
      %v615 = vpop.f32.mrf.mxu0
      %v616 = vadd.f32 %v594, %v615
      %617 = vdwg.mxu0
      %v618 = vld [vmem:[%s529] sm:$0xff]
      %v619 = vld [vmem:[%s529 + $0x8] sm:$0xff]
      %v620 = vld [vmem:[%s529 + $0x18] sm:$0xff]
      %v621 = vld [vmem:[%s529 + $0x20] sm:$0xff]
      %v622 = vld [vmem:[%s529 + $0x30] sm:$0xff]
      %v623 = vld [vmem:[%s529 + $0x38] sm:$0xff]
      %v624 = vld [vmem:[%s529 + $0x48] sm:$0xff]
      %v625 = vld [vmem:[%s529 + $0x50] sm:$0xff]
      %v626 = vld [vmem:[%s529 + $0x60] sm:$0xff]
      %v627 = vld [vmem:[%s529 + $0x68] sm:$0xff]
      %v628 = vld [vmem:[%s529 + $0x78] sm:$0xff]
      %v629 = vld [vmem:[%s529 + $0x80] sm:$0xff]
      %v630 = vld [vmem:[%s529 + $0x90] sm:$0xff]
      %v631 = vld [vmem:[%s529 + $0x98] sm:$0xff]
      %v632 = vld [vmem:[%s529 + $0xa8] sm:$0xff]
      %v633 = vld [vmem:[%s529 + $0xb0] sm:$0xff]
      %v634 = vld [vmem:[%s529 + $0xc0] sm:$0xff]
      %v635 = vld [vmem:[%s529 + $0xc8] sm:$0xff]
      %v636 = vld [vmem:[%s529 + $0xd8] sm:$0xff]
      %v637 = vld [vmem:[%s529 + $0xe0] sm:$0xff]
      %v638 = vld [vmem:[%s529 + $0xf0] sm:$0xff]
      %v639 = vld [vmem:[%s529 + $0xf8] sm:$0xff]
      %v640 = vld [vmem:[%s529 + $0x108] sm:$0xff]
      %v641 = vld [vmem:[%s529 + $0x110] sm:$0xff]
      %v642 = vld [vmem:[%s529 + $0x120] sm:$0xff]
      %v643 = vld [vmem:[%s529 + $0x128] sm:$0xff]
      %v644 = vld [vmem:[%s529 + $0x138] sm:$0xff]
      %v645 = vld [vmem:[%s529 + $0x140] sm:$0xff]
      %v646 = vld [vmem:[%s529 + $0x150] sm:$0xff]
      %v647 = vld [vmem:[%s529 + $0x158] sm:$0xff]
      %v648 = vld [vmem:[%s529 + $0x168] sm:$0xff]
      %v649 = vld [vmem:[%s529 + $0x170] sm:$0xff]
      %v650 = vpack.c.bf16 %v619, %v618
      %v651 = vpack.c.bf16 %v621, %v620
      %v652 = vpack.c.bf16 %v623, %v622
      %v653 = vpack.c.bf16 %v625, %v624
      %v654 = vpack.c.bf16 %v627, %v626
      %v655 = vpack.c.bf16 %v629, %v628
      %v656 = vpack.c.bf16 %v631, %v630
      %v657 = vpack.c.bf16 %v633, %v632
      %v658 = vpack.c.bf16 %v635, %v634
      %v659 = vpack.c.bf16 %v637, %v636
      %v660 = vpack.c.bf16 %v639, %v638
      %v661 = vpack.c.bf16 %v641, %v640
      %v662 = vpack.c.bf16 %v643, %v642
      %v663 = vpack.c.bf16 %v645, %v644
      %v664 = vpack.c.bf16 %v647, %v646
      %v665 = vpack.c.bf16 %v649, %v648
      %v666 = vld [vmem:[%s7] sm:$0x3]
      %v667 = vld [vmem:[%s529 + $0x1] sm:$0xff]
      %v668 = vld [vmem:[%s529 + $0x9] sm:$0xff]
      %v669 = vld [vmem:[%s529 + $0x19] sm:$0xff]
      %v670 = vld [vmem:[%s529 + $0x21] sm:$0xff]
      %v671 = vld [vmem:[%s529 + $0x31] sm:$0xff]
      %v672 = vld [vmem:[%s529 + $0x39] sm:$0xff]
      %v673 = vld [vmem:[%s529 + $0x49] sm:$0xff]
      %v674 = vld [vmem:[%s529 + $0x51] sm:$0xff]
      %v675 = vld [vmem:[%s529 + $0x61] sm:$0xff]
      %v676 = vld [vmem:[%s529 + $0x69] sm:$0xff]
      %v677 = vld [vmem:[%s529 + $0x79] sm:$0xff]
      %v678 = vld [vmem:[%s529 + $0x81] sm:$0xff]
      %v679 = vld [vmem:[%s529 + $0x91] sm:$0xff]
      %v680 = vld [vmem:[%s529 + $0x99] sm:$0xff]
      %v681 = vld [vmem:[%s529 + $0xa9] sm:$0xff]
      %v682 = vld [vmem:[%s529 + $0xb1] sm:$0xff]
      %v683 = vld [vmem:[%s529 + $0xc1] sm:$0xff]
      %v684 = vld [vmem:[%s529 + $0xc9] sm:$0xff]
      %v685 = vld [vmem:[%s529 + $0xd9] sm:$0xff]
      %v686 = vld [vmem:[%s529 + $0xe1] sm:$0xff]
      %v687 = vld [vmem:[%s529 + $0xf1] sm:$0xff]
      %v688 = vld [vmem:[%s529 + $0xf9] sm:$0xff]
      %v689 = vld [vmem:[%s529 + $0x109] sm:$0xff]
      %v690 = vld [vmem:[%s529 + $0x111] sm:$0xff]
      %v691 = vld [vmem:[%s529 + $0x121] sm:$0xff]
      %v692 = vld [vmem:[%s529 + $0x129] sm:$0xff]
      %v693 = vld [vmem:[%s529 + $0x139] sm:$0xff]
      %v694 = vld [vmem:[%s529 + $0x141] sm:$0xff]
      %v695 = vld [vmem:[%s529 + $0x151] sm:$0xff]
      %v696 = vld [vmem:[%s529 + $0x159] sm:$0xff]
      %v697 = vld [vmem:[%s529 + $0x169] sm:$0xff]
      %v698 = vld [vmem:[%s529 + $0x171] sm:$0xff]
      %v699 = vpack.c.bf16 %v668, %v667
      %v700 = vpack.c.bf16 %v670, %v669
      %v701 = vpack.c.bf16 %v672, %v671
      %v702 = vpack.c.bf16 %v674, %v673
      %v703 = vpack.c.bf16 %v676, %v675
      %v704 = vpack.c.bf16 %v678, %v677
      %v705 = vpack.c.bf16 %v680, %v679
      %v706 = vpack.c.bf16 %v682, %v681
      %v707 = vpack.c.bf16 %v684, %v683
      %v708 = vpack.c.bf16 %v686, %v685
      %v709 = vpack.c.bf16 %v688, %v687
      %v710 = vpack.c.bf16 %v690, %v689
      %v711 = vpack.c.bf16 %v692, %v691
      %v712 = vpack.c.bf16 %v694, %v693
      %v713 = vpack.c.bf16 %v696, %v695
      %v714 = vpack.c.bf16 %v698, %v697
      %s715 = scalar_lea.vmem %s7, 2
      %v716 = vld [vmem:[%s715] sm:$0x3]
      %vm717 = vcmask 31744
      %v719 = vsel %vm717, %v699, 0
      %v722 = vsel %vm717, %v700, 0
      %v725 = vsel %vm717, %v701, 0
      %v728 = vsel %vm717, %v702, 0
      %v731 = vsel %vm717, %v703, 0
      %v734 = vsel %vm717, %v704, 0
      %v737 = vsel %vm717, %v705, 0
      %v740 = vsel %vm717, %v706, 0
      %v743 = vsel %vm717, %v707, 0
      %v746 = vsel %vm717, %v708, 0
      %v749 = vsel %vm717, %v709, 0
      %v752 = vsel %vm717, %v710, 0
      %v755 = vsel %vm717, %v711, 0
      %v758 = vsel %vm717, %v712, 0
      %v761 = vsel %vm717, %v713, 0
      %v764 = vsel %vm717, %v714, 0
      %vm766 = vcmask 1041408
      %v768 = vsel %vm766, %v716, 0
      %770 = vmatpush.bf16.msra.mxu0 0
      %771 = vmatpush.bf16.msra.mxu0 0
      %772 = vmatpush.bf16.msra.mxu0 0
      %773 = vmatpush.bf16.msra.mxu0 0
      %774 = vmatpush.bf16.msra.mxu0 0
      %775 = vmatpush.bf16.msra.mxu0 0
      %776 = vmatpush.bf16.msra.mxu0 0
      %777 = vmatpush.bf16.msra.mxu0 %v768
      %778 = vmatmul.bf16.gmra.mxu0 %v719
      %v779 = vpop.f32.mrf.mxu0
      %v780 = vadd.f32 0.0, %v779
      %v781 = vpop.f32.mrf.mxu0
      %v782 = vadd.f32 0.0, %v781
      %783 = vmatmul.bf16.gmra.mxu0 %v722
      %v784 = vpop.f32.mrf.mxu0
      %v785 = vadd.f32 0.0, %v784
      %v786 = vpop.f32.mrf.mxu0
      %v787 = vadd.f32 0.0, %v786
      %788 = vmatmul.bf16.gmra.mxu0 %v725
      %v789 = vpop.f32.mrf.mxu0
      %v790 = vadd.f32 0.0, %v789
      %v791 = vpop.f32.mrf.mxu0
      %v792 = vadd.f32 0.0, %v791
      %793 = vmatmul.bf16.gmra.mxu0 %v728
      %v794 = vpop.f32.mrf.mxu0
      %v795 = vadd.f32 0.0, %v794
      %v796 = vpop.f32.mrf.mxu0
      %v797 = vadd.f32 0.0, %v796
      %798 = vmatmul.bf16.gmra.mxu0 %v731
      %v799 = vpop.f32.mrf.mxu0
      %v800 = vadd.f32 0.0, %v799
      %v801 = vpop.f32.mrf.mxu0
      %v802 = vadd.f32 0.0, %v801
      %803 = vmatmul.bf16.gmra.mxu0 %v734
      %v804 = vpop.f32.mrf.mxu0
      %v805 = vadd.f32 0.0, %v804
      %v806 = vpop.f32.mrf.mxu0
      %v807 = vadd.f32 0.0, %v806
      %808 = vmatmul.bf16.gmra.mxu0 %v737
      %v809 = vpop.f32.mrf.mxu0
      %v810 = vadd.f32 0.0, %v809
      %v811 = vpop.f32.mrf.mxu0
      %v812 = vadd.f32 0.0, %v811
      %813 = vmatmul.bf16.gmra.mxu0 %v740
      %v814 = vpop.f32.mrf.mxu0
      %v815 = vadd.f32 0.0, %v814
      %v816 = vpop.f32.mrf.mxu0
      %v817 = vadd.f32 0.0, %v816
      %818 = vmatmul.bf16.gmra.mxu0 %v743
      %v819 = vpop.f32.mrf.mxu0
      %v820 = vadd.f32 0.0, %v819
      %v821 = vpop.f32.mrf.mxu0
      %v822 = vadd.f32 0.0, %v821
      %823 = vmatmul.bf16.gmra.mxu0 %v746
      %v824 = vpop.f32.mrf.mxu0
      %v825 = vadd.f32 0.0, %v824
      %v826 = vpop.f32.mrf.mxu0
      %v827 = vadd.f32 0.0, %v826
      %828 = vmatmul.bf16.gmra.mxu0 %v749
      %v829 = vpop.f32.mrf.mxu0
      %v830 = vadd.f32 0.0, %v829
      %v831 = vpop.f32.mrf.mxu0
      %v832 = vadd.f32 0.0, %v831
      %833 = vmatmul.bf16.gmra.mxu0 %v752
      %v834 = vpop.f32.mrf.mxu0
      %v835 = vadd.f32 0.0, %v834
      %v836 = vpop.f32.mrf.mxu0
      %v837 = vadd.f32 0.0, %v836
      %838 = vmatmul.bf16.gmra.mxu0 %v755
      %v839 = vpop.f32.mrf.mxu0
      %v840 = vadd.f32 0.0, %v839
      %v841 = vpop.f32.mrf.mxu0
      %v842 = vadd.f32 0.0, %v841
      %843 = vmatmul.bf16.gmra.mxu0 %v758
      %v844 = vpop.f32.mrf.mxu0
      %v845 = vadd.f32 0.0, %v844
      %v846 = vpop.f32.mrf.mxu0
      %v847 = vadd.f32 0.0, %v846
      %848 = vmatmul.bf16.gmra.mxu0 %v761
      %v849 = vpop.f32.mrf.mxu0
      %v850 = vadd.f32 0.0, %v849
      %v851 = vpop.f32.mrf.mxu0
      %v852 = vadd.f32 0.0, %v851
      %853 = vmatmul.bf16.gmra.mxu0 %v764
      %v854 = vpop.f32.mrf.mxu0
      %v855 = vadd.f32 0.0, %v854
      %v856 = vpop.f32.mrf.mxu0
      %v857 = vadd.f32 0.0, %v856
      %858 = vdwg.mxu0
      %v860 = vsel %vm717, %v650, 0
      %v863 = vsel %vm717, %v651, 0
      %v866 = vsel %vm717, %v652, 0
      %v869 = vsel %vm717, %v653, 0
      %v872 = vsel %vm717, %v654, 0
      %v875 = vsel %vm717, %v655, 0
      %v878 = vsel %vm717, %v656, 0
      %v881 = vsel %vm717, %v657, 0
      %v884 = vsel %vm717, %v658, 0
      %v887 = vsel %vm717, %v659, 0
      %v890 = vsel %vm717, %v660, 0
      %v893 = vsel %vm717, %v661, 0
      %v896 = vsel %vm717, %v662, 0
      %v899 = vsel %vm717, %v663, 0
      %v902 = vsel %vm717, %v664, 0
      %v905 = vsel %vm717, %v665, 0
      %v908 = vsel %vm766, %v666, 0
      %910 = vmatpush.bf16.msra.mxu0 0
      %911 = vmatpush.bf16.msra.mxu0 0
      %912 = vmatpush.bf16.msra.mxu0 0
      %913 = vmatpush.bf16.msra.mxu0 0
      %914 = vmatpush.bf16.msra.mxu0 0
      %915 = vmatpush.bf16.msra.mxu0 0
      %916 = vmatpush.bf16.msra.mxu0 0
      %917 = vmatpush.bf16.msra.mxu0 %v908
      %918 = vmatmul.bf16.gmra.mxu0 %v860
      %v919 = vpop.f32.mrf.mxu0
      %v920 = vadd.f32 %v780, %v919
      %v921 = vpop.f32.mrf.mxu0
      %v922 = vadd.f32 %v782, %v921
      %923 = vmatmul.bf16.gmra.mxu0 %v863
      %v924 = vpop.f32.mrf.mxu0
      %v925 = vadd.f32 %v785, %v924
      %v926 = vpop.f32.mrf.mxu0
      %v927 = vadd.f32 %v787, %v926
      %928 = vmatmul.bf16.gmra.mxu0 %v866
      %v929 = vpop.f32.mrf.mxu0
      %v930 = vadd.f32 %v790, %v929
      %v931 = vpop.f32.mrf.mxu0
      %v932 = vadd.f32 %v792, %v931
      %933 = vmatmul.bf16.gmra.mxu0 %v869
      %v934 = vpop.f32.mrf.mxu0
      %v935 = vadd.f32 %v795, %v934
      %v936 = vpop.f32.mrf.mxu0
      %v937 = vadd.f32 %v797, %v936
      %938 = vmatmul.bf16.gmra.mxu0 %v872
      %v939 = vpop.f32.mrf.mxu0
      %v940 = vadd.f32 %v800, %v939
      %v941 = vpop.f32.mrf.mxu0
      %v942 = vadd.f32 %v802, %v941
      %943 = vmatmul.bf16.gmra.mxu0 %v875
      %v944 = vpop.f32.mrf.mxu0
      %v945 = vadd.f32 %v805, %v944
      %v946 = vpop.f32.mrf.mxu0
      %v947 = vadd.f32 %v807, %v946
      %948 = vmatmul.bf16.gmra.mxu0 %v878
      %v949 = vpop.f32.mrf.mxu0
      %v950 = vadd.f32 %v810, %v949
      %v951 = vpop.f32.mrf.mxu0
      %v952 = vadd.f32 %v812, %v951
      %953 = vmatmul.bf16.gmra.mxu0 %v881
      %v954 = vpop.f32.mrf.mxu0
      %v955 = vadd.f32 %v815, %v954
      %v956 = vpop.f32.mrf.mxu0
      %v957 = vadd.f32 %v817, %v956
      %958 = vmatmul.bf16.gmra.mxu0 %v884
      %v959 = vpop.f32.mrf.mxu0
      %v960 = vadd.f32 %v820, %v959
      %v961 = vpop.f32.mrf.mxu0
      %v962 = vadd.f32 %v822, %v961
      %963 = vmatmul.bf16.gmra.mxu0 %v887
      %v964 = vpop.f32.mrf.mxu0
      %v965 = vadd.f32 %v825, %v964
      %v966 = vpop.f32.mrf.mxu0
      %v967 = vadd.f32 %v827, %v966
      %968 = vmatmul.bf16.gmra.mxu0 %v890
      %v969 = vpop.f32.mrf.mxu0
      %v970 = vadd.f32 %v830, %v969
      %v971 = vpop.f32.mrf.mxu0
      %v972 = vadd.f32 %v832, %v971
      %973 = vmatmul.bf16.gmra.mxu0 %v893
      %v974 = vpop.f32.mrf.mxu0
      %v975 = vadd.f32 %v835, %v974
      %v976 = vpop.f32.mrf.mxu0
      %v977 = vadd.f32 %v837, %v976
      %978 = vmatmul.bf16.gmra.mxu0 %v896
      %v979 = vpop.f32.mrf.mxu0
      %v980 = vadd.f32 %v840, %v979
      %v981 = vpop.f32.mrf.mxu0
      %v982 = vadd.f32 %v842, %v981
      %983 = vmatmul.bf16.gmra.mxu0 %v899
      %v984 = vpop.f32.mrf.mxu0
      %v985 = vadd.f32 %v845, %v984
      %v986 = vpop.f32.mrf.mxu0
      %v987 = vadd.f32 %v847, %v986
      %988 = vmatmul.bf16.gmra.mxu0 %v902
      %v989 = vpop.f32.mrf.mxu0
      %v990 = vadd.f32 %v850, %v989
      %v991 = vpop.f32.mrf.mxu0
      %v992 = vadd.f32 %v852, %v991
      %993 = vmatmul.bf16.gmra.mxu0 %v905
      %v994 = vpop.f32.mrf.mxu0
      %v995 = vadd.f32 %v855, %v994
      %v996 = vpop.f32.mrf.mxu0
      %v997 = vadd.f32 %v857, %v996
      %998 = vdwg.mxu0
      %v999 = vld [vmem:[%s529 + $0x2] sm:$0xff]
      %v1000 = vld [vmem:[%s529 + $0xa] sm:$0xff]
      %v1001 = vld [vmem:[%s529 + $0x1a] sm:$0xff]
      %v1002 = vld [vmem:[%s529 + $0x22] sm:$0xff]
      %v1003 = vld [vmem:[%s529 + $0x32] sm:$0xff]
      %v1004 = vld [vmem:[%s529 + $0x3a] sm:$0xff]
      %v1005 = vld [vmem:[%s529 + $0x4a] sm:$0xff]
      %v1006 = vld [vmem:[%s529 + $0x52] sm:$0xff]
      %v1007 = vld [vmem:[%s529 + $0x62] sm:$0xff]
      %v1008 = vld [vmem:[%s529 + $0x6a] sm:$0xff]
      %v1009 = vld [vmem:[%s529 + $0x7a] sm:$0xff]
      %v1010 = vld [vmem:[%s529 + $0x82] sm:$0xff]
      %v1011 = vld [vmem:[%s529 + $0x92] sm:$0xff]
      %v1012 = vld [vmem:[%s529 + $0x9a] sm:$0xff]
      %v1013 = vld [vmem:[%s529 + $0xaa] sm:$0xff]
      %v1014 = vld [vmem:[%s529 + $0xb2] sm:$0xff]
      %v1015 = vld [vmem:[%s529 + $0xc2] sm:$0xff]
      %v1016 = vld [vmem:[%s529 + $0xca] sm:$0xff]
      %v1017 = vld [vmem:[%s529 + $0xda] sm:$0xff]
      %v1018 = vld [vmem:[%s529 + $0xe2] sm:$0xff]
      %v1019 = vld [vmem:[%s529 + $0xf2] sm:$0xff]
      %v1020 = vld [vmem:[%s529 + $0xfa] sm:$0xff]
      %v1021 = vld [vmem:[%s529 + $0x10a] sm:$0xff]
      %v1022 = vld [vmem:[%s529 + $0x112] sm:$0xff]
      %v1023 = vld [vmem:[%s529 + $0x122] sm:$0xff]
      %v1024 = vld [vmem:[%s529 + $0x12a] sm:$0xff]
      %v1025 = vld [vmem:[%s529 + $0x13a] sm:$0xff]
      %v1026 = vld [vmem:[%s529 + $0x142] sm:$0xff]
      %v1027 = vld [vmem:[%s529 + $0x152] sm:$0xff]
      %v1028 = vld [vmem:[%s529 + $0x15a] sm:$0xff]
      %v1029 = vld [vmem:[%s529 + $0x16a] sm:$0xff]
      %v1030 = vld [vmem:[%s529 + $0x172] sm:$0xff]
      %v1031 = vpack.c.bf16 %v1000, %v999
      %v1032 = vpack.c.bf16 %v1002, %v1001
      %v1033 = vpack.c.bf16 %v1004, %v1003
      %v1034 = vpack.c.bf16 %v1006, %v1005
      %v1035 = vpack.c.bf16 %v1008, %v1007
      %v1036 = vpack.c.bf16 %v1010, %v1009
      %v1037 = vpack.c.bf16 %v1012, %v1011
      %v1038 = vpack.c.bf16 %v1014, %v1013
      %v1039 = vpack.c.bf16 %v1016, %v1015
      %v1040 = vpack.c.bf16 %v1018, %v1017
      %v1041 = vpack.c.bf16 %v1020, %v1019
      %v1042 = vpack.c.bf16 %v1022, %v1021
      %v1043 = vpack.c.bf16 %v1024, %v1023
      %v1044 = vpack.c.bf16 %v1026, %v1025
      %v1045 = vpack.c.bf16 %v1028, %v1027
      %v1046 = vpack.c.bf16 %v1030, %v1029
      %s1047 = scalar_lea.vmem %s7, 4
      %v1048 = vld [vmem:[%s1047] sm:$0x3]
      %v1050 = vsel %vm717, %v1031, 0
      %v1053 = vsel %vm717, %v1032, 0
      %v1056 = vsel %vm717, %v1033, 0
      %v1059 = vsel %vm717, %v1034, 0
      %v1062 = vsel %vm717, %v1035, 0
      %v1065 = vsel %vm717, %v1036, 0
      %v1068 = vsel %vm717, %v1037, 0
      %v1071 = vsel %vm717, %v1038, 0
      %v1074 = vsel %vm717, %v1039, 0
      %v1077 = vsel %vm717, %v1040, 0
      %v1080 = vsel %vm717, %v1041, 0
      %v1083 = vsel %vm717, %v1042, 0
      %v1086 = vsel %vm717, %v1043, 0
      %v1089 = vsel %vm717, %v1044, 0
      %v1092 = vsel %vm717, %v1045, 0
      %v1095 = vsel %vm717, %v1046, 0
      %v1098 = vsel %vm766, %v1048, 0
      %1100 = vmatpush.bf16.msra.mxu0 0
      %1101 = vmatpush.bf16.msra.mxu0 0
      %1102 = vmatpush.bf16.msra.mxu0 0
      %1103 = vmatpush.bf16.msra.mxu0 0
      %1104 = vmatpush.bf16.msra.mxu0 0
      %1105 = vmatpush.bf16.msra.mxu0 0
      %1106 = vmatpush.bf16.msra.mxu0 0
      %1107 = vmatpush.bf16.msra.mxu0 %v1098
      %1108 = vmatmul.bf16.gmra.mxu0 %v1050
      %v1109 = vpop.f32.mrf.mxu0
      %v1110 = vadd.f32 0.0, %v1109
      %v1111 = vpop.f32.mrf.mxu0
      %v1112 = vadd.f32 0.0, %v1111
      %1113 = vmatmul.bf16.gmra.mxu0 %v1053
      %v1114 = vpop.f32.mrf.mxu0
      %v1115 = vadd.f32 0.0, %v1114
      %v1116 = vpop.f32.mrf.mxu0
      %v1117 = vadd.f32 0.0, %v1116
      %1118 = vmatmul.bf16.gmra.mxu0 %v1056
      %v1119 = vpop.f32.mrf.mxu0
      %v1120 = vadd.f32 0.0, %v1119
      %v1121 = vpop.f32.mrf.mxu0
      %v1122 = vadd.f32 0.0, %v1121
      %1123 = vmatmul.bf16.gmra.mxu0 %v1059
      %v1124 = vpop.f32.mrf.mxu0
      %v1125 = vadd.f32 0.0, %v1124
      %v1126 = vpop.f32.mrf.mxu0
      %v1127 = vadd.f32 0.0, %v1126
      %1128 = vmatmul.bf16.gmra.mxu0 %v1062
      %v1129 = vpop.f32.mrf.mxu0
      %v1130 = vadd.f32 0.0, %v1129
      %v1131 = vpop.f32.mrf.mxu0
      %v1132 = vadd.f32 0.0, %v1131
      %1133 = vmatmul.bf16.gmra.mxu0 %v1065
      %v1134 = vpop.f32.mrf.mxu0
      %v1135 = vadd.f32 0.0, %v1134
      %v1136 = vpop.f32.mrf.mxu0
      %v1137 = vadd.f32 0.0, %v1136
      %1138 = vmatmul.bf16.gmra.mxu0 %v1068
      %v1139 = vpop.f32.mrf.mxu0
      %v1140 = vadd.f32 0.0, %v1139
      %v1141 = vpop.f32.mrf.mxu0
      %v1142 = vadd.f32 0.0, %v1141
      %1143 = vmatmul.bf16.gmra.mxu0 %v1071
      %v1144 = vpop.f32.mrf.mxu0
      %v1145 = vadd.f32 0.0, %v1144
      %v1146 = vpop.f32.mrf.mxu0
      %v1147 = vadd.f32 0.0, %v1146
      %1148 = vmatmul.bf16.gmra.mxu0 %v1074
      %v1149 = vpop.f32.mrf.mxu0
      %v1150 = vadd.f32 0.0, %v1149
      %v1151 = vpop.f32.mrf.mxu0
      %v1152 = vadd.f32 0.0, %v1151
      %1153 = vmatmul.bf16.gmra.mxu0 %v1077
      %v1154 = vpop.f32.mrf.mxu0
      %v1155 = vadd.f32 0.0, %v1154
      %v1156 = vpop.f32.mrf.mxu0
      %v1157 = vadd.f32 0.0, %v1156
      %1158 = vmatmul.bf16.gmra.mxu0 %v1080
      %v1159 = vpop.f32.mrf.mxu0
      %v1160 = vadd.f32 0.0, %v1159
      %v1161 = vpop.f32.mrf.mxu0
      %v1162 = vadd.f32 0.0, %v1161
      %1163 = vmatmul.bf16.gmra.mxu0 %v1083
      %v1164 = vpop.f32.mrf.mxu0
      %v1165 = vadd.f32 0.0, %v1164
      %v1166 = vpop.f32.mrf.mxu0
      %v1167 = vadd.f32 0.0, %v1166
      %1168 = vmatmul.bf16.gmra.mxu0 %v1086
      %v1169 = vpop.f32.mrf.mxu0
      %v1170 = vadd.f32 0.0, %v1169
      %v1171 = vpop.f32.mrf.mxu0
      %v1172 = vadd.f32 0.0, %v1171
      %1173 = vmatmul.bf16.gmra.mxu0 %v1089
      %v1174 = vpop.f32.mrf.mxu0
      %v1175 = vadd.f32 0.0, %v1174
      %v1176 = vpop.f32.mrf.mxu0
      %v1177 = vadd.f32 0.0, %v1176
      %1178 = vmatmul.bf16.gmra.mxu0 %v1092
      %v1179 = vpop.f32.mrf.mxu0
      %v1180 = vadd.f32 0.0, %v1179
      %v1181 = vpop.f32.mrf.mxu0
      %v1182 = vadd.f32 0.0, %v1181
      %1183 = vmatmul.bf16.gmra.mxu0 %v1095
      %v1184 = vpop.f32.mrf.mxu0
      %v1185 = vadd.f32 0.0, %v1184
      %v1186 = vpop.f32.mrf.mxu0
      %v1187 = vadd.f32 0.0, %v1186
      %1188 = vdwg.mxu0
      %v1189 = vadd.f32 %v920, %v1110
      %v1190 = vadd.f32 %v922, %v1112
      %v1191 = vadd.f32 %v925, %v1115
      %v1192 = vadd.f32 %v927, %v1117
      %v1193 = vadd.f32 %v930, %v1120
      %v1194 = vadd.f32 %v932, %v1122
      %v1195 = vadd.f32 %v935, %v1125
      %v1196 = vadd.f32 %v937, %v1127
      %v1197 = vadd.f32 %v940, %v1130
      %v1198 = vadd.f32 %v942, %v1132
      %v1199 = vadd.f32 %v945, %v1135
      %v1200 = vadd.f32 %v947, %v1137
      %v1201 = vadd.f32 %v950, %v1140
      %v1202 = vadd.f32 %v952, %v1142
      %v1203 = vadd.f32 %v955, %v1145
      %v1204 = vadd.f32 %v957, %v1147
      %v1205 = vadd.f32 %v960, %v1150
      %v1206 = vadd.f32 %v962, %v1152
      %v1207 = vadd.f32 %v965, %v1155
      %v1208 = vadd.f32 %v967, %v1157
      %v1209 = vadd.f32 %v970, %v1160
      %v1210 = vadd.f32 %v972, %v1162
      %v1211 = vadd.f32 %v975, %v1165
      %v1212 = vadd.f32 %v977, %v1167
      %v1213 = vadd.f32 %v980, %v1170
      %v1214 = vadd.f32 %v982, %v1172
      %v1215 = vadd.f32 %v985, %v1175
      %v1216 = vadd.f32 %v987, %v1177
      %v1217 = vadd.f32 %v990, %v1180
      %v1218 = vadd.f32 %v992, %v1182
      %v1219 = vadd.f32 %v995, %v1185
      %v1220 = vadd.f32 %v997, %v1187
      %s1221 = scalar_lea.vmem %s529, 24
      %v1222 = vld [vmem:[%s1221] sm:$0xff]
      %v1223 = vld [vmem:[%s1221 + $0x8] sm:$0xff]
      %v1224 = vld [vmem:[%s1221 + $0x18] sm:$0xff]
      %v1225 = vld [vmem:[%s1221 + $0x20] sm:$0xff]
      %v1226 = vld [vmem:[%s1221 + $0x30] sm:$0xff]
      %v1227 = vld [vmem:[%s1221 + $0x38] sm:$0xff]
      %v1228 = vld [vmem:[%s1221 + $0x48] sm:$0xff]
      %v1229 = vld [vmem:[%s1221 + $0x50] sm:$0xff]
      %v1230 = vld [vmem:[%s1221 + $0x60] sm:$0xff]
      %v1231 = vld [vmem:[%s1221 + $0x68] sm:$0xff]
      %v1232 = vld [vmem:[%s1221 + $0x78] sm:$0xff]
      %v1233 = vld [vmem:[%s1221 + $0x80] sm:$0xff]
      %v1234 = vld [vmem:[%s1221 + $0x90] sm:$0xff]
      %v1235 = vld [vmem:[%s1221 + $0x98] sm:$0xff]
      %v1236 = vld [vmem:[%s1221 + $0xa8] sm:$0xff]
      %v1237 = vld [vmem:[%s1221 + $0xb0] sm:$0xff]
      %v1238 = vld [vmem:[%s1221 + $0xc0] sm:$0xff]
      %v1239 = vld [vmem:[%s1221 + $0xc8] sm:$0xff]
      %v1240 = vld [vmem:[%s1221 + $0xd8] sm:$0xff]
      %v1241 = vld [vmem:[%s1221 + $0xe0] sm:$0xff]
      %v1242 = vld [vmem:[%s1221 + $0xf0] sm:$0xff]
      %v1243 = vld [vmem:[%s1221 + $0xf8] sm:$0xff]
      %v1244 = vld [vmem:[%s1221 + $0x108] sm:$0xff]
      %v1245 = vld [vmem:[%s1221 + $0x110] sm:$0xff]
      %v1246 = vld [vmem:[%s1221 + $0x120] sm:$0xff]
      %v1247 = vld [vmem:[%s1221 + $0x128] sm:$0xff]
      %v1248 = vld [vmem:[%s1221 + $0x138] sm:$0xff]
      %v1249 = vld [vmem:[%s1221 + $0x140] sm:$0xff]
      %v1250 = vld [vmem:[%s1221 + $0x150] sm:$0xff]
      %v1251 = vld [vmem:[%s1221 + $0x158] sm:$0xff]
      %v1252 = vld [vmem:[%s1221 + $0x168] sm:$0xff]
      %v1253 = vld [vmem:[%s1221 + $0x170] sm:$0xff]
      %v1254 = vpack.c.bf16 %v1223, %v1222
      %v1255 = vpack.c.bf16 %v1225, %v1224
      %v1256 = vpack.c.bf16 %v1227, %v1226
      %v1257 = vpack.c.bf16 %v1229, %v1228
      %v1258 = vpack.c.bf16 %v1231, %v1230
      %v1259 = vpack.c.bf16 %v1233, %v1232
      %v1260 = vpack.c.bf16 %v1235, %v1234
      %v1261 = vpack.c.bf16 %v1237, %v1236
      %v1262 = vpack.c.bf16 %v1239, %v1238
      %v1263 = vpack.c.bf16 %v1241, %v1240
      %v1264 = vpack.c.bf16 %v1243, %v1242
      %v1265 = vpack.c.bf16 %v1245, %v1244
      %v1266 = vpack.c.bf16 %v1247, %v1246
      %v1267 = vpack.c.bf16 %v1249, %v1248
      %v1268 = vpack.c.bf16 %v1251, %v1250
      %v1269 = vpack.c.bf16 %v1253, %v1252
      %s1270 = scalar_lea.vmem %s7, 6
      %v1271 = vld [vmem:[%s1270] sm:$0x3]
      %v1273 = vsel %vm717, %v1254, 0
      %v1276 = vsel %vm717, %v1255, 0
      %v1279 = vsel %vm717, %v1256, 0
      %v1282 = vsel %vm717, %v1257, 0
      %v1285 = vsel %vm717, %v1258, 0
      %v1288 = vsel %vm717, %v1259, 0
      %v1291 = vsel %vm717, %v1260, 0
      %v1294 = vsel %vm717, %v1261, 0
      %v1297 = vsel %vm717, %v1262, 0
      %v1300 = vsel %vm717, %v1263, 0
      %v1303 = vsel %vm717, %v1264, 0
      %v1306 = vsel %vm717, %v1265, 0
      %v1309 = vsel %vm717, %v1266, 0
      %v1312 = vsel %vm717, %v1267, 0
      %v1315 = vsel %vm717, %v1268, 0
      %v1318 = vsel %vm717, %v1269, 0
      %v1321 = vsel %vm766, %v1271, 0
      %1323 = vmatpush.bf16.msra.mxu0 0
      %1324 = vmatpush.bf16.msra.mxu0 0
      %1325 = vmatpush.bf16.msra.mxu0 0
      %1326 = vmatpush.bf16.msra.mxu0 0
      %1327 = vmatpush.bf16.msra.mxu0 0
      %1328 = vmatpush.bf16.msra.mxu0 0
      %1329 = vmatpush.bf16.msra.mxu0 0
      %1330 = vmatpush.bf16.msra.mxu0 %v1321
      %1331 = vmatmul.bf16.gmra.mxu0 %v1273
      %v1332 = vpop.f32.mrf.mxu0
      %v1333 = vadd.f32 0.0, %v1332
      %v1334 = vpop.f32.mrf.mxu0
      %v1335 = vadd.f32 0.0, %v1334
      %1336 = vmatmul.bf16.gmra.mxu0 %v1276
      %v1337 = vpop.f32.mrf.mxu0
      %v1338 = vadd.f32 0.0, %v1337
      %v1339 = vpop.f32.mrf.mxu0
      %v1340 = vadd.f32 0.0, %v1339
      %1341 = vmatmul.bf16.gmra.mxu0 %v1279
      %v1342 = vpop.f32.mrf.mxu0
      %v1343 = vadd.f32 0.0, %v1342
      %v1344 = vpop.f32.mrf.mxu0
      %v1345 = vadd.f32 0.0, %v1344
      %1346 = vmatmul.bf16.gmra.mxu0 %v1282
      %v1347 = vpop.f32.mrf.mxu0
      %v1348 = vadd.f32 0.0, %v1347
      %v1349 = vpop.f32.mrf.mxu0
      %v1350 = vadd.f32 0.0, %v1349
      %1351 = vmatmul.bf16.gmra.mxu0 %v1285
      %v1352 = vpop.f32.mrf.mxu0
      %v1353 = vadd.f32 0.0, %v1352
      %v1354 = vpop.f32.mrf.mxu0
      %v1355 = vadd.f32 0.0, %v1354
      %1356 = vmatmul.bf16.gmra.mxu0 %v1288
      %v1357 = vpop.f32.mrf.mxu0
      %v1358 = vadd.f32 0.0, %v1357
      %v1359 = vpop.f32.mrf.mxu0
      %v1360 = vadd.f32 0.0, %v1359
      %1361 = vmatmul.bf16.gmra.mxu0 %v1291
      %v1362 = vpop.f32.mrf.mxu0
      %v1363 = vadd.f32 0.0, %v1362
      %v1364 = vpop.f32.mrf.mxu0
      %v1365 = vadd.f32 0.0, %v1364
      %1366 = vmatmul.bf16.gmra.mxu0 %v1294
      %v1367 = vpop.f32.mrf.mxu0
      %v1368 = vadd.f32 0.0, %v1367
      %v1369 = vpop.f32.mrf.mxu0
      %v1370 = vadd.f32 0.0, %v1369
      %1371 = vmatmul.bf16.gmra.mxu0 %v1297
      %v1372 = vpop.f32.mrf.mxu0
      %v1373 = vadd.f32 0.0, %v1372
      %v1374 = vpop.f32.mrf.mxu0
      %v1375 = vadd.f32 0.0, %v1374
      %1376 = vmatmul.bf16.gmra.mxu0 %v1300
      %v1377 = vpop.f32.mrf.mxu0
      %v1378 = vadd.f32 0.0, %v1377
      %v1379 = vpop.f32.mrf.mxu0
      %v1380 = vadd.f32 0.0, %v1379
      %1381 = vmatmul.bf16.gmra.mxu0 %v1303
      %v1382 = vpop.f32.mrf.mxu0
      %v1383 = vadd.f32 0.0, %v1382
      %v1384 = vpop.f32.mrf.mxu0
      %v1385 = vadd.f32 0.0, %v1384
      %1386 = vmatmul.bf16.gmra.mxu0 %v1306
      %v1387 = vpop.f32.mrf.mxu0
      %v1388 = vadd.f32 0.0, %v1387
      %v1389 = vpop.f32.mrf.mxu0
      %v1390 = vadd.f32 0.0, %v1389
      %1391 = vmatmul.bf16.gmra.mxu0 %v1309
      %v1392 = vpop.f32.mrf.mxu0
      %v1393 = vadd.f32 0.0, %v1392
      %v1394 = vpop.f32.mrf.mxu0
      %v1395 = vadd.f32 0.0, %v1394
      %1396 = vmatmul.bf16.gmra.mxu0 %v1312
      %v1397 = vpop.f32.mrf.mxu0
      %v1398 = vadd.f32 0.0, %v1397
      %v1399 = vpop.f32.mrf.mxu0
      %v1400 = vadd.f32 0.0, %v1399
      %1401 = vmatmul.bf16.gmra.mxu0 %v1315
      %v1402 = vpop.f32.mrf.mxu0
      %v1403 = vadd.f32 0.0, %v1402
      %v1404 = vpop.f32.mrf.mxu0
      %v1405 = vadd.f32 0.0, %v1404
      %1406 = vmatmul.bf16.gmra.mxu0 %v1318
      %v1407 = vpop.f32.mrf.mxu0
      %v1408 = vadd.f32 0.0, %v1407
      %v1409 = vpop.f32.mrf.mxu0
      %v1410 = vadd.f32 0.0, %v1409
      %1411 = vdwg.mxu0
      %v1412 = vadd.f32 %v1189, %v1333
      %v1413 = vadd.f32 %v1190, %v1335
      %v1414 = vadd.f32 %v1191, %v1338
      %v1415 = vadd.f32 %v1192, %v1340
      %v1416 = vadd.f32 %v1193, %v1343
      %v1417 = vadd.f32 %v1194, %v1345
      %v1418 = vadd.f32 %v1195, %v1348
      %v1419 = vadd.f32 %v1196, %v1350
      %v1420 = vadd.f32 %v1197, %v1353
      %v1421 = vadd.f32 %v1198, %v1355
      %v1422 = vadd.f32 %v1199, %v1358
      %v1423 = vadd.f32 %v1200, %v1360
      %v1424 = vadd.f32 %v1201, %v1363
      %v1425 = vadd.f32 %v1202, %v1365
      %v1426 = vadd.f32 %v1203, %v1368
      %v1427 = vadd.f32 %v1204, %v1370
      %v1428 = vadd.f32 %v1205, %v1373
      %v1429 = vadd.f32 %v1206, %v1375
      %v1430 = vadd.f32 %v1207, %v1378
      %v1431 = vadd.f32 %v1208, %v1380
      %v1432 = vadd.f32 %v1209, %v1383
      %v1433 = vadd.f32 %v1210, %v1385
      %v1434 = vadd.f32 %v1211, %v1388
      %v1435 = vadd.f32 %v1212, %v1390
      %v1436 = vadd.f32 %v1213, %v1393
      %v1437 = vadd.f32 %v1214, %v1395
      %v1438 = vadd.f32 %v1215, %v1398
      %v1439 = vadd.f32 %v1216, %v1400
      %v1440 = vadd.f32 %v1217, %v1403
      %v1441 = vadd.f32 %v1218, %v1405
      %v1442 = vadd.f32 %v1219, %v1408
      %v1443 = vadd.f32 %v1220, %v1410
      %v1444 = vld [vmem:[%s1221 + $0x1] sm:$0xff]
      %v1445 = vld [vmem:[%s1221 + $0x9] sm:$0xff]
      %v1446 = vld [vmem:[%s1221 + $0x19] sm:$0xff]
      %v1447 = vld [vmem:[%s1221 + $0x21] sm:$0xff]
      %v1448 = vld [vmem:[%s1221 + $0x31] sm:$0xff]
      %v1449 = vld [vmem:[%s1221 + $0x39] sm:$0xff]
      %v1450 = vld [vmem:[%s1221 + $0x49] sm:$0xff]
      %v1451 = vld [vmem:[%s1221 + $0x51] sm:$0xff]
      %v1452 = vld [vmem:[%s1221 + $0x61] sm:$0xff]
      %v1453 = vld [vmem:[%s1221 + $0x69] sm:$0xff]
      %v1454 = vld [vmem:[%s1221 + $0x79] sm:$0xff]
      %v1455 = vld [vmem:[%s1221 + $0x81] sm:$0xff]
      %v1456 = vld [vmem:[%s1221 + $0x91] sm:$0xff]
      %v1457 = vld [vmem:[%s1221 + $0x99] sm:$0xff]
      %v1458 = vld [vmem:[%s1221 + $0xa9] sm:$0xff]
      %v1459 = vld [vmem:[%s1221 + $0xb1] sm:$0xff]
      %v1460 = vld [vmem:[%s1221 + $0xc1] sm:$0xff]
      %v1461 = vld [vmem:[%s1221 + $0xc9] sm:$0xff]
      %v1462 = vld [vmem:[%s1221 + $0xd9] sm:$0xff]
      %v1463 = vld [vmem:[%s1221 + $0xe1] sm:$0xff]
      %v1464 = vld [vmem:[%s1221 + $0xf1] sm:$0xff]
      %v1465 = vld [vmem:[%s1221 + $0xf9] sm:$0xff]
      %v1466 = vld [vmem:[%s1221 + $0x109] sm:$0xff]
      %v1467 = vld [vmem:[%s1221 + $0x111] sm:$0xff]
      %v1468 = vld [vmem:[%s1221 + $0x121] sm:$0xff]
      %v1469 = vld [vmem:[%s1221 + $0x129] sm:$0xff]
      %v1470 = vld [vmem:[%s1221 + $0x139] sm:$0xff]
      %v1471 = vld [vmem:[%s1221 + $0x141] sm:$0xff]
      %v1472 = vld [vmem:[%s1221 + $0x151] sm:$0xff]
      %v1473 = vld [vmem:[%s1221 + $0x159] sm:$0xff]
      %v1474 = vld [vmem:[%s1221 + $0x169] sm:$0xff]
      %v1475 = vld [vmem:[%s1221 + $0x171] sm:$0xff]
      %v1476 = vpack.c.bf16 %v1445, %v1444
      %v1477 = vpack.c.bf16 %v1447, %v1446
      %v1478 = vpack.c.bf16 %v1449, %v1448
      %v1479 = vpack.c.bf16 %v1451, %v1450
      %v1480 = vpack.c.bf16 %v1453, %v1452
      %v1481 = vpack.c.bf16 %v1455, %v1454
      %v1482 = vpack.c.bf16 %v1457, %v1456
      %v1483 = vpack.c.bf16 %v1459, %v1458
      %v1484 = vpack.c.bf16 %v1461, %v1460
      %v1485 = vpack.c.bf16 %v1463, %v1462
      %v1486 = vpack.c.bf16 %v1465, %v1464
      %v1487 = vpack.c.bf16 %v1467, %v1466
      %v1488 = vpack.c.bf16 %v1469, %v1468
      %v1489 = vpack.c.bf16 %v1471, %v1470
      %v1490 = vpack.c.bf16 %v1473, %v1472
      %v1491 = vpack.c.bf16 %v1475, %v1474
      %s1492 = scalar_lea.vmem %s7, 8
      %v1493 = vld [vmem:[%s1492] sm:$0x3]
      %v1495 = vsel %vm717, %v1476, 0
      %v1498 = vsel %vm717, %v1477, 0
      %v1501 = vsel %vm717, %v1478, 0
      %v1504 = vsel %vm717, %v1479, 0
      %v1507 = vsel %vm717, %v1480, 0
      %v1510 = vsel %vm717, %v1481, 0
      %v1513 = vsel %vm717, %v1482, 0
      %v1516 = vsel %vm717, %v1483, 0
      %v1519 = vsel %vm717, %v1484, 0
      %v1522 = vsel %vm717, %v1485, 0
      %v1525 = vsel %vm717, %v1486, 0
      %v1528 = vsel %vm717, %v1487, 0
      %v1531 = vsel %vm717, %v1488, 0
      %v1534 = vsel %vm717, %v1489, 0
      %v1537 = vsel %vm717, %v1490, 0
      %v1540 = vsel %vm717, %v1491, 0
      %v1543 = vsel %vm766, %v1493, 0
      %1545 = vmatpush.bf16.msra.mxu0 0
      %1546 = vmatpush.bf16.msra.mxu0 0
      %1547 = vmatpush.bf16.msra.mxu0 0
      %1548 = vmatpush.bf16.msra.mxu0 0
      %1549 = vmatpush.bf16.msra.mxu0 0
      %1550 = vmatpush.bf16.msra.mxu0 0
      %1551 = vmatpush.bf16.msra.mxu0 0
      %1552 = vmatpush.bf16.msra.mxu0 %v1543
      %1553 = vmatmul.bf16.gmra.mxu0 %v1495
      %v1554 = vpop.f32.mrf.mxu0
      %v1555 = vadd.f32 0.0, %v1554
      %v1556 = vpop.f32.mrf.mxu0
      %v1557 = vadd.f32 0.0, %v1556
      %1558 = vmatmul.bf16.gmra.mxu0 %v1498
      %v1559 = vpop.f32.mrf.mxu0
      %v1560 = vadd.f32 0.0, %v1559
      %v1561 = vpop.f32.mrf.mxu0
      %v1562 = vadd.f32 0.0, %v1561
      %1563 = vmatmul.bf16.gmra.mxu0 %v1501
      %v1564 = vpop.f32.mrf.mxu0
      %v1565 = vadd.f32 0.0, %v1564
      %v1566 = vpop.f32.mrf.mxu0
      %v1567 = vadd.f32 0.0, %v1566
      %1568 = vmatmul.bf16.gmra.mxu0 %v1504
      %v1569 = vpop.f32.mrf.mxu0
      %v1570 = vadd.f32 0.0, %v1569
      %v1571 = vpop.f32.mrf.mxu0
      %v1572 = vadd.f32 0.0, %v1571
      %1573 = vmatmul.bf16.gmra.mxu0 %v1507
      %v1574 = vpop.f32.mrf.mxu0
      %v1575 = vadd.f32 0.0, %v1574
      %v1576 = vpop.f32.mrf.mxu0
      %v1577 = vadd.f32 0.0, %v1576
      %1578 = vmatmul.bf16.gmra.mxu0 %v1510
      %v1579 = vpop.f32.mrf.mxu0
      %v1580 = vadd.f32 0.0, %v1579
      %v1581 = vpop.f32.mrf.mxu0
      %v1582 = vadd.f32 0.0, %v1581
      %1583 = vmatmul.bf16.gmra.mxu0 %v1513
      %v1584 = vpop.f32.mrf.mxu0
      %v1585 = vadd.f32 0.0, %v1584
      %v1586 = vpop.f32.mrf.mxu0
      %v1587 = vadd.f32 0.0, %v1586
      %1588 = vmatmul.bf16.gmra.mxu0 %v1516
      %v1589 = vpop.f32.mrf.mxu0
      %v1590 = vadd.f32 0.0, %v1589
      %v1591 = vpop.f32.mrf.mxu0
      %v1592 = vadd.f32 0.0, %v1591
      %1593 = vmatmul.bf16.gmra.mxu0 %v1519
      %v1594 = vpop.f32.mrf.mxu0
      %v1595 = vadd.f32 0.0, %v1594
      %v1596 = vpop.f32.mrf.mxu0
      %v1597 = vadd.f32 0.0, %v1596
      %1598 = vmatmul.bf16.gmra.mxu0 %v1522
      %v1599 = vpop.f32.mrf.mxu0
      %v1600 = vadd.f32 0.0, %v1599
      %v1601 = vpop.f32.mrf.mxu0
      %v1602 = vadd.f32 0.0, %v1601
      %1603 = vmatmul.bf16.gmra.mxu0 %v1525
      %v1604 = vpop.f32.mrf.mxu0
      %v1605 = vadd.f32 0.0, %v1604
      %v1606 = vpop.f32.mrf.mxu0
      %v1607 = vadd.f32 0.0, %v1606
      %1608 = vmatmul.bf16.gmra.mxu0 %v1528
      %v1609 = vpop.f32.mrf.mxu0
      %v1610 = vadd.f32 0.0, %v1609
      %v1611 = vpop.f32.mrf.mxu0
      %v1612 = vadd.f32 0.0, %v1611
      %1613 = vmatmul.bf16.gmra.mxu0 %v1531
      %v1614 = vpop.f32.mrf.mxu0
      %v1615 = vadd.f32 0.0, %v1614
      %v1616 = vpop.f32.mrf.mxu0
      %v1617 = vadd.f32 0.0, %v1616
      %1618 = vmatmul.bf16.gmra.mxu0 %v1534
      %v1619 = vpop.f32.mrf.mxu0
      %v1620 = vadd.f32 0.0, %v1619
      %v1621 = vpop.f32.mrf.mxu0
      %v1622 = vadd.f32 0.0, %v1621
      %1623 = vmatmul.bf16.gmra.mxu0 %v1537
      %v1624 = vpop.f32.mrf.mxu0
      %v1625 = vadd.f32 0.0, %v1624
      %v1626 = vpop.f32.mrf.mxu0
      %v1627 = vadd.f32 0.0, %v1626
      %1628 = vmatmul.bf16.gmra.mxu0 %v1540
      %v1629 = vpop.f32.mrf.mxu0
      %v1630 = vadd.f32 0.0, %v1629
      %v1631 = vpop.f32.mrf.mxu0
      %v1632 = vadd.f32 0.0, %v1631
      %1633 = vdwg.mxu0
      %v1634 = vadd.f32 %v1412, %v1555
      %v1635 = vadd.f32 %v1413, %v1557
      %v1636 = vadd.f32 %v1414, %v1560
      %v1637 = vadd.f32 %v1415, %v1562
      %v1638 = vadd.f32 %v1416, %v1565
      %v1639 = vadd.f32 %v1417, %v1567
      %v1640 = vadd.f32 %v1418, %v1570
      %v1641 = vadd.f32 %v1419, %v1572
      %v1642 = vadd.f32 %v1420, %v1575
      %v1643 = vadd.f32 %v1421, %v1577
      %v1644 = vadd.f32 %v1422, %v1580
      %v1645 = vadd.f32 %v1423, %v1582
      %v1646 = vadd.f32 %v1424, %v1585
      %v1647 = vadd.f32 %v1425, %v1587
      %v1648 = vadd.f32 %v1426, %v1590
      %v1649 = vadd.f32 %v1427, %v1592
      %v1650 = vadd.f32 %v1428, %v1595
      %v1651 = vadd.f32 %v1429, %v1597
      %v1652 = vadd.f32 %v1430, %v1600
      %v1653 = vadd.f32 %v1431, %v1602
      %v1654 = vadd.f32 %v1432, %v1605
      %v1655 = vadd.f32 %v1433, %v1607
      %v1656 = vadd.f32 %v1434, %v1610
      %v1657 = vadd.f32 %v1435, %v1612
      %v1658 = vadd.f32 %v1436, %v1615
      %v1659 = vadd.f32 %v1437, %v1617
      %v1660 = vadd.f32 %v1438, %v1620
      %v1661 = vadd.f32 %v1439, %v1622
      %v1662 = vadd.f32 %v1440, %v1625
      %v1663 = vadd.f32 %v1441, %v1627
      %v1664 = vadd.f32 %v1442, %v1630
      %v1665 = vadd.f32 %v1443, %v1632
      %v1666 = vld [vmem:[%s1221 + $0x2] sm:$0xff]
      %v1667 = vld [vmem:[%s1221 + $0xa] sm:$0xff]
      %v1668 = vld [vmem:[%s1221 + $0x1a] sm:$0xff]
      %v1669 = vld [vmem:[%s1221 + $0x22] sm:$0xff]
      %v1670 = vld [vmem:[%s1221 + $0x32] sm:$0xff]
      %v1671 = vld [vmem:[%s1221 + $0x3a] sm:$0xff]
      %v1672 = vld [vmem:[%s1221 + $0x4a] sm:$0xff]
      %v1673 = vld [vmem:[%s1221 + $0x52] sm:$0xff]
      %v1674 = vld [vmem:[%s1221 + $0x62] sm:$0xff]
      %v1675 = vld [vmem:[%s1221 + $0x6a] sm:$0xff]
      %v1676 = vld [vmem:[%s1221 + $0x7a] sm:$0xff]
      %v1677 = vld [vmem:[%s1221 + $0x82] sm:$0xff]
      %v1678 = vld [vmem:[%s1221 + $0x92] sm:$0xff]
      %v1679 = vld [vmem:[%s1221 + $0x9a] sm:$0xff]
      %v1680 = vld [vmem:[%s1221 + $0xaa] sm:$0xff]
      %v1681 = vld [vmem:[%s1221 + $0xb2] sm:$0xff]
      %v1682 = vld [vmem:[%s1221 + $0xc2] sm:$0xff]
      %v1683 = vld [vmem:[%s1221 + $0xca] sm:$0xff]
      %v1684 = vld [vmem:[%s1221 + $0xda] sm:$0xff]
      %v1685 = vld [vmem:[%s1221 + $0xe2] sm:$0xff]
      %v1686 = vld [vmem:[%s1221 + $0xf2] sm:$0xff]
      %v1687 = vld [vmem:[%s1221 + $0xfa] sm:$0xff]
      %v1688 = vld [vmem:[%s1221 + $0x10a] sm:$0xff]
      %v1689 = vld [vmem:[%s1221 + $0x112] sm:$0xff]
      %v1690 = vld [vmem:[%s1221 + $0x122] sm:$0xff]
      %v1691 = vld [vmem:[%s1221 + $0x12a] sm:$0xff]
      %v1692 = vld [vmem:[%s1221 + $0x13a] sm:$0xff]
      %v1693 = vld [vmem:[%s1221 + $0x142] sm:$0xff]
      %v1694 = vld [vmem:[%s1221 + $0x152] sm:$0xff]
      %v1695 = vld [vmem:[%s1221 + $0x15a] sm:$0xff]
      %v1696 = vld [vmem:[%s1221 + $0x16a] sm:$0xff]
      %v1697 = vld [vmem:[%s1221 + $0x172] sm:$0xff]
      %v1698 = vpack.c.bf16 %v1667, %v1666
      %v1699 = vpack.c.bf16 %v1669, %v1668
      %v1700 = vpack.c.bf16 %v1671, %v1670
      %v1701 = vpack.c.bf16 %v1673, %v1672
      %v1702 = vpack.c.bf16 %v1675, %v1674
      %v1703 = vpack.c.bf16 %v1677, %v1676
      %v1704 = vpack.c.bf16 %v1679, %v1678
      %v1705 = vpack.c.bf16 %v1681, %v1680
      %v1706 = vpack.c.bf16 %v1683, %v1682
      %v1707 = vpack.c.bf16 %v1685, %v1684
      %v1708 = vpack.c.bf16 %v1687, %v1686
      %v1709 = vpack.c.bf16 %v1689, %v1688
      %v1710 = vpack.c.bf16 %v1691, %v1690
      %v1711 = vpack.c.bf16 %v1693, %v1692
      %v1712 = vpack.c.bf16 %v1695, %v1694
      %v1713 = vpack.c.bf16 %v1697, %v1696
      %s1714 = scalar_lea.vmem %s7, 10
      %v1715 = vld [vmem:[%s1714] sm:$0x3]
      %v1717 = vsel %vm717, %v1698, 0
      %v1720 = vsel %vm717, %v1699, 0
      %v1723 = vsel %vm717, %v1700, 0
      %v1726 = vsel %vm717, %v1701, 0
      %v1729 = vsel %vm717, %v1702, 0
      %v1732 = vsel %vm717, %v1703, 0
      %v1735 = vsel %vm717, %v1704, 0
      %v1738 = vsel %vm717, %v1705, 0
      %v1741 = vsel %vm717, %v1706, 0
      %v1744 = vsel %vm717, %v1707, 0
      %v1747 = vsel %vm717, %v1708, 0
      %v1750 = vsel %vm717, %v1709, 0
      %v1753 = vsel %vm717, %v1710, 0
      %v1756 = vsel %vm717, %v1711, 0
      %v1759 = vsel %vm717, %v1712, 0
      %v1762 = vsel %vm717, %v1713, 0
      %v1765 = vsel %vm766, %v1715, 0
      %1767 = vmatpush.bf16.msra.mxu0 0
      %1768 = vmatpush.bf16.msra.mxu0 0
      %1769 = vmatpush.bf16.msra.mxu0 0
      %1770 = vmatpush.bf16.msra.mxu0 0
      %1771 = vmatpush.bf16.msra.mxu0 0
      %1772 = vmatpush.bf16.msra.mxu0 0
      %1773 = vmatpush.bf16.msra.mxu0 0
      %1774 = vmatpush.bf16.msra.mxu0 %v1765
      %1775 = vmatmul.bf16.gmra.mxu0 %v1717
      %v1776 = vpop.f32.mrf.mxu0
      %v1777 = vadd.f32 0.0, %v1776
      %v1778 = vpop.f32.mrf.mxu0
      %v1779 = vadd.f32 0.0, %v1778
      %1780 = vmatmul.bf16.gmra.mxu0 %v1720
      %v1781 = vpop.f32.mrf.mxu0
      %v1782 = vadd.f32 0.0, %v1781
      %v1783 = vpop.f32.mrf.mxu0
      %v1784 = vadd.f32 0.0, %v1783
      %1785 = vmatmul.bf16.gmra.mxu0 %v1723
      %v1786 = vpop.f32.mrf.mxu0
      %v1787 = vadd.f32 0.0, %v1786
      %v1788 = vpop.f32.mrf.mxu0
      %v1789 = vadd.f32 0.0, %v1788
      %1790 = vmatmul.bf16.gmra.mxu0 %v1726
      %v1791 = vpop.f32.mrf.mxu0
      %v1792 = vadd.f32 0.0, %v1791
      %v1793 = vpop.f32.mrf.mxu0
      %v1794 = vadd.f32 0.0, %v1793
      %1795 = vmatmul.bf16.gmra.mxu0 %v1729
      %v1796 = vpop.f32.mrf.mxu0
      %v1797 = vadd.f32 0.0, %v1796
      %v1798 = vpop.f32.mrf.mxu0
      %v1799 = vadd.f32 0.0, %v1798
      %1800 = vmatmul.bf16.gmra.mxu0 %v1732
      %v1801 = vpop.f32.mrf.mxu0
      %v1802 = vadd.f32 0.0, %v1801
      %v1803 = vpop.f32.mrf.mxu0
      %v1804 = vadd.f32 0.0, %v1803
      %1805 = vmatmul.bf16.gmra.mxu0 %v1735
      %v1806 = vpop.f32.mrf.mxu0
      %v1807 = vadd.f32 0.0, %v1806
      %v1808 = vpop.f32.mrf.mxu0
      %v1809 = vadd.f32 0.0, %v1808
      %1810 = vmatmul.bf16.gmra.mxu0 %v1738
      %v1811 = vpop.f32.mrf.mxu0
      %v1812 = vadd.f32 0.0, %v1811
      %v1813 = vpop.f32.mrf.mxu0
      %v1814 = vadd.f32 0.0, %v1813
      %1815 = vmatmul.bf16.gmra.mxu0 %v1741
      %v1816 = vpop.f32.mrf.mxu0
      %v1817 = vadd.f32 0.0, %v1816
      %v1818 = vpop.f32.mrf.mxu0
      %v1819 = vadd.f32 0.0, %v1818
      %1820 = vmatmul.bf16.gmra.mxu0 %v1744
      %v1821 = vpop.f32.mrf.mxu0
      %v1822 = vadd.f32 0.0, %v1821
      %v1823 = vpop.f32.mrf.mxu0
      %v1824 = vadd.f32 0.0, %v1823
      %1825 = vmatmul.bf16.gmra.mxu0 %v1747
      %v1826 = vpop.f32.mrf.mxu0
      %v1827 = vadd.f32 0.0, %v1826
      %v1828 = vpop.f32.mrf.mxu0
      %v1829 = vadd.f32 0.0, %v1828
      %1830 = vmatmul.bf16.gmra.mxu0 %v1750
      %v1831 = vpop.f32.mrf.mxu0
      %v1832 = vadd.f32 0.0, %v1831
      %v1833 = vpop.f32.mrf.mxu0
      %v1834 = vadd.f32 0.0, %v1833
      %1835 = vmatmul.bf16.gmra.mxu0 %v1753
      %v1836 = vpop.f32.mrf.mxu0
      %v1837 = vadd.f32 0.0, %v1836
      %v1838 = vpop.f32.mrf.mxu0
      %v1839 = vadd.f32 0.0, %v1838
      %1840 = vmatmul.bf16.gmra.mxu0 %v1756
      %v1841 = vpop.f32.mrf.mxu0
      %v1842 = vadd.f32 0.0, %v1841
      %v1843 = vpop.f32.mrf.mxu0
      %v1844 = vadd.f32 0.0, %v1843
      %1845 = vmatmul.bf16.gmra.mxu0 %v1759
      %v1846 = vpop.f32.mrf.mxu0
      %v1847 = vadd.f32 0.0, %v1846
      %v1848 = vpop.f32.mrf.mxu0
      %v1849 = vadd.f32 0.0, %v1848
      %1850 = vmatmul.bf16.gmra.mxu0 %v1762
      %v1851 = vpop.f32.mrf.mxu0
      %v1852 = vadd.f32 0.0, %v1851
      %v1853 = vpop.f32.mrf.mxu0
      %v1854 = vadd.f32 0.0, %v1853
      %1855 = vdwg.mxu0
      %v1856 = vadd.f32 %v1634, %v1777
      %v1857 = vadd.f32 %v1635, %v1779
      %v1858 = vadd.f32 %v1636, %v1782
      %v1859 = vadd.f32 %v1637, %v1784
      %v1860 = vadd.f32 %v1638, %v1787
      %v1861 = vadd.f32 %v1639, %v1789
      %v1862 = vadd.f32 %v1640, %v1792
      %v1863 = vadd.f32 %v1641, %v1794
      %v1864 = vadd.f32 %v1642, %v1797
      %v1865 = vadd.f32 %v1643, %v1799
      %v1866 = vadd.f32 %v1644, %v1802
      %v1867 = vadd.f32 %v1645, %v1804
      %v1868 = vadd.f32 %v1646, %v1807
      %v1869 = vadd.f32 %v1647, %v1809
      %v1870 = vadd.f32 %v1648, %v1812
      %v1871 = vadd.f32 %v1649, %v1814
      %v1872 = vadd.f32 %v1650, %v1817
      %v1873 = vadd.f32 %v1651, %v1819
      %v1874 = vadd.f32 %v1652, %v1822
      %v1875 = vadd.f32 %v1653, %v1824
      %v1876 = vadd.f32 %v1654, %v1827
      %v1877 = vadd.f32 %v1655, %v1829
      %v1878 = vadd.f32 %v1656, %v1832
      %v1879 = vadd.f32 %v1657, %v1834
      %v1880 = vadd.f32 %v1658, %v1837
      %v1881 = vadd.f32 %v1659, %v1839
      %v1882 = vadd.f32 %v1660, %v1842
      %v1883 = vadd.f32 %v1661, %v1844
      %v1884 = vadd.f32 %v1662, %v1847
      %v1885 = vadd.f32 %v1663, %v1849
      %v1886 = vadd.f32 %v1664, %v1852
      %v1887 = vadd.f32 %v1665, %v1854
      %s1888 = scalar_lea.vmem %s529, 48
      %v1889 = vld [vmem:[%s1888] sm:$0xff]
      %v1890 = vld [vmem:[%s1888 + $0x8] sm:$0xff]
      %v1891 = vld [vmem:[%s1888 + $0x18] sm:$0xff]
      %v1892 = vld [vmem:[%s1888 + $0x20] sm:$0xff]
      %v1893 = vld [vmem:[%s1888 + $0x30] sm:$0xff]
      %v1894 = vld [vmem:[%s1888 + $0x38] sm:$0xff]
      %v1895 = vld [vmem:[%s1888 + $0x48] sm:$0xff]
      %v1896 = vld [vmem:[%s1888 + $0x50] sm:$0xff]
      %v1897 = vld [vmem:[%s1888 + $0x60] sm:$0xff]
      %v1898 = vld [vmem:[%s1888 + $0x68] sm:$0xff]
      %v1899 = vld [vmem:[%s1888 + $0x78] sm:$0xff]
      %v1900 = vld [vmem:[%s1888 + $0x80] sm:$0xff]
      %v1901 = vld [vmem:[%s1888 + $0x90] sm:$0xff]
      %v1902 = vld [vmem:[%s1888 + $0x98] sm:$0xff]
      %v1903 = vld [vmem:[%s1888 + $0xa8] sm:$0xff]
      %v1904 = vld [vmem:[%s1888 + $0xb0] sm:$0xff]
      %v1905 = vld [vmem:[%s1888 + $0xc0] sm:$0xff]
      %v1906 = vld [vmem:[%s1888 + $0xc8] sm:$0xff]
      %v1907 = vld [vmem:[%s1888 + $0xd8] sm:$0xff]
      %v1908 = vld [vmem:[%s1888 + $0xe0] sm:$0xff]
      %v1909 = vld [vmem:[%s1888 + $0xf0] sm:$0xff]
      %v1910 = vld [vmem:[%s1888 + $0xf8] sm:$0xff]
      %v1911 = vld [vmem:[%s1888 + $0x108] sm:$0xff]
      %v1912 = vld [vmem:[%s1888 + $0x110] sm:$0xff]
      %v1913 = vld [vmem:[%s1888 + $0x120] sm:$0xff]
      %v1914 = vld [vmem:[%s1888 + $0x128] sm:$0xff]
      %v1915 = vld [vmem:[%s1888 + $0x138] sm:$0xff]
      %v1916 = vld [vmem:[%s1888 + $0x140] sm:$0xff]
      %v1917 = vld [vmem:[%s1888 + $0x150] sm:$0xff]
      %v1918 = vld [vmem:[%s1888 + $0x158] sm:$0xff]
      %v1919 = vld [vmem:[%s1888 + $0x168] sm:$0xff]
      %v1920 = vld [vmem:[%s1888 + $0x170] sm:$0xff]
      %v1921 = vpack.c.bf16 %v1890, %v1889
      %v1922 = vpack.c.bf16 %v1892, %v1891
      %v1923 = vpack.c.bf16 %v1894, %v1893
      %v1924 = vpack.c.bf16 %v1896, %v1895
      %v1925 = vpack.c.bf16 %v1898, %v1897
      %v1926 = vpack.c.bf16 %v1900, %v1899
      %v1927 = vpack.c.bf16 %v1902, %v1901
      %v1928 = vpack.c.bf16 %v1904, %v1903
      %v1929 = vpack.c.bf16 %v1906, %v1905
      %v1930 = vpack.c.bf16 %v1908, %v1907
      %v1931 = vpack.c.bf16 %v1910, %v1909
      %v1932 = vpack.c.bf16 %v1912, %v1911
      %v1933 = vpack.c.bf16 %v1914, %v1913
      %v1934 = vpack.c.bf16 %v1916, %v1915
      %v1935 = vpack.c.bf16 %v1918, %v1917
      %v1936 = vpack.c.bf16 %v1920, %v1919
      %s1937 = scalar_lea.vmem %s7, 12
      %v1938 = vld [vmem:[%s1937] sm:$0x3]
      %v1940 = vsel %vm717, %v1921, 0
      %v1943 = vsel %vm717, %v1922, 0
      %v1946 = vsel %vm717, %v1923, 0
      %v1949 = vsel %vm717, %v1924, 0
      %v1952 = vsel %vm717, %v1925, 0
      %v1955 = vsel %vm717, %v1926, 0
      %v1958 = vsel %vm717, %v1927, 0
      %v1961 = vsel %vm717, %v1928, 0
      %v1964 = vsel %vm717, %v1929, 0
      %v1967 = vsel %vm717, %v1930, 0
      %v1970 = vsel %vm717, %v1931, 0
      %v1973 = vsel %vm717, %v1932, 0
      %v1976 = vsel %vm717, %v1933, 0
      %v1979 = vsel %vm717, %v1934, 0
      %v1982 = vsel %vm717, %v1935, 0
      %v1985 = vsel %vm717, %v1936, 0
      %v1988 = vsel %vm766, %v1938, 0
      %1990 = vmatpush.bf16.msra.mxu0 0
      %1991 = vmatpush.bf16.msra.mxu0 0
      %1992 = vmatpush.bf16.msra.mxu0 0
      %1993 = vmatpush.bf16.msra.mxu0 0
      %1994 = vmatpush.bf16.msra.mxu0 0
      %1995 = vmatpush.bf16.msra.mxu0 0
      %1996 = vmatpush.bf16.msra.mxu0 0
      %1997 = vmatpush.bf16.msra.mxu0 %v1988
      %1998 = vmatmul.bf16.gmra.mxu0 %v1940
      %v1999 = vpop.f32.mrf.mxu0
      %v2000 = vadd.f32 0.0, %v1999
      %v2001 = vpop.f32.mrf.mxu0
      %v2002 = vadd.f32 0.0, %v2001
      %2003 = vmatmul.bf16.gmra.mxu0 %v1943
      %v2004 = vpop.f32.mrf.mxu0
      %v2005 = vadd.f32 0.0, %v2004
      %v2006 = vpop.f32.mrf.mxu0
      %v2007 = vadd.f32 0.0, %v2006
      %2008 = vmatmul.bf16.gmra.mxu0 %v1946
      %v2009 = vpop.f32.mrf.mxu0
      %v2010 = vadd.f32 0.0, %v2009
      %v2011 = vpop.f32.mrf.mxu0
      %v2012 = vadd.f32 0.0, %v2011
      %2013 = vmatmul.bf16.gmra.mxu0 %v1949
      %v2014 = vpop.f32.mrf.mxu0
      %v2015 = vadd.f32 0.0, %v2014
      %v2016 = vpop.f32.mrf.mxu0
      %v2017 = vadd.f32 0.0, %v2016
      %2018 = vmatmul.bf16.gmra.mxu0 %v1952
      %v2019 = vpop.f32.mrf.mxu0
      %v2020 = vadd.f32 0.0, %v2019
      %v2021 = vpop.f32.mrf.mxu0
      %v2022 = vadd.f32 0.0, %v2021
      %2023 = vmatmul.bf16.gmra.mxu0 %v1955
      %v2024 = vpop.f32.mrf.mxu0
      %v2025 = vadd.f32 0.0, %v2024
      %v2026 = vpop.f32.mrf.mxu0
      %v2027 = vadd.f32 0.0, %v2026
      %2028 = vmatmul.bf16.gmra.mxu0 %v1958
      %v2029 = vpop.f32.mrf.mxu0
      %v2030 = vadd.f32 0.0, %v2029
      %v2031 = vpop.f32.mrf.mxu0
      %v2032 = vadd.f32 0.0, %v2031
      %2033 = vmatmul.bf16.gmra.mxu0 %v1961
      %v2034 = vpop.f32.mrf.mxu0
      %v2035 = vadd.f32 0.0, %v2034
      %v2036 = vpop.f32.mrf.mxu0
      %v2037 = vadd.f32 0.0, %v2036
      %2038 = vmatmul.bf16.gmra.mxu0 %v1964
      %v2039 = vpop.f32.mrf.mxu0
      %v2040 = vadd.f32 0.0, %v2039
      %v2041 = vpop.f32.mrf.mxu0
      %v2042 = vadd.f32 0.0, %v2041
      %2043 = vmatmul.bf16.gmra.mxu0 %v1967
      %v2044 = vpop.f32.mrf.mxu0
      %v2045 = vadd.f32 0.0, %v2044
      %v2046 = vpop.f32.mrf.mxu0
      %v2047 = vadd.f32 0.0, %v2046
      %2048 = vmatmul.bf16.gmra.mxu0 %v1970
      %v2049 = vpop.f32.mrf.mxu0
      %v2050 = vadd.f32 0.0, %v2049
      %v2051 = vpop.f32.mrf.mxu0
      %v2052 = vadd.f32 0.0, %v2051
      %2053 = vmatmul.bf16.gmra.mxu0 %v1973
      %v2054 = vpop.f32.mrf.mxu0
      %v2055 = vadd.f32 0.0, %v2054
      %v2056 = vpop.f32.mrf.mxu0
      %v2057 = vadd.f32 0.0, %v2056
      %2058 = vmatmul.bf16.gmra.mxu0 %v1976
      %v2059 = vpop.f32.mrf.mxu0
      %v2060 = vadd.f32 0.0, %v2059
      %v2061 = vpop.f32.mrf.mxu0
      %v2062 = vadd.f32 0.0, %v2061
      %2063 = vmatmul.bf16.gmra.mxu0 %v1979
      %v2064 = vpop.f32.mrf.mxu0
      %v2065 = vadd.f32 0.0, %v2064
      %v2066 = vpop.f32.mrf.mxu0
      %v2067 = vadd.f32 0.0, %v2066
      %2068 = vmatmul.bf16.gmra.mxu0 %v1982
      %v2069 = vpop.f32.mrf.mxu0
      %v2070 = vadd.f32 0.0, %v2069
      %v2071 = vpop.f32.mrf.mxu0
      %v2072 = vadd.f32 0.0, %v2071
      %2073 = vmatmul.bf16.gmra.mxu0 %v1985
      %v2074 = vpop.f32.mrf.mxu0
      %v2075 = vadd.f32 0.0, %v2074
      %v2076 = vpop.f32.mrf.mxu0
      %v2077 = vadd.f32 0.0, %v2076
      %2078 = vdwg.mxu0
      %v2079 = vadd.f32 %v1856, %v2000
      %v2080 = vadd.f32 %v1857, %v2002
      %v2081 = vadd.f32 %v1858, %v2005
      %v2082 = vadd.f32 %v1859, %v2007
      %v2083 = vadd.f32 %v1860, %v2010
      %v2084 = vadd.f32 %v1861, %v2012
      %v2085 = vadd.f32 %v1862, %v2015
      %v2086 = vadd.f32 %v1863, %v2017
      %v2087 = vadd.f32 %v1864, %v2020
      %v2088 = vadd.f32 %v1865, %v2022
      %v2089 = vadd.f32 %v1866, %v2025
      %v2090 = vadd.f32 %v1867, %v2027
      %v2091 = vadd.f32 %v1868, %v2030
      %v2092 = vadd.f32 %v1869, %v2032
      %v2093 = vadd.f32 %v1870, %v2035
      %v2094 = vadd.f32 %v1871, %v2037
      %v2095 = vadd.f32 %v1872, %v2040
      %v2096 = vadd.f32 %v1873, %v2042
      %v2097 = vadd.f32 %v1874, %v2045
      %v2098 = vadd.f32 %v1875, %v2047
      %v2099 = vadd.f32 %v1876, %v2050
      %v2100 = vadd.f32 %v1877, %v2052
      %v2101 = vadd.f32 %v1878, %v2055
      %v2102 = vadd.f32 %v1879, %v2057
      %v2103 = vadd.f32 %v1880, %v2060
      %v2104 = vadd.f32 %v1881, %v2062
      %v2105 = vadd.f32 %v1882, %v2065
      %v2106 = vadd.f32 %v1883, %v2067
      %v2107 = vadd.f32 %v1884, %v2070
      %v2108 = vadd.f32 %v1885, %v2072
      %v2109 = vadd.f32 %v1886, %v2075
      %v2110 = vadd.f32 %v1887, %v2077
      %v2111 = vld [vmem:[%s1888 + $0x1] sm:$0xff]
      %v2112 = vld [vmem:[%s1888 + $0x9] sm:$0xff]
      %v2113 = vld [vmem:[%s1888 + $0x19] sm:$0xff]
      %v2114 = vld [vmem:[%s1888 + $0x21] sm:$0xff]
      %v2115 = vld [vmem:[%s1888 + $0x31] sm:$0xff]
      %v2116 = vld [vmem:[%s1888 + $0x39] sm:$0xff]
      %v2117 = vld [vmem:[%s1888 + $0x49] sm:$0xff]
      %v2118 = vld [vmem:[%s1888 + $0x51] sm:$0xff]
      %v2119 = vld [vmem:[%s1888 + $0x61] sm:$0xff]
      %v2120 = vld [vmem:[%s1888 + $0x69] sm:$0xff]
      %v2121 = vld [vmem:[%s1888 + $0x79] sm:$0xff]
      %v2122 = vld [vmem:[%s1888 + $0x81] sm:$0xff]
      %v2123 = vld [vmem:[%s1888 + $0x91] sm:$0xff]
      %v2124 = vld [vmem:[%s1888 + $0x99] sm:$0xff]
      %v2125 = vld [vmem:[%s1888 + $0xa9] sm:$0xff]
      %v2126 = vld [vmem:[%s1888 + $0xb1] sm:$0xff]
      %v2127 = vld [vmem:[%s1888 + $0xc1] sm:$0xff]
      %v2128 = vld [vmem:[%s1888 + $0xc9] sm:$0xff]
      %v2129 = vld [vmem:[%s1888 + $0xd9] sm:$0xff]
      %v2130 = vld [vmem:[%s1888 + $0xe1] sm:$0xff]
      %v2131 = vld [vmem:[%s1888 + $0xf1] sm:$0xff]
      %v2132 = vld [vmem:[%s1888 + $0xf9] sm:$0xff]
      %v2133 = vld [vmem:[%s1888 + $0x109] sm:$0xff]
      %v2134 = vld [vmem:[%s1888 + $0x111] sm:$0xff]
      %v2135 = vld [vmem:[%s1888 + $0x121] sm:$0xff]
      %v2136 = vld [vmem:[%s1888 + $0x129] sm:$0xff]
      %v2137 = vld [vmem:[%s1888 + $0x139] sm:$0xff]
      %v2138 = vld [vmem:[%s1888 + $0x141] sm:$0xff]
      %v2139 = vld [vmem:[%s1888 + $0x151] sm:$0xff]
      %v2140 = vld [vmem:[%s1888 + $0x159] sm:$0xff]
      %v2141 = vld [vmem:[%s1888 + $0x169] sm:$0xff]
      %v2142 = vld [vmem:[%s1888 + $0x171] sm:$0xff]
      %v2143 = vpack.c.bf16 %v2112, %v2111
      %v2144 = vpack.c.bf16 %v2114, %v2113
      %v2145 = vpack.c.bf16 %v2116, %v2115
      %v2146 = vpack.c.bf16 %v2118, %v2117
      %v2147 = vpack.c.bf16 %v2120, %v2119
      %v2148 = vpack.c.bf16 %v2122, %v2121
      %v2149 = vpack.c.bf16 %v2124, %v2123
      %v2150 = vpack.c.bf16 %v2126, %v2125
      %v2151 = vpack.c.bf16 %v2128, %v2127
      %v2152 = vpack.c.bf16 %v2130, %v2129
      %v2153 = vpack.c.bf16 %v2132, %v2131
      %v2154 = vpack.c.bf16 %v2134, %v2133
      %v2155 = vpack.c.bf16 %v2136, %v2135
      %v2156 = vpack.c.bf16 %v2138, %v2137
      %v2157 = vpack.c.bf16 %v2140, %v2139
      %v2158 = vpack.c.bf16 %v2142, %v2141
      %s2159 = scalar_lea.vmem %s7, 14
      %v2160 = vld [vmem:[%s2159] sm:$0x3]
      %v2162 = vsel %vm717, %v2143, 0
      %v2165 = vsel %vm717, %v2144, 0
      %v2168 = vsel %vm717, %v2145, 0
      %v2171 = vsel %vm717, %v2146, 0
      %v2174 = vsel %vm717, %v2147, 0
      %v2177 = vsel %vm717, %v2148, 0
      %v2180 = vsel %vm717, %v2149, 0
      %v2183 = vsel %vm717, %v2150, 0
      %v2186 = vsel %vm717, %v2151, 0
      %v2189 = vsel %vm717, %v2152, 0
      %v2192 = vsel %vm717, %v2153, 0
      %v2195 = vsel %vm717, %v2154, 0
      %v2198 = vsel %vm717, %v2155, 0
      %v2201 = vsel %vm717, %v2156, 0
      %v2204 = vsel %vm717, %v2157, 0
      %v2207 = vsel %vm717, %v2158, 0
      %v2210 = vsel %vm766, %v2160, 0
      %2212 = vmatpush.bf16.msra.mxu0 0
      %2213 = vmatpush.bf16.msra.mxu0 0
      %2214 = vmatpush.bf16.msra.mxu0 0
      %2215 = vmatpush.bf16.msra.mxu0 0
      %2216 = vmatpush.bf16.msra.mxu0 0
      %2217 = vmatpush.bf16.msra.mxu0 0
      %2218 = vmatpush.bf16.msra.mxu0 0
      %2219 = vmatpush.bf16.msra.mxu0 %v2210
      %2220 = vmatmul.bf16.gmra.mxu0 %v2162
      %v2221 = vpop.f32.mrf.mxu0
      %v2222 = vadd.f32 0.0, %v2221
      %v2223 = vpop.f32.mrf.mxu0
      %v2224 = vadd.f32 0.0, %v2223
      %2225 = vmatmul.bf16.gmra.mxu0 %v2165
      %v2226 = vpop.f32.mrf.mxu0
      %v2227 = vadd.f32 0.0, %v2226
      %v2228 = vpop.f32.mrf.mxu0
      %v2229 = vadd.f32 0.0, %v2228
      %2230 = vmatmul.bf16.gmra.mxu0 %v2168
      %v2231 = vpop.f32.mrf.mxu0
      %v2232 = vadd.f32 0.0, %v2231
      %v2233 = vpop.f32.mrf.mxu0
      %v2234 = vadd.f32 0.0, %v2233
      %2235 = vmatmul.bf16.gmra.mxu0 %v2171
      %v2236 = vpop.f32.mrf.mxu0
      %v2237 = vadd.f32 0.0, %v2236
      %v2238 = vpop.f32.mrf.mxu0
      %v2239 = vadd.f32 0.0, %v2238
      %2240 = vmatmul.bf16.gmra.mxu0 %v2174
      %v2241 = vpop.f32.mrf.mxu0
      %v2242 = vadd.f32 0.0, %v2241
      %v2243 = vpop.f32.mrf.mxu0
      %v2244 = vadd.f32 0.0, %v2243
      %2245 = vmatmul.bf16.gmra.mxu0 %v2177
      %v2246 = vpop.f32.mrf.mxu0
      %v2247 = vadd.f32 0.0, %v2246
      %v2248 = vpop.f32.mrf.mxu0
      %v2249 = vadd.f32 0.0, %v2248
      %2250 = vmatmul.bf16.gmra.mxu0 %v2180
      %v2251 = vpop.f32.mrf.mxu0
      %v2252 = vadd.f32 0.0, %v2251
      %v2253 = vpop.f32.mrf.mxu0
      %v2254 = vadd.f32 0.0, %v2253
      %2255 = vmatmul.bf16.gmra.mxu0 %v2183
      %v2256 = vpop.f32.mrf.mxu0
      %v2257 = vadd.f32 0.0, %v2256
      %v2258 = vpop.f32.mrf.mxu0
      %v2259 = vadd.f32 0.0, %v2258
      %2260 = vmatmul.bf16.gmra.mxu0 %v2186
      %v2261 = vpop.f32.mrf.mxu0
      %v2262 = vadd.f32 0.0, %v2261
      %v2263 = vpop.f32.mrf.mxu0
      %v2264 = vadd.f32 0.0, %v2263
      %2265 = vmatmul.bf16.gmra.mxu0 %v2189
      %v2266 = vpop.f32.mrf.mxu0
      %v2267 = vadd.f32 0.0, %v2266
      %v2268 = vpop.f32.mrf.mxu0
      %v2269 = vadd.f32 0.0, %v2268
      %2270 = vmatmul.bf16.gmra.mxu0 %v2192
      %v2271 = vpop.f32.mrf.mxu0
      %v2272 = vadd.f32 0.0, %v2271
      %v2273 = vpop.f32.mrf.mxu0
      %v2274 = vadd.f32 0.0, %v2273
      %2275 = vmatmul.bf16.gmra.mxu0 %v2195
      %v2276 = vpop.f32.mrf.mxu0
      %v2277 = vadd.f32 0.0, %v2276
      %v2278 = vpop.f32.mrf.mxu0
      %v2279 = vadd.f32 0.0, %v2278
      %2280 = vmatmul.bf16.gmra.mxu0 %v2198
      %v2281 = vpop.f32.mrf.mxu0
      %v2282 = vadd.f32 0.0, %v2281
      %v2283 = vpop.f32.mrf.mxu0
      %v2284 = vadd.f32 0.0, %v2283
      %2285 = vmatmul.bf16.gmra.mxu0 %v2201
      %v2286 = vpop.f32.mrf.mxu0
      %v2287 = vadd.f32 0.0, %v2286
      %v2288 = vpop.f32.mrf.mxu0
      %v2289 = vadd.f32 0.0, %v2288
      %2290 = vmatmul.bf16.gmra.mxu0 %v2204
      %v2291 = vpop.f32.mrf.mxu0
      %v2292 = vadd.f32 0.0, %v2291
      %v2293 = vpop.f32.mrf.mxu0
      %v2294 = vadd.f32 0.0, %v2293
      %2295 = vmatmul.bf16.gmra.mxu0 %v2207
      %v2296 = vpop.f32.mrf.mxu0
      %v2297 = vadd.f32 0.0, %v2296
      %v2298 = vpop.f32.mrf.mxu0
      %v2299 = vadd.f32 0.0, %v2298
      %2300 = vdwg.mxu0
      %v2301 = vadd.f32 %v2079, %v2222
      %v2302 = vadd.f32 %v2080, %v2224
      %v2303 = vadd.f32 %v2081, %v2227
      %v2304 = vadd.f32 %v2082, %v2229
      %v2305 = vadd.f32 %v2083, %v2232
      %v2306 = vadd.f32 %v2084, %v2234
      %v2307 = vadd.f32 %v2085, %v2237
      %v2308 = vadd.f32 %v2086, %v2239
      %v2309 = vadd.f32 %v2087, %v2242
      %v2310 = vadd.f32 %v2088, %v2244
      %v2311 = vadd.f32 %v2089, %v2247
      %v2312 = vadd.f32 %v2090, %v2249
      %v2313 = vadd.f32 %v2091, %v2252
      %v2314 = vadd.f32 %v2092, %v2254
      %v2315 = vadd.f32 %v2093, %v2257
      %v2316 = vadd.f32 %v2094, %v2259
      %v2317 = vadd.f32 %v2095, %v2262
      %v2318 = vadd.f32 %v2096, %v2264
      %v2319 = vadd.f32 %v2097, %v2267
      %v2320 = vadd.f32 %v2098, %v2269
      %v2321 = vadd.f32 %v2099, %v2272
      %v2322 = vadd.f32 %v2100, %v2274
      %v2323 = vadd.f32 %v2101, %v2277
      %v2324 = vadd.f32 %v2102, %v2279
      %v2325 = vadd.f32 %v2103, %v2282
      %v2326 = vadd.f32 %v2104, %v2284
      %v2327 = vadd.f32 %v2105, %v2287
      %v2328 = vadd.f32 %v2106, %v2289
      %v2329 = vadd.f32 %v2107, %v2292
      %v2330 = vadd.f32 %v2108, %v2294
      %v2331 = vadd.f32 %v2109, %v2297
      %v2332 = vadd.f32 %v2110, %v2299
      %v2333 = vld [vmem:[%s1888 + $0x2] sm:$0xff]
      %v2334 = vld [vmem:[%s1888 + $0xa] sm:$0xff]
      %v2335 = vld [vmem:[%s1888 + $0x1a] sm:$0xff]
      %v2336 = vld [vmem:[%s1888 + $0x22] sm:$0xff]
      %v2337 = vld [vmem:[%s1888 + $0x32] sm:$0xff]
      %v2338 = vld [vmem:[%s1888 + $0x3a] sm:$0xff]
      %v2339 = vld [vmem:[%s1888 + $0x4a] sm:$0xff]
      %v2340 = vld [vmem:[%s1888 + $0x52] sm:$0xff]
      %v2341 = vld [vmem:[%s1888 + $0x62] sm:$0xff]
      %v2342 = vld [vmem:[%s1888 + $0x6a] sm:$0xff]
      %v2343 = vld [vmem:[%s1888 + $0x7a] sm:$0xff]
      %v2344 = vld [vmem:[%s1888 + $0x82] sm:$0xff]
      %v2345 = vld [vmem:[%s1888 + $0x92] sm:$0xff]
      %v2346 = vld [vmem:[%s1888 + $0x9a] sm:$0xff]
      %v2347 = vld [vmem:[%s1888 + $0xaa] sm:$0xff]
      %v2348 = vld [vmem:[%s1888 + $0xb2] sm:$0xff]
      %v2349 = vld [vmem:[%s1888 + $0xc2] sm:$0xff]
      %v2350 = vld [vmem:[%s1888 + $0xca] sm:$0xff]
      %v2351 = vld [vmem:[%s1888 + $0xda] sm:$0xff]
      %v2352 = vld [vmem:[%s1888 + $0xe2] sm:$0xff]
      %v2353 = vld [vmem:[%s1888 + $0xf2] sm:$0xff]
      %v2354 = vld [vmem:[%s1888 + $0xfa] sm:$0xff]
      %v2355 = vld [vmem:[%s1888 + $0x10a] sm:$0xff]
      %v2356 = vld [vmem:[%s1888 + $0x112] sm:$0xff]
      %v2357 = vld [vmem:[%s1888 + $0x122] sm:$0xff]
      %v2358 = vld [vmem:[%s1888 + $0x12a] sm:$0xff]
      %v2359 = vld [vmem:[%s1888 + $0x13a] sm:$0xff]
      %v2360 = vld [vmem:[%s1888 + $0x142] sm:$0xff]
      %v2361 = vld [vmem:[%s1888 + $0x152] sm:$0xff]
      %v2362 = vld [vmem:[%s1888 + $0x15a] sm:$0xff]
      %v2363 = vld [vmem:[%s1888 + $0x16a] sm:$0xff]
      %v2364 = vld [vmem:[%s1888 + $0x172] sm:$0xff]
      %v2365 = vpack.c.bf16 %v2334, %v2333
      %v2366 = vpack.c.bf16 %v2336, %v2335
      %v2367 = vpack.c.bf16 %v2338, %v2337
      %v2368 = vpack.c.bf16 %v2340, %v2339
      %v2369 = vpack.c.bf16 %v2342, %v2341
      %v2370 = vpack.c.bf16 %v2344, %v2343
      %v2371 = vpack.c.bf16 %v2346, %v2345
      %v2372 = vpack.c.bf16 %v2348, %v2347
      %v2373 = vpack.c.bf16 %v2350, %v2349
      %v2374 = vpack.c.bf16 %v2352, %v2351
      %v2375 = vpack.c.bf16 %v2354, %v2353
      %v2376 = vpack.c.bf16 %v2356, %v2355
      %v2377 = vpack.c.bf16 %v2358, %v2357
      %v2378 = vpack.c.bf16 %v2360, %v2359
      %v2379 = vpack.c.bf16 %v2362, %v2361
      %v2380 = vpack.c.bf16 %v2364, %v2363
      %s2381 = scalar_lea.vmem %s7, 16
      %v2382 = vld [vmem:[%s2381] sm:$0x3]
      %v2384 = vsel %vm717, %v2365, 0
      %v2387 = vsel %vm717, %v2366, 0
      %v2390 = vsel %vm717, %v2367, 0
      %v2393 = vsel %vm717, %v2368, 0
      %v2396 = vsel %vm717, %v2369, 0
      %v2399 = vsel %vm717, %v2370, 0
      %v2402 = vsel %vm717, %v2371, 0
      %v2405 = vsel %vm717, %v2372, 0
      %v2408 = vsel %vm717, %v2373, 0
      %v2411 = vsel %vm717, %v2374, 0
      %v2414 = vsel %vm717, %v2375, 0
      %v2417 = vsel %vm717, %v2376, 0
      %v2420 = vsel %vm717, %v2377, 0
      %v2423 = vsel %vm717, %v2378, 0
      %v2426 = vsel %vm717, %v2379, 0
      %v2429 = vsel %vm717, %v2380, 0
      %v2432 = vsel %vm766, %v2382, 0
      %2434 = vmatpush.bf16.msra.mxu0 0
      %2435 = vmatpush.bf16.msra.mxu0 0
      %2436 = vmatpush.bf16.msra.mxu0 0
      %2437 = vmatpush.bf16.msra.mxu0 0
      %2438 = vmatpush.bf16.msra.mxu0 0
      %2439 = vmatpush.bf16.msra.mxu0 0
      %2440 = vmatpush.bf16.msra.mxu0 0
      %2441 = vmatpush.bf16.msra.mxu0 %v2432
      %2442 = vmatmul.bf16.gmra.mxu0 %v2384
      %v2443 = vpop.f32.mrf.mxu0
      %v2444 = vadd.f32 0.0, %v2443
      %v2445 = vpop.f32.mrf.mxu0
      %v2446 = vadd.f32 0.0, %v2445
      %2447 = vmatmul.bf16.gmra.mxu0 %v2387
      %v2448 = vpop.f32.mrf.mxu0
      %v2449 = vadd.f32 0.0, %v2448
      %v2450 = vpop.f32.mrf.mxu0
      %v2451 = vadd.f32 0.0, %v2450
      %2452 = vmatmul.bf16.gmra.mxu0 %v2390
      %v2453 = vpop.f32.mrf.mxu0
      %v2454 = vadd.f32 0.0, %v2453
      %v2455 = vpop.f32.mrf.mxu0
      %v2456 = vadd.f32 0.0, %v2455
      %2457 = vmatmul.bf16.gmra.mxu0 %v2393
      %v2458 = vpop.f32.mrf.mxu0
      %v2459 = vadd.f32 0.0, %v2458
      %v2460 = vpop.f32.mrf.mxu0
      %v2461 = vadd.f32 0.0, %v2460
      %2462 = vmatmul.bf16.gmra.mxu0 %v2396
      %v2463 = vpop.f32.mrf.mxu0
      %v2464 = vadd.f32 0.0, %v2463
      %v2465 = vpop.f32.mrf.mxu0
      %v2466 = vadd.f32 0.0, %v2465
      %2467 = vmatmul.bf16.gmra.mxu0 %v2399
      %v2468 = vpop.f32.mrf.mxu0
      %v2469 = vadd.f32 0.0, %v2468
      %v2470 = vpop.f32.mrf.mxu0
      %v2471 = vadd.f32 0.0, %v2470
      %2472 = vmatmul.bf16.gmra.mxu0 %v2402
      %v2473 = vpop.f32.mrf.mxu0
      %v2474 = vadd.f32 0.0, %v2473
      %v2475 = vpop.f32.mrf.mxu0
      %v2476 = vadd.f32 0.0, %v2475
      %2477 = vmatmul.bf16.gmra.mxu0 %v2405
      %v2478 = vpop.f32.mrf.mxu0
      %v2479 = vadd.f32 0.0, %v2478
      %v2480 = vpop.f32.mrf.mxu0
      %v2481 = vadd.f32 0.0, %v2480
      %2482 = vmatmul.bf16.gmra.mxu0 %v2408
      %v2483 = vpop.f32.mrf.mxu0
      %v2484 = vadd.f32 0.0, %v2483
      %v2485 = vpop.f32.mrf.mxu0
      %v2486 = vadd.f32 0.0, %v2485
      %2487 = vmatmul.bf16.gmra.mxu0 %v2411
      %v2488 = vpop.f32.mrf.mxu0
      %v2489 = vadd.f32 0.0, %v2488
      %v2490 = vpop.f32.mrf.mxu0
      %v2491 = vadd.f32 0.0, %v2490
      %2492 = vmatmul.bf16.gmra.mxu0 %v2414
      %v2493 = vpop.f32.mrf.mxu0
      %v2494 = vadd.f32 0.0, %v2493
      %v2495 = vpop.f32.mrf.mxu0
      %v2496 = vadd.f32 0.0, %v2495
      %2497 = vmatmul.bf16.gmra.mxu0 %v2417
      %v2498 = vpop.f32.mrf.mxu0
      %v2499 = vadd.f32 0.0, %v2498
      %v2500 = vpop.f32.mrf.mxu0
      %v2501 = vadd.f32 0.0, %v2500
      %2502 = vmatmul.bf16.gmra.mxu0 %v2420
      %v2503 = vpop.f32.mrf.mxu0
      %v2504 = vadd.f32 0.0, %v2503
      %v2505 = vpop.f32.mrf.mxu0
      %v2506 = vadd.f32 0.0, %v2505
      %2507 = vmatmul.bf16.gmra.mxu0 %v2423
      %v2508 = vpop.f32.mrf.mxu0
      %v2509 = vadd.f32 0.0, %v2508
      %v2510 = vpop.f32.mrf.mxu0
      %v2511 = vadd.f32 0.0, %v2510
      %2512 = vmatmul.bf16.gmra.mxu0 %v2426
      %v2513 = vpop.f32.mrf.mxu0
      %v2514 = vadd.f32 0.0, %v2513
      %v2515 = vpop.f32.mrf.mxu0
      %v2516 = vadd.f32 0.0, %v2515
      %2517 = vmatmul.bf16.gmra.mxu0 %v2429
      %v2518 = vpop.f32.mrf.mxu0
      %v2519 = vadd.f32 0.0, %v2518
      %v2520 = vpop.f32.mrf.mxu0
      %v2521 = vadd.f32 0.0, %v2520
      %2522 = vdwg.mxu0
      %v2523 = vadd.f32 %v2301, %v2444
      %v2524 = vadd.f32 %v2302, %v2446
      %v2525 = vadd.f32 %v2303, %v2449
      %v2526 = vadd.f32 %v2304, %v2451
      %v2527 = vadd.f32 %v2305, %v2454
      %v2528 = vadd.f32 %v2306, %v2456
      %v2529 = vadd.f32 %v2307, %v2459
      %v2530 = vadd.f32 %v2308, %v2461
      %v2531 = vadd.f32 %v2309, %v2464
      %v2532 = vadd.f32 %v2310, %v2466
      %v2533 = vadd.f32 %v2311, %v2469
      %v2534 = vadd.f32 %v2312, %v2471
      %v2535 = vadd.f32 %v2313, %v2474
      %v2536 = vadd.f32 %v2314, %v2476
      %v2537 = vadd.f32 %v2315, %v2479
      %v2538 = vadd.f32 %v2316, %v2481
      %v2539 = vadd.f32 %v2317, %v2484
      %v2540 = vadd.f32 %v2318, %v2486
      %v2541 = vadd.f32 %v2319, %v2489
      %v2542 = vadd.f32 %v2320, %v2491
      %v2543 = vadd.f32 %v2321, %v2494
      %v2544 = vadd.f32 %v2322, %v2496
      %v2545 = vadd.f32 %v2323, %v2499
      %v2546 = vadd.f32 %v2324, %v2501
      %v2547 = vadd.f32 %v2325, %v2504
      %v2548 = vadd.f32 %v2326, %v2506
      %v2549 = vadd.f32 %v2327, %v2509
      %v2550 = vadd.f32 %v2328, %v2511
      %v2551 = vadd.f32 %v2329, %v2514
      %v2552 = vadd.f32 %v2330, %v2516
      %v2553 = vadd.f32 %v2331, %v2519
      %v2554 = vadd.f32 %v2332, %v2521
      %v2555 = vld [vmem:[%s8] sm:$0x1]
      %v2557 = vperm.slane %v2555, 0
      %v2559 = vadd.f32 %v2523, %v2557
      %v2560 = vadd.f32 %v2524, %v2557
      %v2561 = vadd.f32 %v2525, %v2557
      %v2562 = vadd.f32 %v2526, %v2557
      %v2563 = vadd.f32 %v2527, %v2557
      %v2564 = vadd.f32 %v2528, %v2557
      %v2565 = vadd.f32 %v2529, %v2557
      %v2566 = vadd.f32 %v2530, %v2557
      %v2567 = vadd.f32 %v2531, %v2557
      %v2568 = vadd.f32 %v2532, %v2557
      %v2569 = vadd.f32 %v2533, %v2557
      %v2570 = vadd.f32 %v2534, %v2557
      %v2571 = vadd.f32 %v2535, %v2557
      %v2572 = vadd.f32 %v2536, %v2557
      %v2573 = vadd.f32 %v2537, %v2557
      %v2574 = vadd.f32 %v2538, %v2557
      %v2575 = vadd.f32 %v2539, %v2557
      %v2576 = vadd.f32 %v2540, %v2557
      %v2577 = vadd.f32 %v2541, %v2557
      %v2578 = vadd.f32 %v2542, %v2557
      %v2579 = vadd.f32 %v2543, %v2557
      %v2580 = vadd.f32 %v2544, %v2557
      %v2581 = vadd.f32 %v2545, %v2557
      %v2582 = vadd.f32 %v2546, %v2557
      %v2583 = vadd.f32 %v2547, %v2557
      %v2584 = vadd.f32 %v2548, %v2557
      %v2585 = vadd.f32 %v2549, %v2557
      %v2586 = vadd.f32 %v2550, %v2557
      %v2587 = vadd.f32 %v2551, %v2557
      %v2588 = vadd.f32 %v2552, %v2557
      %v2589 = vadd.f32 %v2553, %v2557
      %v2590 = vadd.f32 %v2554, %v2557
      %v2591 = vperm.slane %v616, 0
      %v2592 = vadd.f32 %v2559, %v2591
      %v2593 = vadd.f32 %v2560, %v2591
      %v2594 = vadd.f32 %v2561, %v2591
      %v2595 = vadd.f32 %v2562, %v2591
      %v2596 = vadd.f32 %v2563, %v2591
      %v2597 = vadd.f32 %v2564, %v2591
      %v2598 = vadd.f32 %v2565, %v2591
      %v2599 = vadd.f32 %v2566, %v2591
      %v2600 = vadd.f32 %v2567, %v2591
      %v2601 = vadd.f32 %v2568, %v2591
      %v2602 = vadd.f32 %v2569, %v2591
      %v2603 = vadd.f32 %v2570, %v2591
      %v2604 = vadd.f32 %v2571, %v2591
      %v2605 = vadd.f32 %v2572, %v2591
      %v2606 = vadd.f32 %v2573, %v2591
      %v2607 = vadd.f32 %v2574, %v2591
      %v2608 = vadd.f32 %v2575, %v2591
      %v2609 = vadd.f32 %v2576, %v2591
      %v2610 = vadd.f32 %v2577, %v2591
      %v2611 = vadd.f32 %v2578, %v2591
      %v2612 = vadd.f32 %v2579, %v2591
      %v2613 = vadd.f32 %v2580, %v2591
      %v2614 = vadd.f32 %v2581, %v2591
      %v2615 = vadd.f32 %v2582, %v2591
      %v2616 = vadd.f32 %v2583, %v2591
      %v2617 = vadd.f32 %v2584, %v2591
      %v2618 = vadd.f32 %v2585, %v2591
      %v2619 = vadd.f32 %v2586, %v2591
      %v2620 = vadd.f32 %v2587, %v2591
      %v2621 = vadd.f32 %v2588, %v2591
      %v2622 = vadd.f32 %v2589, %v2591
      %v2623 = vadd.f32 %v2590, %v2591
      %v2624 = vxor.u32 %v2592, 2147483648
      %v2625 = vxor.u32 %v2593, 2147483648
      %v2626 = vxor.u32 %v2594, 2147483648
      %v2627 = vxor.u32 %v2595, 2147483648
      %v2628 = vxor.u32 %v2596, 2147483648
      %v2629 = vxor.u32 %v2597, 2147483648
      %v2630 = vxor.u32 %v2598, 2147483648
      %v2631 = vxor.u32 %v2599, 2147483648
      %v2632 = vxor.u32 %v2600, 2147483648
      %v2633 = vxor.u32 %v2601, 2147483648
      %v2634 = vxor.u32 %v2602, 2147483648
      %v2635 = vxor.u32 %v2603, 2147483648
      %v2636 = vxor.u32 %v2604, 2147483648
      %v2637 = vxor.u32 %v2605, 2147483648
      %v2638 = vxor.u32 %v2606, 2147483648
      %v2639 = vxor.u32 %v2607, 2147483648
      %v2640 = vxor.u32 %v2608, 2147483648
      %v2641 = vxor.u32 %v2609, 2147483648
      %v2642 = vxor.u32 %v2610, 2147483648
      %v2643 = vxor.u32 %v2611, 2147483648
      %v2644 = vxor.u32 %v2612, 2147483648
      %v2645 = vxor.u32 %v2613, 2147483648
      %v2646 = vxor.u32 %v2614, 2147483648
      %v2647 = vxor.u32 %v2615, 2147483648
      %v2648 = vxor.u32 %v2616, 2147483648
      %v2649 = vxor.u32 %v2617, 2147483648
      %v2650 = vxor.u32 %v2618, 2147483648
      %v2651 = vxor.u32 %v2619, 2147483648
      %v2652 = vxor.u32 %v2620, 2147483648
      %v2653 = vxor.u32 %v2621, 2147483648
      %v2654 = vxor.u32 %v2622, 2147483648
      %v2655 = vxor.u32 %v2623, 2147483648
      %v2656 = vmul.f32 %v2624, 1.442695
      %v2657 = vpow.pop %v2656
      %v2658 = vmul.f32 %v2625, 1.442695
      %v2659 = vpow.pop %v2658
      %v2660 = vmul.f32 %v2626, 1.442695
      %v2661 = vpow.pop %v2660
      %v2662 = vmul.f32 %v2627, 1.442695
      %v2663 = vpow.pop %v2662
      %v2664 = vmul.f32 %v2628, 1.442695
      %v2665 = vpow.pop %v2664
      %v2666 = vmul.f32 %v2629, 1.442695
      %v2667 = vpow.pop %v2666
      %v2668 = vmul.f32 %v2630, 1.442695
      %v2669 = vpow.pop %v2668
      %v2670 = vmul.f32 %v2631, 1.442695
      %v2671 = vpow.pop %v2670
      %v2672 = vmul.f32 %v2632, 1.442695
      %v2673 = vpow.pop %v2672
      %v2674 = vmul.f32 %v2633, 1.442695
      %v2675 = vpow.pop %v2674
      %v2676 = vmul.f32 %v2634, 1.442695
      %v2677 = vpow.pop %v2676
      %v2678 = vmul.f32 %v2635, 1.442695
      %v2679 = vpow.pop %v2678
      %v2680 = vmul.f32 %v2636, 1.442695
      %v2681 = vpow.pop %v2680
      %v2682 = vmul.f32 %v2637, 1.442695
      %v2683 = vpow.pop %v2682
      %v2684 = vmul.f32 %v2638, 1.442695
      %v2685 = vpow.pop %v2684
      %v2686 = vmul.f32 %v2639, 1.442695
      %v2687 = vpow.pop %v2686
      %v2688 = vmul.f32 %v2640, 1.442695
      %v2689 = vpow.pop %v2688
      %v2690 = vmul.f32 %v2641, 1.442695
      %v2691 = vpow.pop %v2690
      %v2692 = vmul.f32 %v2642, 1.442695
      %v2693 = vpow.pop %v2692
      %v2694 = vmul.f32 %v2643, 1.442695
      %v2695 = vpow.pop %v2694
      %v2696 = vmul.f32 %v2644, 1.442695
      %v2697 = vpow.pop %v2696
      %v2698 = vmul.f32 %v2645, 1.442695
      %v2699 = vpow.pop %v2698
      %v2700 = vmul.f32 %v2646, 1.442695
      %v2701 = vpow.pop %v2700
      %v2702 = vmul.f32 %v2647, 1.442695
      %v2703 = vpow.pop %v2702
      %v2704 = vmul.f32 %v2648, 1.442695
      %v2705 = vpow.pop %v2704
      %v2706 = vmul.f32 %v2649, 1.442695
      %v2707 = vpow.pop %v2706
      %v2708 = vmul.f32 %v2650, 1.442695
      %v2709 = vpow.pop %v2708
      %v2710 = vmul.f32 %v2651, 1.442695
      %v2711 = vpow.pop %v2710
      %v2712 = vmul.f32 %v2652, 1.442695
      %v2713 = vpow.pop %v2712
      %v2714 = vmul.f32 %v2653, 1.442695
      %v2715 = vpow.pop %v2714
      %v2716 = vmul.f32 %v2654, 1.442695
      %v2717 = vpow.pop %v2716
      %v2718 = vmul.f32 %v2655, 1.442695
      %v2719 = vpow.pop %v2718
      %v2720 = vadd.f32 %v2657, 1.0
      %v2721 = vadd.f32 %v2659, 1.0
      %v2722 = vadd.f32 %v2661, 1.0
      %v2723 = vadd.f32 %v2663, 1.0
      %v2724 = vadd.f32 %v2665, 1.0
      %v2725 = vadd.f32 %v2667, 1.0
      %v2726 = vadd.f32 %v2669, 1.0
      %v2727 = vadd.f32 %v2671, 1.0
      %v2728 = vadd.f32 %v2673, 1.0
      %v2729 = vadd.f32 %v2675, 1.0
      %v2730 = vadd.f32 %v2677, 1.0
      %v2731 = vadd.f32 %v2679, 1.0
      %v2732 = vadd.f32 %v2681, 1.0
      %v2733 = vadd.f32 %v2683, 1.0
      %v2734 = vadd.f32 %v2685, 1.0
      %v2735 = vadd.f32 %v2687, 1.0
      %v2736 = vadd.f32 %v2689, 1.0
      %v2737 = vadd.f32 %v2691, 1.0
      %v2738 = vadd.f32 %v2693, 1.0
      %v2739 = vadd.f32 %v2695, 1.0
      %v2740 = vadd.f32 %v2697, 1.0
      %v2741 = vadd.f32 %v2699, 1.0
      %v2742 = vadd.f32 %v2701, 1.0
      %v2743 = vadd.f32 %v2703, 1.0
      %v2744 = vadd.f32 %v2705, 1.0
      %v2745 = vadd.f32 %v2707, 1.0
      %v2746 = vadd.f32 %v2709, 1.0
      %v2747 = vadd.f32 %v2711, 1.0
      %v2748 = vadd.f32 %v2713, 1.0
      %v2749 = vadd.f32 %v2715, 1.0
      %v2750 = vadd.f32 %v2717, 1.0
      %v2751 = vadd.f32 %v2719, 1.0
      %v2752 = vrcp.pop %v2720
      %v2753 = vmul.f32 %v2720, %v2752
      %v2754 = vsub.f32 1.0, %v2753
      %v2755 = vmul.f32 %v2752, %v2754
      %v2756 = vadd.f32 %v2752, %v2755
      %vm2757 = vweird.f32 %v2720
      %vm2758 = vweird.f32 %v2752
      %vm2759 = vmor %vm2757, %vm2758
      %v2760 = vsel %vm2759, %v2752, %v2756
      %v2761 = vand.u32 2147483647, %v2720
      %vm2762 = vcmp.eq.f32.partialorder %v2761, 8.507059e+37
      %v2763 = vand.u32 %v2720, 2147483648
      %v2764 = vor.u32 1.1754944e-38, %v2763
      %v2765 = vsel %vm2762, %v2764, %v2760
      %v2766 = vmul.f32 1.0, %v2765
      %v2767 = vrcp.pop %v2721
      %v2768 = vmul.f32 %v2721, %v2767
      %v2769 = vsub.f32 1.0, %v2768
      %v2770 = vmul.f32 %v2767, %v2769
      %v2771 = vadd.f32 %v2767, %v2770
      %vm2772 = vweird.f32 %v2721
      %vm2773 = vweird.f32 %v2767
      %vm2774 = vmor %vm2772, %vm2773
      %v2775 = vsel %vm2774, %v2767, %v2771
      %v2776 = vand.u32 2147483647, %v2721
      %vm2777 = vcmp.eq.f32.partialorder %v2776, 8.507059e+37
      %v2778 = vand.u32 %v2721, 2147483648
      %v2779 = vor.u32 1.1754944e-38, %v2778
      %v2780 = vsel %vm2777, %v2779, %v2775
      %v2781 = vmul.f32 1.0, %v2780
      %v2782 = vrcp.pop %v2722
      %v2783 = vmul.f32 %v2722, %v2782
      %v2784 = vsub.f32 1.0, %v2783
      %v2785 = vmul.f32 %v2782, %v2784
      %v2786 = vadd.f32 %v2782, %v2785
      %vm2787 = vweird.f32 %v2722
      %vm2788 = vweird.f32 %v2782
      %vm2789 = vmor %vm2787, %vm2788
      %v2790 = vsel %vm2789, %v2782, %v2786
      %v2791 = vand.u32 2147483647, %v2722
      %vm2792 = vcmp.eq.f32.partialorder %v2791, 8.507059e+37
      %v2793 = vand.u32 %v2722, 2147483648
      %v2794 = vor.u32 1.1754944e-38, %v2793
      %v2795 = vsel %vm2792, %v2794, %v2790
      %v2796 = vmul.f32 1.0, %v2795
      %v2797 = vrcp.pop %v2723
      %v2798 = vmul.f32 %v2723, %v2797
      %v2799 = vsub.f32 1.0, %v2798
      %v2800 = vmul.f32 %v2797, %v2799
      %v2801 = vadd.f32 %v2797, %v2800
      %vm2802 = vweird.f32 %v2723
      %vm2803 = vweird.f32 %v2797
      %vm2804 = vmor %vm2802, %vm2803
      %v2805 = vsel %vm2804, %v2797, %v2801
      %v2806 = vand.u32 2147483647, %v2723
      %vm2807 = vcmp.eq.f32.partialorder %v2806, 8.507059e+37
      %v2808 = vand.u32 %v2723, 2147483648
      %v2809 = vor.u32 1.1754944e-38, %v2808
      %v2810 = vsel %vm2807, %v2809, %v2805
      %v2811 = vmul.f32 1.0, %v2810
      %v2812 = vrcp.pop %v2724
      %v2813 = vmul.f32 %v2724, %v2812
      %v2814 = vsub.f32 1.0, %v2813
      %v2815 = vmul.f32 %v2812, %v2814
      %v2816 = vadd.f32 %v2812, %v2815
      %vm2817 = vweird.f32 %v2724
      %vm2818 = vweird.f32 %v2812
      %vm2819 = vmor %vm2817, %vm2818
      %v2820 = vsel %vm2819, %v2812, %v2816
      %v2821 = vand.u32 2147483647, %v2724
      %vm2822 = vcmp.eq.f32.partialorder %v2821, 8.507059e+37
      %v2823 = vand.u32 %v2724, 2147483648
      %v2824 = vor.u32 1.1754944e-38, %v2823
      %v2825 = vsel %vm2822, %v2824, %v2820
      %v2826 = vmul.f32 1.0, %v2825
      %v2827 = vrcp.pop %v2725
      %v2828 = vmul.f32 %v2725, %v2827
      %v2829 = vsub.f32 1.0, %v2828
      %v2830 = vmul.f32 %v2827, %v2829
      %v2831 = vadd.f32 %v2827, %v2830
      %vm2832 = vweird.f32 %v2725
      %vm2833 = vweird.f32 %v2827
      %vm2834 = vmor %vm2832, %vm2833
      %v2835 = vsel %vm2834, %v2827, %v2831
      %v2836 = vand.u32 2147483647, %v2725
      %vm2837 = vcmp.eq.f32.partialorder %v2836, 8.507059e+37
      %v2838 = vand.u32 %v2725, 2147483648
      %v2839 = vor.u32 1.1754944e-38, %v2838
      %v2840 = vsel %vm2837, %v2839, %v2835
      %v2841 = vmul.f32 1.0, %v2840
      %v2842 = vrcp.pop %v2726
      %v2843 = vmul.f32 %v2726, %v2842
      %v2844 = vsub.f32 1.0, %v2843
      %v2845 = vmul.f32 %v2842, %v2844
      %v2846 = vadd.f32 %v2842, %v2845
      %vm2847 = vweird.f32 %v2726
      %vm2848 = vweird.f32 %v2842
      %vm2849 = vmor %vm2847, %vm2848
      %v2850 = vsel %vm2849, %v2842, %v2846
      %v2851 = vand.u32 2147483647, %v2726
      %vm2852 = vcmp.eq.f32.partialorder %v2851, 8.507059e+37
      %v2853 = vand.u32 %v2726, 2147483648
      %v2854 = vor.u32 1.1754944e-38, %v2853
      %v2855 = vsel %vm2852, %v2854, %v2850
      %v2856 = vmul.f32 1.0, %v2855
      %v2857 = vrcp.pop %v2727
      %v2858 = vmul.f32 %v2727, %v2857
      %v2859 = vsub.f32 1.0, %v2858
      %v2860 = vmul.f32 %v2857, %v2859
      %v2861 = vadd.f32 %v2857, %v2860
      %vm2862 = vweird.f32 %v2727
      %vm2863 = vweird.f32 %v2857
      %vm2864 = vmor %vm2862, %vm2863
      %v2865 = vsel %vm2864, %v2857, %v2861
      %v2866 = vand.u32 2147483647, %v2727
      %vm2867 = vcmp.eq.f32.partialorder %v2866, 8.507059e+37
      %v2868 = vand.u32 %v2727, 2147483648
      %v2869 = vor.u32 1.1754944e-38, %v2868
      %v2870 = vsel %vm2867, %v2869, %v2865
      %v2871 = vmul.f32 1.0, %v2870
      %v2872 = vrcp.pop %v2728
      %v2873 = vmul.f32 %v2728, %v2872
      %v2874 = vsub.f32 1.0, %v2873
      %v2875 = vmul.f32 %v2872, %v2874
      %v2876 = vadd.f32 %v2872, %v2875
      %vm2877 = vweird.f32 %v2728
      %vm2878 = vweird.f32 %v2872
      %vm2879 = vmor %vm2877, %vm2878
      %v2880 = vsel %vm2879, %v2872, %v2876
      %v2881 = vand.u32 2147483647, %v2728
      %vm2882 = vcmp.eq.f32.partialorder %v2881, 8.507059e+37
      %v2883 = vand.u32 %v2728, 2147483648
      %v2884 = vor.u32 1.1754944e-38, %v2883
      %v2885 = vsel %vm2882, %v2884, %v2880
      %v2886 = vmul.f32 1.0, %v2885
      %v2887 = vrcp.pop %v2729
      %v2888 = vmul.f32 %v2729, %v2887
      %v2889 = vsub.f32 1.0, %v2888
      %v2890 = vmul.f32 %v2887, %v2889
      %v2891 = vadd.f32 %v2887, %v2890
      %vm2892 = vweird.f32 %v2729
      %vm2893 = vweird.f32 %v2887
      %vm2894 = vmor %vm2892, %vm2893
      %v2895 = vsel %vm2894, %v2887, %v2891
      %v2896 = vand.u32 2147483647, %v2729
      %vm2897 = vcmp.eq.f32.partialorder %v2896, 8.507059e+37
      %v2898 = vand.u32 %v2729, 2147483648
      %v2899 = vor.u32 1.1754944e-38, %v2898
      %v2900 = vsel %vm2897, %v2899, %v2895
      %v2901 = vmul.f32 1.0, %v2900
      %v2902 = vrcp.pop %v2730
      %v2903 = vmul.f32 %v2730, %v2902
      %v2904 = vsub.f32 1.0, %v2903
      %v2905 = vmul.f32 %v2902, %v2904
      %v2906 = vadd.f32 %v2902, %v2905
      %vm2907 = vweird.f32 %v2730
      %vm2908 = vweird.f32 %v2902
      %vm2909 = vmor %vm2907, %vm2908
      %v2910 = vsel %vm2909, %v2902, %v2906
      %v2911 = vand.u32 2147483647, %v2730
      %vm2912 = vcmp.eq.f32.partialorder %v2911, 8.507059e+37
      %v2913 = vand.u32 %v2730, 2147483648
      %v2914 = vor.u32 1.1754944e-38, %v2913
      %v2915 = vsel %vm2912, %v2914, %v2910
      %v2916 = vmul.f32 1.0, %v2915
      %v2917 = vrcp.pop %v2731
      %v2918 = vmul.f32 %v2731, %v2917
      %v2919 = vsub.f32 1.0, %v2918
      %v2920 = vmul.f32 %v2917, %v2919
      %v2921 = vadd.f32 %v2917, %v2920
      %vm2922 = vweird.f32 %v2731
      %vm2923 = vweird.f32 %v2917
      %vm2924 = vmor %vm2922, %vm2923
      %v2925 = vsel %vm2924, %v2917, %v2921
      %v2926 = vand.u32 2147483647, %v2731
      %vm2927 = vcmp.eq.f32.partialorder %v2926, 8.507059e+37
      %v2928 = vand.u32 %v2731, 2147483648
      %v2929 = vor.u32 1.1754944e-38, %v2928
      %v2930 = vsel %vm2927, %v2929, %v2925
      %v2931 = vmul.f32 1.0, %v2930
      %v2932 = vrcp.pop %v2732
      %v2933 = vmul.f32 %v2732, %v2932
      %v2934 = vsub.f32 1.0, %v2933
      %v2935 = vmul.f32 %v2932, %v2934
      %v2936 = vadd.f32 %v2932, %v2935
      %vm2937 = vweird.f32 %v2732
      %vm2938 = vweird.f32 %v2932
      %vm2939 = vmor %vm2937, %vm2938
      %v2940 = vsel %vm2939, %v2932, %v2936
      %v2941 = vand.u32 2147483647, %v2732
      %vm2942 = vcmp.eq.f32.partialorder %v2941, 8.507059e+37
      %v2943 = vand.u32 %v2732, 2147483648
      %v2944 = vor.u32 1.1754944e-38, %v2943
      %v2945 = vsel %vm2942, %v2944, %v2940
      %v2946 = vmul.f32 1.0, %v2945
      %v2947 = vrcp.pop %v2733
      %v2948 = vmul.f32 %v2733, %v2947
      %v2949 = vsub.f32 1.0, %v2948
      %v2950 = vmul.f32 %v2947, %v2949
      %v2951 = vadd.f32 %v2947, %v2950
      %vm2952 = vweird.f32 %v2733
      %vm2953 = vweird.f32 %v2947
      %vm2954 = vmor %vm2952, %vm2953
      %v2955 = vsel %vm2954, %v2947, %v2951
      %v2956 = vand.u32 2147483647, %v2733
      %vm2957 = vcmp.eq.f32.partialorder %v2956, 8.507059e+37
      %v2958 = vand.u32 %v2733, 2147483648
      %v2959 = vor.u32 1.1754944e-38, %v2958
      %v2960 = vsel %vm2957, %v2959, %v2955
      %v2961 = vmul.f32 1.0, %v2960
      %v2962 = vrcp.pop %v2734
      %v2963 = vmul.f32 %v2734, %v2962
      %v2964 = vsub.f32 1.0, %v2963
      %v2965 = vmul.f32 %v2962, %v2964
      %v2966 = vadd.f32 %v2962, %v2965
      %vm2967 = vweird.f32 %v2734
      %vm2968 = vweird.f32 %v2962
      %vm2969 = vmor %vm2967, %vm2968
      %v2970 = vsel %vm2969, %v2962, %v2966
      %v2971 = vand.u32 2147483647, %v2734
      %vm2972 = vcmp.eq.f32.partialorder %v2971, 8.507059e+37
      %v2973 = vand.u32 %v2734, 2147483648
      %v2974 = vor.u32 1.1754944e-38, %v2973
      %v2975 = vsel %vm2972, %v2974, %v2970
      %v2976 = vmul.f32 1.0, %v2975
      %v2977 = vrcp.pop %v2735
      %v2978 = vmul.f32 %v2735, %v2977
      %v2979 = vsub.f32 1.0, %v2978
      %v2980 = vmul.f32 %v2977, %v2979
      %v2981 = vadd.f32 %v2977, %v2980
      %vm2982 = vweird.f32 %v2735
      %vm2983 = vweird.f32 %v2977
      %vm2984 = vmor %vm2982, %vm2983
      %v2985 = vsel %vm2984, %v2977, %v2981
      %v2986 = vand.u32 2147483647, %v2735
      %vm2987 = vcmp.eq.f32.partialorder %v2986, 8.507059e+37
      %v2988 = vand.u32 %v2735, 2147483648
      %v2989 = vor.u32 1.1754944e-38, %v2988
      %v2990 = vsel %vm2987, %v2989, %v2985
      %v2991 = vmul.f32 1.0, %v2990
      %v2992 = vrcp.pop %v2736
      %v2993 = vmul.f32 %v2736, %v2992
      %v2994 = vsub.f32 1.0, %v2993
      %v2995 = vmul.f32 %v2992, %v2994
      %v2996 = vadd.f32 %v2992, %v2995
      %vm2997 = vweird.f32 %v2736
      %vm2998 = vweird.f32 %v2992
      %vm2999 = vmor %vm2997, %vm2998
      %v3000 = vsel %vm2999, %v2992, %v2996
      %v3001 = vand.u32 2147483647, %v2736
      %vm3002 = vcmp.eq.f32.partialorder %v3001, 8.507059e+37
      %v3003 = vand.u32 %v2736, 2147483648
      %v3004 = vor.u32 1.1754944e-38, %v3003
      %v3005 = vsel %vm3002, %v3004, %v3000
      %v3006 = vmul.f32 1.0, %v3005
      %v3007 = vrcp.pop %v2737
      %v3008 = vmul.f32 %v2737, %v3007
      %v3009 = vsub.f32 1.0, %v3008
      %v3010 = vmul.f32 %v3007, %v3009
      %v3011 = vadd.f32 %v3007, %v3010
      %vm3012 = vweird.f32 %v2737
      %vm3013 = vweird.f32 %v3007
      %vm3014 = vmor %vm3012, %vm3013
      %v3015 = vsel %vm3014, %v3007, %v3011
      %v3016 = vand.u32 2147483647, %v2737
      %vm3017 = vcmp.eq.f32.partialorder %v3016, 8.507059e+37
      %v3018 = vand.u32 %v2737, 2147483648
      %v3019 = vor.u32 1.1754944e-38, %v3018
      %v3020 = vsel %vm3017, %v3019, %v3015
      %v3021 = vmul.f32 1.0, %v3020
      %v3022 = vrcp.pop %v2738
      %v3023 = vmul.f32 %v2738, %v3022
      %v3024 = vsub.f32 1.0, %v3023
      %v3025 = vmul.f32 %v3022, %v3024
      %v3026 = vadd.f32 %v3022, %v3025
      %vm3027 = vweird.f32 %v2738
      %vm3028 = vweird.f32 %v3022
      %vm3029 = vmor %vm3027, %vm3028
      %v3030 = vsel %vm3029, %v3022, %v3026
      %v3031 = vand.u32 2147483647, %v2738
      %vm3032 = vcmp.eq.f32.partialorder %v3031, 8.507059e+37
      %v3033 = vand.u32 %v2738, 2147483648
      %v3034 = vor.u32 1.1754944e-38, %v3033
      %v3035 = vsel %vm3032, %v3034, %v3030
      %v3036 = vmul.f32 1.0, %v3035
      %v3037 = vrcp.pop %v2739
      %v3038 = vmul.f32 %v2739, %v3037
      %v3039 = vsub.f32 1.0, %v3038
      %v3040 = vmul.f32 %v3037, %v3039
      %v3041 = vadd.f32 %v3037, %v3040
      %vm3042 = vweird.f32 %v2739
      %vm3043 = vweird.f32 %v3037
      %vm3044 = vmor %vm3042, %vm3043
      %v3045 = vsel %vm3044, %v3037, %v3041
      %v3046 = vand.u32 2147483647, %v2739
      %vm3047 = vcmp.eq.f32.partialorder %v3046, 8.507059e+37
      %v3048 = vand.u32 %v2739, 2147483648
      %v3049 = vor.u32 1.1754944e-38, %v3048
      %v3050 = vsel %vm3047, %v3049, %v3045
      %v3051 = vmul.f32 1.0, %v3050
      %v3052 = vrcp.pop %v2740
      %v3053 = vmul.f32 %v2740, %v3052
      %v3054 = vsub.f32 1.0, %v3053
      %v3055 = vmul.f32 %v3052, %v3054
      %v3056 = vadd.f32 %v3052, %v3055
      %vm3057 = vweird.f32 %v2740
      %vm3058 = vweird.f32 %v3052
      %vm3059 = vmor %vm3057, %vm3058
      %v3060 = vsel %vm3059, %v3052, %v3056
      %v3061 = vand.u32 2147483647, %v2740
      %vm3062 = vcmp.eq.f32.partialorder %v3061, 8.507059e+37
      %v3063 = vand.u32 %v2740, 2147483648
      %v3064 = vor.u32 1.1754944e-38, %v3063
      %v3065 = vsel %vm3062, %v3064, %v3060
      %v3066 = vmul.f32 1.0, %v3065
      %v3067 = vrcp.pop %v2741
      %v3068 = vmul.f32 %v2741, %v3067
      %v3069 = vsub.f32 1.0, %v3068
      %v3070 = vmul.f32 %v3067, %v3069
      %v3071 = vadd.f32 %v3067, %v3070
      %vm3072 = vweird.f32 %v2741
      %vm3073 = vweird.f32 %v3067
      %vm3074 = vmor %vm3072, %vm3073
      %v3075 = vsel %vm3074, %v3067, %v3071
      %v3076 = vand.u32 2147483647, %v2741
      %vm3077 = vcmp.eq.f32.partialorder %v3076, 8.507059e+37
      %v3078 = vand.u32 %v2741, 2147483648
      %v3079 = vor.u32 1.1754944e-38, %v3078
      %v3080 = vsel %vm3077, %v3079, %v3075
      %v3081 = vmul.f32 1.0, %v3080
      %v3082 = vrcp.pop %v2742
      %v3083 = vmul.f32 %v2742, %v3082
      %v3084 = vsub.f32 1.0, %v3083
      %v3085 = vmul.f32 %v3082, %v3084
      %v3086 = vadd.f32 %v3082, %v3085
      %vm3087 = vweird.f32 %v2742
      %vm3088 = vweird.f32 %v3082
      %vm3089 = vmor %vm3087, %vm3088
      %v3090 = vsel %vm3089, %v3082, %v3086
      %v3091 = vand.u32 2147483647, %v2742
      %vm3092 = vcmp.eq.f32.partialorder %v3091, 8.507059e+37
      %v3093 = vand.u32 %v2742, 2147483648
      %v3094 = vor.u32 1.1754944e-38, %v3093
      %v3095 = vsel %vm3092, %v3094, %v3090
      %v3096 = vmul.f32 1.0, %v3095
      %v3097 = vrcp.pop %v2743
      %v3098 = vmul.f32 %v2743, %v3097
      %v3099 = vsub.f32 1.0, %v3098
      %v3100 = vmul.f32 %v3097, %v3099
      %v3101 = vadd.f32 %v3097, %v3100
      %vm3102 = vweird.f32 %v2743
      %vm3103 = vweird.f32 %v3097
      %vm3104 = vmor %vm3102, %vm3103
      %v3105 = vsel %vm3104, %v3097, %v3101
      %v3106 = vand.u32 2147483647, %v2743
      %vm3107 = vcmp.eq.f32.partialorder %v3106, 8.507059e+37
      %v3108 = vand.u32 %v2743, 2147483648
      %v3109 = vor.u32 1.1754944e-38, %v3108
      %v3110 = vsel %vm3107, %v3109, %v3105
      %v3111 = vmul.f32 1.0, %v3110
      %v3112 = vrcp.pop %v2744
      %v3113 = vmul.f32 %v2744, %v3112
      %v3114 = vsub.f32 1.0, %v3113
      %v3115 = vmul.f32 %v3112, %v3114
      %v3116 = vadd.f32 %v3112, %v3115
      %vm3117 = vweird.f32 %v2744
      %vm3118 = vweird.f32 %v3112
      %vm3119 = vmor %vm3117, %vm3118
      %v3120 = vsel %vm3119, %v3112, %v3116
      %v3121 = vand.u32 2147483647, %v2744
      %vm3122 = vcmp.eq.f32.partialorder %v3121, 8.507059e+37
      %v3123 = vand.u32 %v2744, 2147483648
      %v3124 = vor.u32 1.1754944e-38, %v3123
      %v3125 = vsel %vm3122, %v3124, %v3120
      %v3126 = vmul.f32 1.0, %v3125
      %v3127 = vrcp.pop %v2745
      %v3128 = vmul.f32 %v2745, %v3127
      %v3129 = vsub.f32 1.0, %v3128
      %v3130 = vmul.f32 %v3127, %v3129
      %v3131 = vadd.f32 %v3127, %v3130
      %vm3132 = vweird.f32 %v2745
      %vm3133 = vweird.f32 %v3127
      %vm3134 = vmor %vm3132, %vm3133
      %v3135 = vsel %vm3134, %v3127, %v3131
      %v3136 = vand.u32 2147483647, %v2745
      %vm3137 = vcmp.eq.f32.partialorder %v3136, 8.507059e+37
      %v3138 = vand.u32 %v2745, 2147483648
      %v3139 = vor.u32 1.1754944e-38, %v3138
      %v3140 = vsel %vm3137, %v3139, %v3135
      %v3141 = vmul.f32 1.0, %v3140
      %v3142 = vrcp.pop %v2746
      %v3143 = vmul.f32 %v2746, %v3142
      %v3144 = vsub.f32 1.0, %v3143
      %v3145 = vmul.f32 %v3142, %v3144
      %v3146 = vadd.f32 %v3142, %v3145
      %vm3147 = vweird.f32 %v2746
      %vm3148 = vweird.f32 %v3142
      %vm3149 = vmor %vm3147, %vm3148
      %v3150 = vsel %vm3149, %v3142, %v3146
      %v3151 = vand.u32 2147483647, %v2746
      %vm3152 = vcmp.eq.f32.partialorder %v3151, 8.507059e+37
      %v3153 = vand.u32 %v2746, 2147483648
      %v3154 = vor.u32 1.1754944e-38, %v3153
      %v3155 = vsel %vm3152, %v3154, %v3150
      %v3156 = vmul.f32 1.0, %v3155
      %v3157 = vrcp.pop %v2747
      %v3158 = vmul.f32 %v2747, %v3157
      %v3159 = vsub.f32 1.0, %v3158
      %v3160 = vmul.f32 %v3157, %v3159
      %v3161 = vadd.f32 %v3157, %v3160
      %vm3162 = vweird.f32 %v2747
      %vm3163 = vweird.f32 %v3157
      %vm3164 = vmor %vm3162, %vm3163
      %v3165 = vsel %vm3164, %v3157, %v3161
      %v3166 = vand.u32 2147483647, %v2747
      %vm3167 = vcmp.eq.f32.partialorder %v3166, 8.507059e+37
      %v3168 = vand.u32 %v2747, 2147483648
      %v3169 = vor.u32 1.1754944e-38, %v3168
      %v3170 = vsel %vm3167, %v3169, %v3165
      %v3171 = vmul.f32 1.0, %v3170
      %v3172 = vrcp.pop %v2748
      %v3173 = vmul.f32 %v2748, %v3172
      %v3174 = vsub.f32 1.0, %v3173
      %v3175 = vmul.f32 %v3172, %v3174
      %v3176 = vadd.f32 %v3172, %v3175
      %vm3177 = vweird.f32 %v2748
      %vm3178 = vweird.f32 %v3172
      %vm3179 = vmor %vm3177, %vm3178
      %v3180 = vsel %vm3179, %v3172, %v3176
      %v3181 = vand.u32 2147483647, %v2748
      %vm3182 = vcmp.eq.f32.partialorder %v3181, 8.507059e+37
      %v3183 = vand.u32 %v2748, 2147483648
      %v3184 = vor.u32 1.1754944e-38, %v3183
      %v3185 = vsel %vm3182, %v3184, %v3180
      %v3186 = vmul.f32 1.0, %v3185
      %v3187 = vrcp.pop %v2749
      %v3188 = vmul.f32 %v2749, %v3187
      %v3189 = vsub.f32 1.0, %v3188
      %v3190 = vmul.f32 %v3187, %v3189
      %v3191 = vadd.f32 %v3187, %v3190
      %vm3192 = vweird.f32 %v2749
      %vm3193 = vweird.f32 %v3187
      %vm3194 = vmor %vm3192, %vm3193
      %v3195 = vsel %vm3194, %v3187, %v3191
      %v3196 = vand.u32 2147483647, %v2749
      %vm3197 = vcmp.eq.f32.partialorder %v3196, 8.507059e+37
      %v3198 = vand.u32 %v2749, 2147483648
      %v3199 = vor.u32 1.1754944e-38, %v3198
      %v3200 = vsel %vm3197, %v3199, %v3195
      %v3201 = vmul.f32 1.0, %v3200
      %v3202 = vrcp.pop %v2750
      %v3203 = vmul.f32 %v2750, %v3202
      %v3204 = vsub.f32 1.0, %v3203
      %v3205 = vmul.f32 %v3202, %v3204
      %v3206 = vadd.f32 %v3202, %v3205
      %vm3207 = vweird.f32 %v2750
      %vm3208 = vweird.f32 %v3202
      %vm3209 = vmor %vm3207, %vm3208
      %v3210 = vsel %vm3209, %v3202, %v3206
      %v3211 = vand.u32 2147483647, %v2750
      %vm3212 = vcmp.eq.f32.partialorder %v3211, 8.507059e+37
      %v3213 = vand.u32 %v2750, 2147483648
      %v3214 = vor.u32 1.1754944e-38, %v3213
      %v3215 = vsel %vm3212, %v3214, %v3210
      %v3216 = vmul.f32 1.0, %v3215
      %v3217 = vrcp.pop %v2751
      %v3218 = vmul.f32 %v2751, %v3217
      %v3219 = vsub.f32 1.0, %v3218
      %v3220 = vmul.f32 %v3217, %v3219
      %v3221 = vadd.f32 %v3217, %v3220
      %vm3222 = vweird.f32 %v2751
      %vm3223 = vweird.f32 %v3217
      %vm3224 = vmor %vm3222, %vm3223
      %v3225 = vsel %vm3224, %v3217, %v3221
      %v3226 = vand.u32 2147483647, %v2751
      %vm3227 = vcmp.eq.f32.partialorder %v3226, 8.507059e+37
      %v3228 = vand.u32 %v2751, 2147483648
      %v3229 = vor.u32 1.1754944e-38, %v3228
      %v3230 = vsel %vm3227, %v3229, %v3225
      %v3231 = vmul.f32 1.0, %v3230
      %v3232 = vmul.f32 %v2592, %v2766
      %v3233 = vmul.f32 %v2593, %v2781
      %v3234 = vmul.f32 %v2594, %v2796
      %v3235 = vmul.f32 %v2595, %v2811
      %v3236 = vmul.f32 %v2596, %v2826
      %v3237 = vmul.f32 %v2597, %v2841
      %v3238 = vmul.f32 %v2598, %v2856
      %v3239 = vmul.f32 %v2599, %v2871
      %v3240 = vmul.f32 %v2600, %v2886
      %v3241 = vmul.f32 %v2601, %v2901
      %v3242 = vmul.f32 %v2602, %v2916
      %v3243 = vmul.f32 %v2603, %v2931
      %v3244 = vmul.f32 %v2604, %v2946
      %v3245 = vmul.f32 %v2605, %v2961
      %v3246 = vmul.f32 %v2606, %v2976
      %v3247 = vmul.f32 %v2607, %v2991
      %v3248 = vmul.f32 %v2608, %v3006
      %v3249 = vmul.f32 %v2609, %v3021
      %v3250 = vmul.f32 %v2610, %v3036
      %v3251 = vmul.f32 %v2611, %v3051
      %v3252 = vmul.f32 %v2612, %v3066
      %v3253 = vmul.f32 %v2613, %v3081
      %v3254 = vmul.f32 %v2614, %v3096
      %v3255 = vmul.f32 %v2615, %v3111
      %v3256 = vmul.f32 %v2616, %v3126
      %v3257 = vmul.f32 %v2617, %v3141
      %v3258 = vmul.f32 %v2618, %v3156
      %v3259 = vmul.f32 %v2619, %v3171
      %v3260 = vmul.f32 %v2620, %v3186
      %v3261 = vmul.f32 %v2621, %v3201
      %v3262 = vmul.f32 %v2622, %v3216
      %v3263 = vmul.f32 %v2623, %v3231
      %v3264 = vld [vmem:[%s533] sm:$0xf]
      %v3265 = vpack.c.bf16 %v3233, %v3232
      %v3266 = vpack.c.bf16 %v3235, %v3234
      %v3267 = vpack.c.bf16 %v3237, %v3236
      %v3268 = vpack.c.bf16 %v3239, %v3238
      %v3269 = vpack.c.bf16 %v3241, %v3240
      %v3270 = vpack.c.bf16 %v3243, %v3242
      %v3271 = vpack.c.bf16 %v3245, %v3244
      %v3272 = vpack.c.bf16 %v3247, %v3246
      %v3273 = vpack.c.bf16 %v3249, %v3248
      %v3274 = vpack.c.bf16 %v3251, %v3250
      %v3275 = vpack.c.bf16 %v3253, %v3252
      %v3276 = vpack.c.bf16 %v3255, %v3254
      %v3277 = vpack.c.bf16 %v3257, %v3256
      %v3278 = vpack.c.bf16 %v3259, %v3258
      %v3279 = vpack.c.bf16 %v3261, %v3260
      %v3280 = vpack.c.bf16 %v3263, %v3262
      %v3281 = vld [vmem:[%s9] sm:$0xf]
      %v3282 = vld [vmem:[%s9 + $0x4] sm:$0xf]
      %v3283 = vld [vmem:[%s9 + $0x8] sm:$0xf]
      %v3284 = vld [vmem:[%s9 + $0xc] sm:$0xf]
      %v3289 = vunpack.c.l.b16 %v3281
      %v3290 = vunpack.c.l.b16 %v3282
      %v3291 = vunpack.c.l.b16 %v3283
      %v3292 = vunpack.c.l.b16 %v3284
      %v3293 = vpack.c.b16 %v3290, %v3289
      %v3294 = vpack.c.b16 %v3292, %v3291
      %v3298 = vsel %vm546, %v3265, 0
      %v3301 = vsel %vm546, %v3266, 0
      %v3304 = vsel %vm546, %v3267, 0
      %v3307 = vsel %vm546, %v3268, 0
      %v3310 = vsel %vm546, %v3269, 0
      %v3313 = vsel %vm546, %v3270, 0
      %v3316 = vsel %vm546, %v3271, 0
      %v3319 = vsel %vm546, %v3272, 0
      %v3322 = vsel %vm546, %v3273, 0
      %v3325 = vsel %vm546, %v3274, 0
      %v3328 = vsel %vm546, %v3275, 0
      %v3331 = vsel %vm546, %v3276, 0
      %v3334 = vsel %vm546, %v3277, 0
      %v3337 = vsel %vm546, %v3278, 0
      %v3340 = vsel %vm546, %v3279, 0
      %v3343 = vsel %vm546, %v3280, 0
      %3345 = vmatpush.bf16.msra.mxu0 0
      %3346 = vmatpush.bf16.msra.mxu0 0
      %3347 = vmatpush.bf16.msra.mxu0 0
      %3348 = vmatpush.bf16.msra.mxu0 0
      %3349 = vmatpush.bf16.msra.mxu0 0
      %3350 = vmatpush.bf16.msra.mxu0 0
      %3351 = vmatpush.bf16.msra.mxu0 %v3294
      %3352 = vmatpush.bf16.msra.mxu0 %v3293
      %3353 = vmatmul.bf16.gmra.mxu0 %v3298
      %v3354 = vpop.f32.mrf.mxu0
      %v3355 = vadd.f32 0.0, %v3354
      %v3356 = vpop.f32.mrf.mxu0
      %v3357 = vadd.f32 0.0, %v3356
      %3358 = vmatmul.bf16.gmra.mxu0 %v3301
      %v3359 = vpop.f32.mrf.mxu0
      %v3360 = vadd.f32 0.0, %v3359
      %v3361 = vpop.f32.mrf.mxu0
      %v3362 = vadd.f32 0.0, %v3361
      %3363 = vmatmul.bf16.gmra.mxu0 %v3304
      %v3364 = vpop.f32.mrf.mxu0
      %v3365 = vadd.f32 0.0, %v3364
      %v3366 = vpop.f32.mrf.mxu0
      %v3367 = vadd.f32 0.0, %v3366
      %3368 = vmatmul.bf16.gmra.mxu0 %v3307
      %v3369 = vpop.f32.mrf.mxu0
      %v3370 = vadd.f32 0.0, %v3369
      %v3371 = vpop.f32.mrf.mxu0
      %v3372 = vadd.f32 0.0, %v3371
      %3373 = vmatmul.bf16.gmra.mxu0 %v3310
      %v3374 = vpop.f32.mrf.mxu0
      %v3375 = vadd.f32 0.0, %v3374
      %v3376 = vpop.f32.mrf.mxu0
      %v3377 = vadd.f32 0.0, %v3376
      %3378 = vmatmul.bf16.gmra.mxu0 %v3313
      %v3379 = vpop.f32.mrf.mxu0
      %v3380 = vadd.f32 0.0, %v3379
      %v3381 = vpop.f32.mrf.mxu0
      %v3382 = vadd.f32 0.0, %v3381
      %3383 = vmatmul.bf16.gmra.mxu0 %v3316
      %v3384 = vpop.f32.mrf.mxu0
      %v3385 = vadd.f32 0.0, %v3384
      %v3386 = vpop.f32.mrf.mxu0
      %v3387 = vadd.f32 0.0, %v3386
      %3388 = vmatmul.bf16.gmra.mxu0 %v3319
      %v3389 = vpop.f32.mrf.mxu0
      %v3390 = vadd.f32 0.0, %v3389
      %v3391 = vpop.f32.mrf.mxu0
      %v3392 = vadd.f32 0.0, %v3391
      %3393 = vmatmul.bf16.gmra.mxu0 %v3322
      %v3394 = vpop.f32.mrf.mxu0
      %v3395 = vadd.f32 0.0, %v3394
      %v3396 = vpop.f32.mrf.mxu0
      %v3397 = vadd.f32 0.0, %v3396
      %3398 = vmatmul.bf16.gmra.mxu0 %v3325
      %v3399 = vpop.f32.mrf.mxu0
      %v3400 = vadd.f32 0.0, %v3399
      %v3401 = vpop.f32.mrf.mxu0
      %v3402 = vadd.f32 0.0, %v3401
      %3403 = vmatmul.bf16.gmra.mxu0 %v3328
      %v3404 = vpop.f32.mrf.mxu0
      %v3405 = vadd.f32 0.0, %v3404
      %v3406 = vpop.f32.mrf.mxu0
      %v3407 = vadd.f32 0.0, %v3406
      %3408 = vmatmul.bf16.gmra.mxu0 %v3331
      %v3409 = vpop.f32.mrf.mxu0
      %v3410 = vadd.f32 0.0, %v3409
      %v3411 = vpop.f32.mrf.mxu0
      %v3412 = vadd.f32 0.0, %v3411
      %3413 = vmatmul.bf16.gmra.mxu0 %v3334
      %v3414 = vpop.f32.mrf.mxu0
      %v3415 = vadd.f32 0.0, %v3414
      %v3416 = vpop.f32.mrf.mxu0
      %v3417 = vadd.f32 0.0, %v3416
      %3418 = vmatmul.bf16.gmra.mxu0 %v3337
      %v3419 = vpop.f32.mrf.mxu0
      %v3420 = vadd.f32 0.0, %v3419
      %v3421 = vpop.f32.mrf.mxu0
      %v3422 = vadd.f32 0.0, %v3421
      %3423 = vmatmul.bf16.gmra.mxu0 %v3340
      %v3424 = vpop.f32.mrf.mxu0
      %v3425 = vadd.f32 0.0, %v3424
      %v3426 = vpop.f32.mrf.mxu0
      %v3427 = vadd.f32 0.0, %v3426
      %3428 = vmatmul.bf16.gmra.mxu0 %v3343
      %v3429 = vpop.f32.mrf.mxu0
      %v3430 = vadd.f32 0.0, %v3429
      %v3431 = vpop.f32.mrf.mxu0
      %v3432 = vadd.f32 0.0, %v3431
      %3433 = vdwg.mxu0
      %v3434 = vld [vmem:[%s10] sm:$0xf]
      %v3435 = vld [vmem:[%s10 + $0x4] sm:$0xf]
      %v3436 = vld [vmem:[%s10 + $0x8] sm:$0xf]
      %v3437 = vld [vmem:[%s10 + $0xc] sm:$0xf]
      %v3442 = vunpack.c.l.b16 %v3434
      %v3443 = vunpack.c.l.b16 %v3435
      %v3444 = vunpack.c.l.b16 %v3436
      %v3445 = vunpack.c.l.b16 %v3437
      %v3446 = vpack.c.b16 %v3443, %v3442
      %v3447 = vpack.c.b16 %v3445, %v3444
      %v3451 = vsel %vm546, %v3264, 0
      %3453 = vmatpush.bf16.msra.mxu0 0
      %3454 = vmatpush.bf16.msra.mxu0 0
      %3455 = vmatpush.bf16.msra.mxu0 0
      %3456 = vmatpush.bf16.msra.mxu0 0
      %3457 = vmatpush.bf16.msra.mxu0 0
      %3458 = vmatpush.bf16.msra.mxu0 0
      %3459 = vmatpush.bf16.msra.mxu0 %v3447
      %3460 = vmatpush.bf16.msra.mxu0 %v3446
      %3461 = vmatmul.bf16.gmra.mxu0 %v3451
      %v3462 = vpop.f32.mrf.mxu0
      %v3463 = vadd.f32 0.0, %v3462
      %v3464 = vpop.f32.mrf.mxu0
      %3465 = vdwg.mxu0
      %v3466 = vld [vmem:[%s11] sm:$0xf]
      %v3467 = vld [vmem:[%s11 + $0x4] sm:$0xf]
      %v3468 = vld [vmem:[%s11 + $0x8] sm:$0xf]
      %v3469 = vld [vmem:[%s11 + $0xc] sm:$0xf]
      %v3474 = vunpack.c.l.b16 %v3466
      %v3475 = vunpack.c.l.b16 %v3467
      %v3476 = vunpack.c.l.b16 %v3468
      %v3477 = vunpack.c.l.b16 %v3469
      %v3478 = vpack.c.b16 %v3475, %v3474
      %v3479 = vpack.c.b16 %v3477, %v3476
      %3482 = vmatpush.bf16.msra.mxu0 0
      %3483 = vmatpush.bf16.msra.mxu0 0
      %3484 = vmatpush.bf16.msra.mxu0 0
      %3485 = vmatpush.bf16.msra.mxu0 0
      %3486 = vmatpush.bf16.msra.mxu0 0
      %3487 = vmatpush.bf16.msra.mxu0 0
      %3488 = vmatpush.bf16.msra.mxu0 %v3479
      %3489 = vmatpush.bf16.msra.mxu0 %v3478
      %3490 = vmatmul.bf16.gmra.mxu0 %v3451
      %v3491 = vpop.f32.mrf.mxu0
      %v3492 = vadd.f32 0.0, %v3491
      %v3493 = vpop.f32.mrf.mxu0
      %3494 = vdwg.mxu0
      %v3495 = vpack.c.bf16 %v3357, %v3355
      %v3496 = vpack.c.bf16 %v3362, %v3360
      %v3497 = vpack.c.bf16 %v3367, %v3365
      %v3498 = vpack.c.bf16 %v3372, %v3370
      %v3499 = vpack.c.bf16 %v3377, %v3375
      %v3500 = vpack.c.bf16 %v3382, %v3380
      %v3501 = vpack.c.bf16 %v3387, %v3385
      %v3502 = vpack.c.bf16 %v3392, %v3390
      %v3503 = vpack.c.bf16 %v3397, %v3395
      %v3504 = vpack.c.bf16 %v3402, %v3400
      %v3505 = vpack.c.bf16 %v3407, %v3405
      %v3506 = vpack.c.bf16 %v3412, %v3410
      %v3507 = vpack.c.bf16 %v3417, %v3415
      %v3508 = vpack.c.bf16 %v3422, %v3420
      %v3509 = vpack.c.bf16 %v3427, %v3425
      %v3510 = vpack.c.bf16 %v3432, %v3430
      %v3511 = vpack.c.bf16 %v3463, %v3463
      %v3513 = vsel %vm546, %v3495, 0
      %v3516 = vsel %vm546, %v3496, 0
      %v3519 = vsel %vm546, %v3497, 0
      %v3522 = vsel %vm546, %v3498, 0
      %v3525 = vsel %vm546, %v3499, 0
      %v3528 = vsel %vm546, %v3500, 0
      %v3531 = vsel %vm546, %v3501, 0
      %v3534 = vsel %vm546, %v3502, 0
      %v3537 = vsel %vm546, %v3503, 0
      %v3540 = vsel %vm546, %v3504, 0
      %v3543 = vsel %vm546, %v3505, 0
      %v3546 = vsel %vm546, %v3506, 0
      %v3549 = vsel %vm546, %v3507, 0
      %v3552 = vsel %vm546, %v3508, 0
      %v3555 = vsel %vm546, %v3509, 0
      %v3558 = vsel %vm546, %v3510, 0
      %v3561 = vsel %vm546, %v3511, 0
      %3563 = vmatpush.bf16.xpose.msra.mxu0 0
      %3564 = vmatpush.bf16.xpose.msra.mxu0 0
      %3565 = vmatpush.bf16.xpose.msra.mxu0 0
      %3566 = vmatpush.bf16.xpose.msra.mxu0 0
      %3567 = vmatpush.bf16.xpose.msra.mxu0 0
      %3568 = vmatpush.bf16.xpose.msra.mxu0 0
      %3569 = vmatpush.bf16.xpose.msra.mxu0 0
      %3570 = vmatpush.bf16.xpose.msra.mxu0 %v3561
      %3571 = vmatmul.bf16.gmra.mxu0 %v3513
      %v3572 = vpop.f32.mrf.mxu0
      %v3573 = vadd.f32 0.0, %v3572
      %v3574 = vpop.f32.mrf.mxu0
      %v3575 = vadd.f32 0.0, %v3574
      %3576 = vmatmul.bf16.gmra.mxu0 %v3516
      %v3577 = vpop.f32.mrf.mxu0
      %v3578 = vadd.f32 0.0, %v3577
      %v3579 = vpop.f32.mrf.mxu0
      %v3580 = vadd.f32 0.0, %v3579
      %3581 = vmatmul.bf16.gmra.mxu0 %v3519
      %v3582 = vpop.f32.mrf.mxu0
      %v3583 = vadd.f32 0.0, %v3582
      %v3584 = vpop.f32.mrf.mxu0
      %v3585 = vadd.f32 0.0, %v3584
      %3586 = vmatmul.bf16.gmra.mxu0 %v3522
      %v3587 = vpop.f32.mrf.mxu0
      %v3588 = vadd.f32 0.0, %v3587
      %v3589 = vpop.f32.mrf.mxu0
      %v3590 = vadd.f32 0.0, %v3589
      %3591 = vmatmul.bf16.gmra.mxu0 %v3525
      %v3592 = vpop.f32.mrf.mxu0
      %v3593 = vadd.f32 0.0, %v3592
      %v3594 = vpop.f32.mrf.mxu0
      %v3595 = vadd.f32 0.0, %v3594
      %3596 = vmatmul.bf16.gmra.mxu0 %v3528
      %v3597 = vpop.f32.mrf.mxu0
      %v3598 = vadd.f32 0.0, %v3597
      %v3599 = vpop.f32.mrf.mxu0
      %v3600 = vadd.f32 0.0, %v3599
      %3601 = vmatmul.bf16.gmra.mxu0 %v3531
      %v3602 = vpop.f32.mrf.mxu0
      %v3603 = vadd.f32 0.0, %v3602
      %v3604 = vpop.f32.mrf.mxu0
      %v3605 = vadd.f32 0.0, %v3604
      %3606 = vmatmul.bf16.gmra.mxu0 %v3534
      %v3607 = vpop.f32.mrf.mxu0
      %v3608 = vadd.f32 0.0, %v3607
      %v3609 = vpop.f32.mrf.mxu0
      %v3610 = vadd.f32 0.0, %v3609
      %3611 = vmatmul.bf16.gmra.mxu0 %v3537
      %v3612 = vpop.f32.mrf.mxu0
      %v3613 = vadd.f32 0.0, %v3612
      %v3614 = vpop.f32.mrf.mxu0
      %v3615 = vadd.f32 0.0, %v3614
      %3616 = vmatmul.bf16.gmra.mxu0 %v3540
      %v3617 = vpop.f32.mrf.mxu0
      %v3618 = vadd.f32 0.0, %v3617
      %v3619 = vpop.f32.mrf.mxu0
      %v3620 = vadd.f32 0.0, %v3619
      %3621 = vmatmul.bf16.gmra.mxu0 %v3543
      %v3622 = vpop.f32.mrf.mxu0
      %v3623 = vadd.f32 0.0, %v3622
      %v3624 = vpop.f32.mrf.mxu0
      %v3625 = vadd.f32 0.0, %v3624
      %3626 = vmatmul.bf16.gmra.mxu0 %v3546
      %v3627 = vpop.f32.mrf.mxu0
      %v3628 = vadd.f32 0.0, %v3627
      %v3629 = vpop.f32.mrf.mxu0
      %v3630 = vadd.f32 0.0, %v3629
      %3631 = vmatmul.bf16.gmra.mxu0 %v3549
      %v3632 = vpop.f32.mrf.mxu0
      %v3633 = vadd.f32 0.0, %v3632
      %v3634 = vpop.f32.mrf.mxu0
      %v3635 = vadd.f32 0.0, %v3634
      %3636 = vmatmul.bf16.gmra.mxu0 %v3552
      %v3637 = vpop.f32.mrf.mxu0
      %v3638 = vadd.f32 0.0, %v3637
      %v3639 = vpop.f32.mrf.mxu0
      %v3640 = vadd.f32 0.0, %v3639
      %3641 = vmatmul.bf16.gmra.mxu0 %v3555
      %v3642 = vpop.f32.mrf.mxu0
      %v3643 = vadd.f32 0.0, %v3642
      %v3644 = vpop.f32.mrf.mxu0
      %v3645 = vadd.f32 0.0, %v3644
      %3646 = vmatmul.bf16.gmra.mxu0 %v3558
      %v3647 = vpop.f32.mrf.mxu0
      %v3648 = vadd.f32 0.0, %v3647
      %v3649 = vpop.f32.mrf.mxu0
      %v3650 = vadd.f32 0.0, %v3649
      %3651 = vdwg.mxu0
      %v3652 = vmul.f32 %v3573, 0.17677669
      %v3653 = vmul.f32 %v3575, 0.17677669
      %v3654 = vmul.f32 %v3578, 0.17677669
      %v3655 = vmul.f32 %v3580, 0.17677669
      %v3656 = vmul.f32 %v3583, 0.17677669
      %v3657 = vmul.f32 %v3585, 0.17677669
      %v3658 = vmul.f32 %v3588, 0.17677669
      %v3659 = vmul.f32 %v3590, 0.17677669
      %v3660 = vmul.f32 %v3593, 0.17677669
      %v3661 = vmul.f32 %v3595, 0.17677669
      %v3662 = vmul.f32 %v3598, 0.17677669
      %v3663 = vmul.f32 %v3600, 0.17677669
      %v3664 = vmul.f32 %v3603, 0.17677669
      %v3665 = vmul.f32 %v3605, 0.17677669
      %v3666 = vmul.f32 %v3608, 0.17677669
      %v3667 = vmul.f32 %v3610, 0.17677669
      %v3668 = vmul.f32 %v3613, 0.17677669
      %v3669 = vmul.f32 %v3615, 0.17677669
      %v3670 = vmul.f32 %v3618, 0.17677669
      %v3671 = vmul.f32 %v3620, 0.17677669
      %v3672 = vmul.f32 %v3623, 0.17677669
      %v3673 = vmul.f32 %v3625, 0.17677669
      %v3674 = vmul.f32 %v3628, 0.17677669
      %v3675 = vmul.f32 %v3630, 0.17677669
      %v3676 = vmul.f32 %v3633, 0.17677669
      %v3677 = vmul.f32 %v3635, 0.17677669
      %v3678 = vmul.f32 %v3638, 0.17677669
      %v3679 = vmul.f32 %v3640, 0.17677669
      %v3680 = vmul.f32 %v3643, 0.17677669
      %v3681 = vmul.f32 %v3645, 0.17677669
      %v3682 = vmul.f32 %v3648, 0.17677669
      %v3683 = vmul.f32 %v3650, 0.17677669
      %vm3684 = vcmask 64512
      %v3685 = vsel %vm3684, %v3652, -inf
      %3686 = vmax.xlane.f32.xlu0 %v3685
      %v3687 = vpop.xlane.xlu0 %3686
      %v3688 = vsel %vm3684, %v3653, -inf
      %3689 = vmax.xlane.f32.xlu0 %v3688
      %v3690 = vpop.xlane.xlu0 %3689
      %v3691 = vsel %vm3684, %v3654, -inf
      %3692 = vmax.xlane.f32.xlu0 %v3691
      %v3693 = vpop.xlane.xlu0 %3692
      %v3694 = vsel %vm3684, %v3655, -inf
      %3695 = vmax.xlane.f32.xlu0 %v3694
      %v3696 = vpop.xlane.xlu0 %3695
      %v3697 = vsel %vm3684, %v3656, -inf
      %3698 = vmax.xlane.f32.xlu0 %v3697
      %v3699 = vpop.xlane.xlu0 %3698
      %v3700 = vsel %vm3684, %v3657, -inf
      %3701 = vmax.xlane.f32.xlu0 %v3700
      %v3702 = vpop.xlane.xlu0 %3701
      %v3703 = vsel %vm3684, %v3658, -inf
      %3704 = vmax.xlane.f32.xlu0 %v3703
      %v3705 = vpop.xlane.xlu0 %3704
      %v3706 = vsel %vm3684, %v3659, -inf
      %3707 = vmax.xlane.f32.xlu0 %v3706
      %v3708 = vpop.xlane.xlu0 %3707
      %v3709 = vsel %vm3684, %v3660, -inf
      %3710 = vmax.xlane.f32.xlu0 %v3709
      %v3711 = vpop.xlane.xlu0 %3710
      %v3712 = vsel %vm3684, %v3661, -inf
      %3713 = vmax.xlane.f32.xlu0 %v3712
      %v3714 = vpop.xlane.xlu0 %3713
      %v3715 = vsel %vm3684, %v3662, -inf
      %3716 = vmax.xlane.f32.xlu0 %v3715
      %v3717 = vpop.xlane.xlu0 %3716
      %v3718 = vsel %vm3684, %v3663, -inf
      %3719 = vmax.xlane.f32.xlu0 %v3718
      %v3720 = vpop.xlane.xlu0 %3719
      %v3721 = vsel %vm3684, %v3664, -inf
      %3722 = vmax.xlane.f32.xlu0 %v3721
      %v3723 = vpop.xlane.xlu0 %3722
      %v3724 = vsel %vm3684, %v3665, -inf
      %3725 = vmax.xlane.f32.xlu0 %v3724
      %v3726 = vpop.xlane.xlu0 %3725
      %v3727 = vsel %vm3684, %v3666, -inf
      %3728 = vmax.xlane.f32.xlu0 %v3727
      %v3729 = vpop.xlane.xlu0 %3728
      %v3730 = vsel %vm3684, %v3667, -inf
      %3731 = vmax.xlane.f32.xlu0 %v3730
      %v3732 = vpop.xlane.xlu0 %3731
      %v3733 = vsel %vm3684, %v3668, -inf
      %3734 = vmax.xlane.f32.xlu0 %v3733
      %v3735 = vpop.xlane.xlu0 %3734
      %v3736 = vsel %vm3684, %v3669, -inf
      %3737 = vmax.xlane.f32.xlu0 %v3736
      %v3738 = vpop.xlane.xlu0 %3737
      %v3739 = vsel %vm3684, %v3670, -inf
      %3740 = vmax.xlane.f32.xlu0 %v3739
      %v3741 = vpop.xlane.xlu0 %3740
      %v3742 = vsel %vm3684, %v3671, -inf
      %3743 = vmax.xlane.f32.xlu0 %v3742
      %v3744 = vpop.xlane.xlu0 %3743
      %v3745 = vsel %vm3684, %v3672, -inf
      %3746 = vmax.xlane.f32.xlu0 %v3745
      %v3747 = vpop.xlane.xlu0 %3746
      %v3748 = vsel %vm3684, %v3673, -inf
      %3749 = vmax.xlane.f32.xlu0 %v3748
      %v3750 = vpop.xlane.xlu0 %3749
      %v3751 = vsel %vm3684, %v3674, -inf
      %3752 = vmax.xlane.f32.xlu0 %v3751
      %v3753 = vpop.xlane.xlu0 %3752
      %v3754 = vsel %vm3684, %v3675, -inf
      %3755 = vmax.xlane.f32.xlu0 %v3754
      %v3756 = vpop.xlane.xlu0 %3755
      %v3757 = vsel %vm3684, %v3676, -inf
      %3758 = vmax.xlane.f32.xlu0 %v3757
      %v3759 = vpop.xlane.xlu0 %3758
      %v3760 = vsel %vm3684, %v3677, -inf
      %3761 = vmax.xlane.f32.xlu0 %v3760
      %v3762 = vpop.xlane.xlu0 %3761
      %v3763 = vsel %vm3684, %v3678, -inf
      %3764 = vmax.xlane.f32.xlu0 %v3763
      %v3765 = vpop.xlane.xlu0 %3764
      %v3766 = vsel %vm3684, %v3679, -inf
      %3767 = vmax.xlane.f32.xlu0 %v3766
      %v3768 = vpop.xlane.xlu0 %3767
      %v3769 = vsel %vm3684, %v3680, -inf
      %3770 = vmax.xlane.f32.xlu0 %v3769
      %v3771 = vpop.xlane.xlu0 %3770
      %v3772 = vsel %vm3684, %v3681, -inf
      %3773 = vmax.xlane.f32.xlu0 %v3772
      %v3774 = vpop.xlane.xlu0 %3773
      %v3775 = vsel %vm3684, %v3682, -inf
      %3776 = vmax.xlane.f32.xlu0 %v3775
      %v3777 = vpop.xlane.xlu0 %3776
      %v3778 = vsel %vm3684, %v3683, -inf
      %3779 = vmax.xlane.f32.xlu0 %v3778
      %v3780 = vpop.xlane.xlu0 %3779
      %v3781 = vsub.f32 %v3652, %v3687
      %v3782 = vsub.f32 %v3653, %v3690
      %v3783 = vsub.f32 %v3654, %v3693
      %v3784 = vsub.f32 %v3655, %v3696
      %v3785 = vsub.f32 %v3656, %v3699
      %v3786 = vsub.f32 %v3657, %v3702
      %v3787 = vsub.f32 %v3658, %v3705
      %v3788 = vsub.f32 %v3659, %v3708
      %v3789 = vsub.f32 %v3660, %v3711
      %v3790 = vsub.f32 %v3661, %v3714
      %v3791 = vsub.f32 %v3662, %v3717
      %v3792 = vsub.f32 %v3663, %v3720
      %v3793 = vsub.f32 %v3664, %v3723
      %v3794 = vsub.f32 %v3665, %v3726
      %v3795 = vsub.f32 %v3666, %v3729
      %v3796 = vsub.f32 %v3667, %v3732
      %v3797 = vsub.f32 %v3668, %v3735
      %v3798 = vsub.f32 %v3669, %v3738
      %v3799 = vsub.f32 %v3670, %v3741
      %v3800 = vsub.f32 %v3671, %v3744
      %v3801 = vsub.f32 %v3672, %v3747
      %v3802 = vsub.f32 %v3673, %v3750
      %v3803 = vsub.f32 %v3674, %v3753
      %v3804 = vsub.f32 %v3675, %v3756
      %v3805 = vsub.f32 %v3676, %v3759
      %v3806 = vsub.f32 %v3677, %v3762
      %v3807 = vsub.f32 %v3678, %v3765
      %v3808 = vsub.f32 %v3679, %v3768
      %v3809 = vsub.f32 %v3680, %v3771
      %v3810 = vsub.f32 %v3681, %v3774
      %v3811 = vsub.f32 %v3682, %v3777
      %v3812 = vsub.f32 %v3683, %v3780
      %v3813 = vmul.f32 %v3781, 1.442695
      %v3814 = vpow.pop %v3813
      %v3815 = vmul.f32 %v3782, 1.442695
      %v3816 = vpow.pop %v3815
      %v3817 = vmul.f32 %v3783, 1.442695
      %v3818 = vpow.pop %v3817
      %v3819 = vmul.f32 %v3784, 1.442695
      %v3820 = vpow.pop %v3819
      %v3821 = vmul.f32 %v3785, 1.442695
      %v3822 = vpow.pop %v3821
      %v3823 = vmul.f32 %v3786, 1.442695
      %v3824 = vpow.pop %v3823
      %v3825 = vmul.f32 %v3787, 1.442695
      %v3826 = vpow.pop %v3825
      %v3827 = vmul.f32 %v3788, 1.442695
      %v3828 = vpow.pop %v3827
      %v3829 = vmul.f32 %v3789, 1.442695
      %v3830 = vpow.pop %v3829
      %v3831 = vmul.f32 %v3790, 1.442695
      %v3832 = vpow.pop %v3831
      %v3833 = vmul.f32 %v3791, 1.442695
      %v3834 = vpow.pop %v3833
      %v3835 = vmul.f32 %v3792, 1.442695
      %v3836 = vpow.pop %v3835
      %v3837 = vmul.f32 %v3793, 1.442695
      %v3838 = vpow.pop %v3837
      %v3839 = vmul.f32 %v3794, 1.442695
      %v3840 = vpow.pop %v3839
      %v3841 = vmul.f32 %v3795, 1.442695
      %v3842 = vpow.pop %v3841
      %v3843 = vmul.f32 %v3796, 1.442695
      %v3844 = vpow.pop %v3843
      %v3845 = vmul.f32 %v3797, 1.442695
      %v3846 = vpow.pop %v3845
      %v3847 = vmul.f32 %v3798, 1.442695
      %v3848 = vpow.pop %v3847
      %v3849 = vmul.f32 %v3799, 1.442695
      %v3850 = vpow.pop %v3849
      %v3851 = vmul.f32 %v3800, 1.442695
      %v3852 = vpow.pop %v3851
      %v3853 = vmul.f32 %v3801, 1.442695
      %v3854 = vpow.pop %v3853
      %v3855 = vmul.f32 %v3802, 1.442695
      %v3856 = vpow.pop %v3855
      %v3857 = vmul.f32 %v3803, 1.442695
      %v3858 = vpow.pop %v3857
      %v3859 = vmul.f32 %v3804, 1.442695
      %v3860 = vpow.pop %v3859
      %v3861 = vmul.f32 %v3805, 1.442695
      %v3862 = vpow.pop %v3861
      %v3863 = vmul.f32 %v3806, 1.442695
      %v3864 = vpow.pop %v3863
      %v3865 = vmul.f32 %v3807, 1.442695
      %v3866 = vpow.pop %v3865
      %v3867 = vmul.f32 %v3808, 1.442695
      %v3868 = vpow.pop %v3867
      %v3869 = vmul.f32 %v3809, 1.442695
      %v3870 = vpow.pop %v3869
      %v3871 = vmul.f32 %v3810, 1.442695
      %v3872 = vpow.pop %v3871
      %v3873 = vmul.f32 %v3811, 1.442695
      %v3874 = vpow.pop %v3873
      %v3875 = vmul.f32 %v3812, 1.442695
      %v3876 = vpow.pop %v3875
      %v3877 = vsel %vm3684, %v3814, 0.0
      %3878 = vadd.xlane.f32.xlu0 %v3877
      %v3879 = vpop.xlane.xlu0 %3878
      %v3880 = vsel %vm3684, %v3816, 0.0
      %3881 = vadd.xlane.f32.xlu0 %v3880
      %v3882 = vpop.xlane.xlu0 %3881
      %v3883 = vsel %vm3684, %v3818, 0.0
      %3884 = vadd.xlane.f32.xlu0 %v3883
      %v3885 = vpop.xlane.xlu0 %3884
      %v3886 = vsel %vm3684, %v3820, 0.0
      %3887 = vadd.xlane.f32.xlu0 %v3886
      %v3888 = vpop.xlane.xlu0 %3887
      %v3889 = vsel %vm3684, %v3822, 0.0
      %3890 = vadd.xlane.f32.xlu0 %v3889
      %v3891 = vpop.xlane.xlu0 %3890
      %v3892 = vsel %vm3684, %v3824, 0.0
      %3893 = vadd.xlane.f32.xlu0 %v3892
      %v3894 = vpop.xlane.xlu0 %3893
      %v3895 = vsel %vm3684, %v3826, 0.0
      %3896 = vadd.xlane.f32.xlu0 %v3895
      %v3897 = vpop.xlane.xlu0 %3896
      %v3898 = vsel %vm3684, %v3828, 0.0
      %3899 = vadd.xlane.f32.xlu0 %v3898
      %v3900 = vpop.xlane.xlu0 %3899
      %v3901 = vsel %vm3684, %v3830, 0.0
      %3902 = vadd.xlane.f32.xlu0 %v3901
      %v3903 = vpop.xlane.xlu0 %3902
      %v3904 = vsel %vm3684, %v3832, 0.0
      %3905 = vadd.xlane.f32.xlu0 %v3904
      %v3906 = vpop.xlane.xlu0 %3905
      %v3907 = vsel %vm3684, %v3834, 0.0
      %3908 = vadd.xlane.f32.xlu0 %v3907
      %v3909 = vpop.xlane.xlu0 %3908
      %v3910 = vsel %vm3684, %v3836, 0.0
      %3911 = vadd.xlane.f32.xlu0 %v3910
      %v3912 = vpop.xlane.xlu0 %3911
      %v3913 = vsel %vm3684, %v3838, 0.0
      %3914 = vadd.xlane.f32.xlu0 %v3913
      %v3915 = vpop.xlane.xlu0 %3914
      %v3916 = vsel %vm3684, %v3840, 0.0
      %3917 = vadd.xlane.f32.xlu0 %v3916
      %v3918 = vpop.xlane.xlu0 %3917
      %v3919 = vsel %vm3684, %v3842, 0.0
      %3920 = vadd.xlane.f32.xlu0 %v3919
      %v3921 = vpop.xlane.xlu0 %3920
      %v3922 = vsel %vm3684, %v3844, 0.0
      %3923 = vadd.xlane.f32.xlu0 %v3922
      %v3924 = vpop.xlane.xlu0 %3923
      %v3925 = vsel %vm3684, %v3846, 0.0
      %3926 = vadd.xlane.f32.xlu0 %v3925
      %v3927 = vpop.xlane.xlu0 %3926
      %v3928 = vsel %vm3684, %v3848, 0.0
      %3929 = vadd.xlane.f32.xlu0 %v3928
      %v3930 = vpop.xlane.xlu0 %3929
      %v3931 = vsel %vm3684, %v3850, 0.0
      %3932 = vadd.xlane.f32.xlu0 %v3931
      %v3933 = vpop.xlane.xlu0 %3932
      %v3934 = vsel %vm3684, %v3852, 0.0
      %3935 = vadd.xlane.f32.xlu0 %v3934
      %v3936 = vpop.xlane.xlu0 %3935
      %v3937 = vsel %vm3684, %v3854, 0.0
      %3938 = vadd.xlane.f32.xlu0 %v3937
      %v3939 = vpop.xlane.xlu0 %3938
      %v3940 = vsel %vm3684, %v3856, 0.0
      %3941 = vadd.xlane.f32.xlu0 %v3940
      %v3942 = vpop.xlane.xlu0 %3941
      %v3943 = vsel %vm3684, %v3858, 0.0
      %3944 = vadd.xlane.f32.xlu0 %v3943
      %v3945 = vpop.xlane.xlu0 %3944
      %v3946 = vsel %vm3684, %v3860, 0.0
      %3947 = vadd.xlane.f32.xlu0 %v3946
      %v3948 = vpop.xlane.xlu0 %3947
      %v3949 = vsel %vm3684, %v3862, 0.0
      %3950 = vadd.xlane.f32.xlu0 %v3949
      %v3951 = vpop.xlane.xlu0 %3950
      %v3952 = vsel %vm3684, %v3864, 0.0
      %3953 = vadd.xlane.f32.xlu0 %v3952
      %v3954 = vpop.xlane.xlu0 %3953
      %v3955 = vsel %vm3684, %v3866, 0.0
      %3956 = vadd.xlane.f32.xlu0 %v3955
      %v3957 = vpop.xlane.xlu0 %3956
      %v3958 = vsel %vm3684, %v3868, 0.0
      %3959 = vadd.xlane.f32.xlu0 %v3958
      %v3960 = vpop.xlane.xlu0 %3959
      %v3961 = vsel %vm3684, %v3870, 0.0
      %3962 = vadd.xlane.f32.xlu0 %v3961
      %v3963 = vpop.xlane.xlu0 %3962
      %v3964 = vsel %vm3684, %v3872, 0.0
      %3965 = vadd.xlane.f32.xlu0 %v3964
      %v3966 = vpop.xlane.xlu0 %3965
      %v3967 = vsel %vm3684, %v3874, 0.0
      %3968 = vadd.xlane.f32.xlu0 %v3967
      %v3969 = vpop.xlane.xlu0 %3968
      %v3970 = vsel %vm3684, %v3876, 0.0
      %3971 = vadd.xlane.f32.xlu0 %v3970
      %v3972 = vpop.xlane.xlu0 %3971
      %v3973 = vrcp.pop %v3879
      %v3974 = vrcp.pop %v3882
      %v3975 = vrcp.pop %v3885
      %v3976 = vrcp.pop %v3888
      %v3977 = vrcp.pop %v3891
      %v3978 = vrcp.pop %v3894
      %v3979 = vrcp.pop %v3897
      %v3980 = vrcp.pop %v3900
      %v3981 = vrcp.pop %v3903
      %v3982 = vrcp.pop %v3906
      %v3983 = vrcp.pop %v3909
      %v3984 = vrcp.pop %v3912
      %v3985 = vrcp.pop %v3915
      %v3986 = vrcp.pop %v3918
      %v3987 = vrcp.pop %v3921
      %v3988 = vrcp.pop %v3924
      %v3989 = vrcp.pop %v3927
      %v3990 = vrcp.pop %v3930
      %v3991 = vrcp.pop %v3933
      %v3992 = vrcp.pop %v3936
      %v3993 = vrcp.pop %v3939
      %v3994 = vrcp.pop %v3942
      %v3995 = vrcp.pop %v3945
      %v3996 = vrcp.pop %v3948
      %v3997 = vrcp.pop %v3951
      %v3998 = vrcp.pop %v3954
      %v3999 = vrcp.pop %v3957
      %v4000 = vrcp.pop %v3960
      %v4001 = vrcp.pop %v3963
      %v4002 = vrcp.pop %v3966
      %v4003 = vrcp.pop %v3969
      %v4004 = vrcp.pop %v3972
      %v4005 = vmul.f32 %v3814, %v3973
      %v4006 = vmul.f32 %v3816, %v3974
      %v4007 = vmul.f32 %v3818, %v3975
      %v4008 = vmul.f32 %v3820, %v3976
      %v4009 = vmul.f32 %v3822, %v3977
      %v4010 = vmul.f32 %v3824, %v3978
      %v4011 = vmul.f32 %v3826, %v3979
      %v4012 = vmul.f32 %v3828, %v3980
      %v4013 = vmul.f32 %v3830, %v3981
      %v4014 = vmul.f32 %v3832, %v3982
      %v4015 = vmul.f32 %v3834, %v3983
      %v4016 = vmul.f32 %v3836, %v3984
      %v4017 = vmul.f32 %v3838, %v3985
      %v4018 = vmul.f32 %v3840, %v3986
      %v4019 = vmul.f32 %v3842, %v3987
      %v4020 = vmul.f32 %v3844, %v3988
      %v4021 = vmul.f32 %v3846, %v3989
      %v4022 = vmul.f32 %v3848, %v3990
      %v4023 = vmul.f32 %v3850, %v3991
      %v4024 = vmul.f32 %v3852, %v3992
      %v4025 = vmul.f32 %v3854, %v3993
      %v4026 = vmul.f32 %v3856, %v3994
      %v4027 = vmul.f32 %v3858, %v3995
      %v4028 = vmul.f32 %v3860, %v3996
      %v4029 = vmul.f32 %v3862, %v3997
      %v4030 = vmul.f32 %v3864, %v3998
      %v4031 = vmul.f32 %v3866, %v3999
      %v4032 = vmul.f32 %v3868, %v4000
      %v4033 = vmul.f32 %v3870, %v4001
      %v4034 = vmul.f32 %v3872, %v4002
      %v4035 = vmul.f32 %v3874, %v4003
      %v4036 = vmul.f32 %v3876, %v4004
      %v4037 = vpack.c.bf16 %v4006, %v4005
      %v4038 = vpack.c.bf16 %v4008, %v4007
      %v4039 = vpack.c.bf16 %v4010, %v4009
      %v4040 = vpack.c.bf16 %v4012, %v4011
      %v4041 = vpack.c.bf16 %v4014, %v4013
      %v4042 = vpack.c.bf16 %v4016, %v4015
      %v4043 = vpack.c.bf16 %v4018, %v4017
      %v4044 = vpack.c.bf16 %v4020, %v4019
      %v4045 = vpack.c.bf16 %v4022, %v4021
      %v4046 = vpack.c.bf16 %v4024, %v4023
      %v4047 = vpack.c.bf16 %v4026, %v4025
      %v4048 = vpack.c.bf16 %v4028, %v4027
      %v4049 = vpack.c.bf16 %v4030, %v4029
      %v4050 = vpack.c.bf16 %v4032, %v4031
      %v4051 = vpack.c.bf16 %v4034, %v4033
      %v4052 = vpack.c.bf16 %v4036, %v4035
      %v4053 = vpack.c.bf16 %v3492, %v3492
      %v4055 = vsel %vm3684, %v4037, 0
      %v4058 = vsel %vm3684, %v4038, 0
      %v4061 = vsel %vm3684, %v4039, 0
      %v4064 = vsel %vm3684, %v4040, 0
      %v4067 = vsel %vm3684, %v4041, 0
      %v4070 = vsel %vm3684, %v4042, 0
      %v4073 = vsel %vm3684, %v4043, 0
      %v4076 = vsel %vm3684, %v4044, 0
      %v4079 = vsel %vm3684, %v4045, 0
      %v4082 = vsel %vm3684, %v4046, 0
      %v4085 = vsel %vm3684, %v4047, 0
      %v4088 = vsel %vm3684, %v4048, 0
      %v4091 = vsel %vm3684, %v4049, 0
      %v4094 = vsel %vm3684, %v4050, 0
      %v4097 = vsel %vm3684, %v4051, 0
      %v4100 = vsel %vm3684, %v4052, 0
      %vm4102 = vcmask 1043456
      %v4104 = vsel %vm4102, %v4053, 0
      %4106 = vmatpush.bf16.msra.mxu0 0
      %4107 = vmatpush.bf16.msra.mxu0 0
      %4108 = vmatpush.bf16.msra.mxu0 0
      %4109 = vmatpush.bf16.msra.mxu0 0
      %4110 = vmatpush.bf16.msra.mxu0 0
      %4111 = vmatpush.bf16.msra.mxu0 0
      %4112 = vmatpush.bf16.msra.mxu0 0
      %4113 = vmatpush.bf16.msra.mxu0 %v4104
      %4114 = vmatmul.bf16.gmra.mxu0 %v4055
      %v4115 = vpop.f32.mrf.mxu0
      %v4116 = vadd.f32 0.0, %v4115
      %v4117 = vpop.f32.mrf.mxu0
      %v4118 = vadd.f32 0.0, %v4117
      %4119 = vmatmul.bf16.gmra.mxu0 %v4058
      %v4120 = vpop.f32.mrf.mxu0
      %v4121 = vadd.f32 0.0, %v4120
      %v4122 = vpop.f32.mrf.mxu0
      %v4123 = vadd.f32 0.0, %v4122
      %4124 = vmatmul.bf16.gmra.mxu0 %v4061
      %v4125 = vpop.f32.mrf.mxu0
      %v4126 = vadd.f32 0.0, %v4125
      %v4127 = vpop.f32.mrf.mxu0
      %v4128 = vadd.f32 0.0, %v4127
      %4129 = vmatmul.bf16.gmra.mxu0 %v4064
      %v4130 = vpop.f32.mrf.mxu0
      %v4131 = vadd.f32 0.0, %v4130
      %v4132 = vpop.f32.mrf.mxu0
      %v4133 = vadd.f32 0.0, %v4132
      %4134 = vmatmul.bf16.gmra.mxu0 %v4067
      %v4135 = vpop.f32.mrf.mxu0
      %v4136 = vadd.f32 0.0, %v4135
      %v4137 = vpop.f32.mrf.mxu0
      %v4138 = vadd.f32 0.0, %v4137
      %4139 = vmatmul.bf16.gmra.mxu0 %v4070
      %v4140 = vpop.f32.mrf.mxu0
      %v4141 = vadd.f32 0.0, %v4140
      %v4142 = vpop.f32.mrf.mxu0
      %v4143 = vadd.f32 0.0, %v4142
      %4144 = vmatmul.bf16.gmra.mxu0 %v4073
      %v4145 = vpop.f32.mrf.mxu0
      %v4146 = vadd.f32 0.0, %v4145
      %v4147 = vpop.f32.mrf.mxu0
      %v4148 = vadd.f32 0.0, %v4147
      %4149 = vmatmul.bf16.gmra.mxu0 %v4076
      %v4150 = vpop.f32.mrf.mxu0
      %v4151 = vadd.f32 0.0, %v4150
      %v4152 = vpop.f32.mrf.mxu0
      %v4153 = vadd.f32 0.0, %v4152
      %4154 = vmatmul.bf16.gmra.mxu0 %v4079
      %v4155 = vpop.f32.mrf.mxu0
      %v4156 = vadd.f32 0.0, %v4155
      %v4157 = vpop.f32.mrf.mxu0
      %v4158 = vadd.f32 0.0, %v4157
      %4159 = vmatmul.bf16.gmra.mxu0 %v4082
      %v4160 = vpop.f32.mrf.mxu0
      %v4161 = vadd.f32 0.0, %v4160
      %v4162 = vpop.f32.mrf.mxu0
      %v4163 = vadd.f32 0.0, %v4162
      %4164 = vmatmul.bf16.gmra.mxu0 %v4085
      %v4165 = vpop.f32.mrf.mxu0
      %v4166 = vadd.f32 0.0, %v4165
      %v4167 = vpop.f32.mrf.mxu0
      %v4168 = vadd.f32 0.0, %v4167
      %4169 = vmatmul.bf16.gmra.mxu0 %v4088
      %v4170 = vpop.f32.mrf.mxu0
      %v4171 = vadd.f32 0.0, %v4170
      %v4172 = vpop.f32.mrf.mxu0
      %v4173 = vadd.f32 0.0, %v4172
      %4174 = vmatmul.bf16.gmra.mxu0 %v4091
      %v4175 = vpop.f32.mrf.mxu0
      %v4176 = vadd.f32 0.0, %v4175
      %v4177 = vpop.f32.mrf.mxu0
      %v4178 = vadd.f32 0.0, %v4177
      %4179 = vmatmul.bf16.gmra.mxu0 %v4094
      %v4180 = vpop.f32.mrf.mxu0
      %v4181 = vadd.f32 0.0, %v4180
      %v4182 = vpop.f32.mrf.mxu0
      %v4183 = vadd.f32 0.0, %v4182
      %4184 = vmatmul.bf16.gmra.mxu0 %v4097
      %v4185 = vpop.f32.mrf.mxu0
      %v4186 = vadd.f32 0.0, %v4185
      %v4187 = vpop.f32.mrf.mxu0
      %v4188 = vadd.f32 0.0, %v4187
      %4189 = vmatmul.bf16.gmra.mxu0 %v4100
      %v4190 = vpop.f32.mrf.mxu0
      %v4191 = vadd.f32 0.0, %v4190
      %v4192 = vpop.f32.mrf.mxu0
      %v4193 = vadd.f32 0.0, %v4192
      %4194 = vdwg.mxu0
      %v4195 = vpack.c.bf16 %v4118, %v4116
      %v4196 = vpack.c.bf16 %v4123, %v4121
      %v4197 = vpack.c.bf16 %v4128, %v4126
      %v4198 = vpack.c.bf16 %v4133, %v4131
      %v4199 = vpack.c.bf16 %v4138, %v4136
      %v4200 = vpack.c.bf16 %v4143, %v4141
      %v4201 = vpack.c.bf16 %v4148, %v4146
      %v4202 = vpack.c.bf16 %v4153, %v4151
      %v4203 = vpack.c.bf16 %v4158, %v4156
      %v4204 = vpack.c.bf16 %v4163, %v4161
      %v4205 = vpack.c.bf16 %v4168, %v4166
      %v4206 = vpack.c.bf16 %v4173, %v4171
      %v4207 = vpack.c.bf16 %v4178, %v4176
      %v4208 = vpack.c.bf16 %v4183, %v4181
      %v4209 = vpack.c.bf16 %v4188, %v4186
      %v4210 = vpack.c.bf16 %v4193, %v4191
      %v4211 = vld [vmem:[%s12] sm:$0xf]
      %v4212 = vld [vmem:[%s12 + $0x4] sm:$0xf]
      %v4213 = vld [vmem:[%s12 + $0x8] sm:$0xf]
      %v4214 = vld [vmem:[%s12 + $0xc] sm:$0xf]
      %v4215 = vld [vmem:[%s13] sm:$0x1]
      %v4217 = vperm.slane %v4215, 0
      %v4223 = vunpack.c.l.b16 %v4211
      %v4224 = vunpack.c.l.b16 %v4212
      %v4225 = vunpack.c.l.b16 %v4213
      %v4226 = vunpack.c.l.b16 %v4214
      %v4227 = vpack.c.b16 %v4224, %v4223
      %v4228 = vpack.c.b16 %v4226, %v4225
      %v4232 = vsel %vm546, %v4195, 0
      %v4235 = vsel %vm546, %v4196, 0
      %v4238 = vsel %vm546, %v4197, 0
      %v4241 = vsel %vm546, %v4198, 0
      %v4244 = vsel %vm546, %v4199, 0
      %v4247 = vsel %vm546, %v4200, 0
      %v4250 = vsel %vm546, %v4201, 0
      %v4253 = vsel %vm546, %v4202, 0
      %v4256 = vsel %vm546, %v4203, 0
      %v4259 = vsel %vm546, %v4204, 0
      %v4262 = vsel %vm546, %v4205, 0
      %v4265 = vsel %vm546, %v4206, 0
      %v4268 = vsel %vm546, %v4207, 0
      %v4271 = vsel %vm546, %v4208, 0
      %v4274 = vsel %vm546, %v4209, 0
      %v4277 = vsel %vm546, %v4210, 0
      %4279 = vmatpush.bf16.msra.mxu0 0
      %4280 = vmatpush.bf16.msra.mxu0 0
      %4281 = vmatpush.bf16.msra.mxu0 0
      %4282 = vmatpush.bf16.msra.mxu0 0
      %4283 = vmatpush.bf16.msra.mxu0 0
      %4284 = vmatpush.bf16.msra.mxu0 0
      %4285 = vmatpush.bf16.msra.mxu0 %v4228
      %4286 = vmatpush.bf16.msra.mxu0 %v4227
      %4287 = vmatmul.bf16.gmra.mxu0 %v4232
      %v4288 = vpop.f32.mrf.mxu0
      %v4289 = vadd.f32 %v4217, %v4288
      %v4290 = vpop.f32.mrf.mxu0
      %v4291 = vadd.f32 %v4217, %v4290
      %4292 = vmatmul.bf16.gmra.mxu0 %v4235
      %v4293 = vpop.f32.mrf.mxu0
      %v4294 = vadd.f32 %v4217, %v4293
      %v4295 = vpop.f32.mrf.mxu0
      %v4296 = vadd.f32 %v4217, %v4295
      %4297 = vmatmul.bf16.gmra.mxu0 %v4238
      %v4298 = vpop.f32.mrf.mxu0
      %v4299 = vadd.f32 %v4217, %v4298
      %v4300 = vpop.f32.mrf.mxu0
      %v4301 = vadd.f32 %v4217, %v4300
      %4302 = vmatmul.bf16.gmra.mxu0 %v4241
      %v4303 = vpop.f32.mrf.mxu0
      %v4304 = vadd.f32 %v4217, %v4303
      %v4305 = vpop.f32.mrf.mxu0
      %v4306 = vadd.f32 %v4217, %v4305
      %4307 = vmatmul.bf16.gmra.mxu0 %v4244
      %v4308 = vpop.f32.mrf.mxu0
      %v4309 = vadd.f32 %v4217, %v4308
      %v4310 = vpop.f32.mrf.mxu0
      %v4311 = vadd.f32 %v4217, %v4310
      %4312 = vmatmul.bf16.gmra.mxu0 %v4247
      %v4313 = vpop.f32.mrf.mxu0
      %v4314 = vadd.f32 %v4217, %v4313
      %v4315 = vpop.f32.mrf.mxu0
      %v4316 = vadd.f32 %v4217, %v4315
      %4317 = vmatmul.bf16.gmra.mxu0 %v4250
      %v4318 = vpop.f32.mrf.mxu0
      %v4319 = vadd.f32 %v4217, %v4318
      %v4320 = vpop.f32.mrf.mxu0
      %v4321 = vadd.f32 %v4217, %v4320
      %4322 = vmatmul.bf16.gmra.mxu0 %v4253
      %v4323 = vpop.f32.mrf.mxu0
      %v4324 = vadd.f32 %v4217, %v4323
      %v4325 = vpop.f32.mrf.mxu0
      %v4326 = vadd.f32 %v4217, %v4325
      %4327 = vmatmul.bf16.gmra.mxu0 %v4256
      %v4328 = vpop.f32.mrf.mxu0
      %v4329 = vadd.f32 %v4217, %v4328
      %v4330 = vpop.f32.mrf.mxu0
      %v4331 = vadd.f32 %v4217, %v4330
      %4332 = vmatmul.bf16.gmra.mxu0 %v4259
      %v4333 = vpop.f32.mrf.mxu0
      %v4334 = vadd.f32 %v4217, %v4333
      %v4335 = vpop.f32.mrf.mxu0
      %v4336 = vadd.f32 %v4217, %v4335
      %4337 = vmatmul.bf16.gmra.mxu0 %v4262
      %v4338 = vpop.f32.mrf.mxu0
      %v4339 = vadd.f32 %v4217, %v4338
      %v4340 = vpop.f32.mrf.mxu0
      %v4341 = vadd.f32 %v4217, %v4340
      %4342 = vmatmul.bf16.gmra.mxu0 %v4265
      %v4343 = vpop.f32.mrf.mxu0
      %v4344 = vadd.f32 %v4217, %v4343
      %v4345 = vpop.f32.mrf.mxu0
      %v4346 = vadd.f32 %v4217, %v4345
      %4347 = vmatmul.bf16.gmra.mxu0 %v4268
      %v4348 = vpop.f32.mrf.mxu0
      %v4349 = vadd.f32 %v4217, %v4348
      %v4350 = vpop.f32.mrf.mxu0
      %v4351 = vadd.f32 %v4217, %v4350
      %4352 = vmatmul.bf16.gmra.mxu0 %v4271
      %v4353 = vpop.f32.mrf.mxu0
      %v4354 = vadd.f32 %v4217, %v4353
      %v4355 = vpop.f32.mrf.mxu0
      %v4356 = vadd.f32 %v4217, %v4355
      %4357 = vmatmul.bf16.gmra.mxu0 %v4274
      %v4358 = vpop.f32.mrf.mxu0
      %v4359 = vadd.f32 %v4217, %v4358
      %v4360 = vpop.f32.mrf.mxu0
      %v4361 = vadd.f32 %v4217, %v4360
      %4362 = vmatmul.bf16.gmra.mxu0 %v4277
      %v4363 = vpop.f32.mrf.mxu0
      %v4364 = vadd.f32 %v4217, %v4363
      %v4365 = vpop.f32.mrf.mxu0
      %v4366 = vadd.f32 %v4217, %v4365
      %4367 = vdwg.mxu0
      %v4368 = vadd.f32 %v3232, %v4289
      %v4369 = vadd.f32 %v3233, %v4291
      %v4370 = vadd.f32 %v3234, %v4294
      %v4371 = vadd.f32 %v3235, %v4296
      %v4372 = vadd.f32 %v3236, %v4299
      %v4373 = vadd.f32 %v3237, %v4301
      %v4374 = vadd.f32 %v3238, %v4304
      %v4375 = vadd.f32 %v3239, %v4306
      %v4376 = vadd.f32 %v3240, %v4309
      %v4377 = vadd.f32 %v3241, %v4311
      %v4378 = vadd.f32 %v3242, %v4314
      %v4379 = vadd.f32 %v3243, %v4316
      %v4380 = vadd.f32 %v3244, %v4319
      %v4381 = vadd.f32 %v3245, %v4321
      %v4382 = vadd.f32 %v3246, %v4324
      %v4383 = vadd.f32 %v3247, %v4326
      %v4384 = vadd.f32 %v3248, %v4329
      %v4385 = vadd.f32 %v3249, %v4331
      %v4386 = vadd.f32 %v3250, %v4334
      %v4387 = vadd.f32 %v3251, %v4336
      %v4388 = vadd.f32 %v3252, %v4339
      %v4389 = vadd.f32 %v3253, %v4341
      %v4390 = vadd.f32 %v3254, %v4344
      %v4391 = vadd.f32 %v3255, %v4346
      %v4392 = vadd.f32 %v3256, %v4349
      %v4393 = vadd.f32 %v3257, %v4351
      %v4394 = vadd.f32 %v3258, %v4354
      %v4395 = vadd.f32 %v3259, %v4356
      %v4396 = vadd.f32 %v3260, %v4359
      %v4397 = vadd.f32 %v3261, %v4361
      %v4398 = vadd.f32 %v3262, %v4364
      %v4399 = vadd.f32 %v3263, %v4366
      %4400 = vst.msk [vmem:[#allocation2] sm:$0xff] %vm546, 0.0
      %4401 = vst.msk [vmem:[#allocation2 + $0x8] sm:$0xff] %vm546, 0.0
      %vm4402 = vcmask 254976
      %4403 = vst.msk [vmem:[#allocation2 + $0x10] sm:$0x3] %vm4402, 0.0
      %4404 = vst.msk [vmem:[#allocation2 + $0x18] sm:$0xff] %vm546, 0.0
      %4405 = vst.msk [vmem:[#allocation2 + $0x20] sm:$0xff] %vm546, 0.0
      %4406 = vst.msk [vmem:[#allocation2 + $0x28] sm:$0x3] %vm4402, 0.0
      %4407 = vst.msk [vmem:[#allocation2 + $0x30] sm:$0xff] %vm546, 0.0
      %4408 = vst.msk [vmem:[#allocation2 + $0x38] sm:$0xff] %vm546, 0.0
      %4409 = vst.msk [vmem:[#allocation2 + $0x40] sm:$0x3] %vm4402, 0.0
      %4410 = vst.msk [vmem:[#allocation2 + $0x48] sm:$0xff] %vm546, 0.0
      %4411 = vst.msk [vmem:[#allocation2 + $0x50] sm:$0xff] %vm546, 0.0
      %4412 = vst.msk [vmem:[#allocation2 + $0x58] sm:$0x3] %vm4402, 0.0
      %4413 = vst.msk [vmem:[#allocation2 + $0x60] sm:$0xff] %vm546, 0.0
      %4414 = vst.msk [vmem:[#allocation2 + $0x68] sm:$0xff] %vm546, 0.0
      %4415 = vst.msk [vmem:[#allocation2 + $0x70] sm:$0x3] %vm4402, 0.0
      %4416 = vst.msk [vmem:[#allocation2 + $0x78] sm:$0xff] %vm546, 0.0
      %4417 = vst.msk [vmem:[#allocation2 + $0x80] sm:$0xff] %vm546, 0.0
      %4418 = vst.msk [vmem:[#allocation2 + $0x88] sm:$0x3] %vm4402, 0.0
      %4419 = vst.msk [vmem:[#allocation2 + $0x90] sm:$0xff] %vm546, 0.0
      %4420 = vst.msk [vmem:[#allocation2 + $0x98] sm:$0xff] %vm546, 0.0
      %4421 = vst.msk [vmem:[#allocation2 + $0xa0] sm:$0x3] %vm4402, 0.0
      %4422 = vst.msk [vmem:[#allocation2 + $0xa8] sm:$0xff] %vm546, 0.0
      %4423 = vst.msk [vmem:[#allocation2 + $0xb0] sm:$0xff] %vm546, 0.0
      %4424 = vst.msk [vmem:[#allocation2 + $0xb8] sm:$0x3] %vm4402, 0.0
      %4425 = vst.msk [vmem:[#allocation2 + $0xc0] sm:$0xff] %vm546, 0.0
      %4426 = vst.msk [vmem:[#allocation2 + $0xc8] sm:$0xff] %vm546, 0.0
      %4427 = vst.msk [vmem:[#allocation2 + $0xd0] sm:$0x3] %vm4402, 0.0
      %4428 = vst.msk [vmem:[#allocation2 + $0xd8] sm:$0xff] %vm546, 0.0
      %4429 = vst.msk [vmem:[#allocation2 + $0xe0] sm:$0xff] %vm546, 0.0
      %4430 = vst.msk [vmem:[#allocation2 + $0xe8] sm:$0x3] %vm4402, 0.0
      %4431 = vst.msk [vmem:[#allocation2 + $0xf0] sm:$0xff] %vm546, 0.0
      %4432 = vst.msk [vmem:[#allocation2 + $0xf8] sm:$0xff] %vm546, 0.0
      %4433 = vst.msk [vmem:[#allocation2 + $0x100] sm:$0x3] %vm4402, 0.0
      %4434 = vst.msk [vmem:[#allocation2 + $0x108] sm:$0xff] %vm546, 0.0
      %4435 = vst.msk [vmem:[#allocation2 + $0x110] sm:$0xff] %vm546, 0.0
      %4436 = vst.msk [vmem:[#allocation2 + $0x118] sm:$0x3] %vm4402, 0.0
      %4437 = vst.msk [vmem:[#allocation2 + $0x120] sm:$0xff] %vm546, 0.0
      %4438 = vst.msk [vmem:[#allocation2 + $0x128] sm:$0xff] %vm546, 0.0
      %4439 = vst.msk [vmem:[#allocation2 + $0x130] sm:$0x3] %vm4402, 0.0
      %4440 = vst.msk [vmem:[#allocation2 + $0x138] sm:$0xff] %vm546, 0.0
      %4441 = vst.msk [vmem:[#allocation2 + $0x140] sm:$0xff] %vm546, 0.0
      %4442 = vst.msk [vmem:[#allocation2 + $0x148] sm:$0x3] %vm4402, 0.0
      %4443 = vst.msk [vmem:[#allocation2 + $0x150] sm:$0xff] %vm546, 0.0
      %4444 = vst.msk [vmem:[#allocation2 + $0x158] sm:$0xff] %vm546, 0.0
      %4445 = vst.msk [vmem:[#allocation2 + $0x160] sm:$0x3] %vm4402, 0.0
      %4446 = vst.msk [vmem:[#allocation2 + $0x168] sm:$0xff] %vm546, 0.0
      %4447 = vst.msk [vmem:[#allocation2 + $0x170] sm:$0xff] %vm546, 0.0
      %4448 = vst.msk [vmem:[#allocation2 + $0x178] sm:$0x3] %vm4402, 0.0
      %4449 = vst.msk [vmem:[#allocation2 + $0x180] sm:$0xff] %vm546, 0.0
      %4450 = vst.msk [vmem:[#allocation2 + $0x188] sm:$0xff] %vm546, 0.0
      %4451 = vst.msk [vmem:[#allocation2 + $0x190] sm:$0x3] %vm4402, 0.0
      %4452 = vst.msk [vmem:[#allocation2 + $0x198] sm:$0xff] %vm546, 0.0
      %4453 = vst.msk [vmem:[#allocation2 + $0x1a0] sm:$0xff] %vm546, 0.0
      %4454 = vst.msk [vmem:[#allocation2 + $0x1a8] sm:$0x3] %vm4402, 0.0
      %s4455 = scalar_lea.vmem [#allocation2], 24
      %4456 = vst.msk [vmem:[%s4455 + $0x1] sm:$0xff] %vm546, %v4368
      %4457 = vst.msk [vmem:[%s4455 + $0x9] sm:$0xff] %vm546, %v4369
      %4458 = vst.msk [vmem:[%s4455 + $0x19] sm:$0xff] %vm546, %v4370
      %4459 = vst.msk [vmem:[%s4455 + $0x21] sm:$0xff] %vm546, %v4371
      %4460 = vst.msk [vmem:[%s4455 + $0x31] sm:$0xff] %vm546, %v4372
      %4461 = vst.msk [vmem:[%s4455 + $0x39] sm:$0xff] %vm546, %v4373
      %4462 = vst.msk [vmem:[%s4455 + $0x49] sm:$0xff] %vm546, %v4374
      %4463 = vst.msk [vmem:[%s4455 + $0x51] sm:$0xff] %vm546, %v4375
      %4464 = vst.msk [vmem:[%s4455 + $0x61] sm:$0xff] %vm546, %v4376
      %4465 = vst.msk [vmem:[%s4455 + $0x69] sm:$0xff] %vm546, %v4377
      %4466 = vst.msk [vmem:[%s4455 + $0x79] sm:$0xff] %vm546, %v4378
      %4467 = vst.msk [vmem:[%s4455 + $0x81] sm:$0xff] %vm546, %v4379
      %4468 = vst.msk [vmem:[%s4455 + $0x91] sm:$0xff] %vm546, %v4380
      %4469 = vst.msk [vmem:[%s4455 + $0x99] sm:$0xff] %vm546, %v4381
      %4470 = vst.msk [vmem:[%s4455 + $0xa9] sm:$0xff] %vm546, %v4382
      %4471 = vst.msk [vmem:[%s4455 + $0xb1] sm:$0xff] %vm546, %v4383
      %4472 = vst.msk [vmem:[%s4455 + $0xc1] sm:$0xff] %vm546, %v4384
      %4473 = vst.msk [vmem:[%s4455 + $0xc9] sm:$0xff] %vm546, %v4385
      %4474 = vst.msk [vmem:[%s4455 + $0xd9] sm:$0xff] %vm546, %v4386
      %4475 = vst.msk [vmem:[%s4455 + $0xe1] sm:$0xff] %vm546, %v4387
      %4476 = vst.msk [vmem:[%s4455 + $0xf1] sm:$0xff] %vm546, %v4388
      %4477 = vst.msk [vmem:[%s4455 + $0xf9] sm:$0xff] %vm546, %v4389
      %4478 = vst.msk [vmem:[%s4455 + $0x109] sm:$0xff] %vm546, %v4390
      %4479 = vst.msk [vmem:[%s4455 + $0x111] sm:$0xff] %vm546, %v4391
      %4480 = vst.msk [vmem:[%s4455 + $0x121] sm:$0xff] %vm546, %v4392
      %4481 = vst.msk [vmem:[%s4455 + $0x129] sm:$0xff] %vm546, %v4393
      %4482 = vst.msk [vmem:[%s4455 + $0x139] sm:$0xff] %vm546, %v4394
      %4483 = vst.msk [vmem:[%s4455 + $0x141] sm:$0xff] %vm546, %v4395
      %4484 = vst.msk [vmem:[%s4455 + $0x151] sm:$0xff] %vm546, %v4396
      %4485 = vst.msk [vmem:[%s4455 + $0x159] sm:$0xff] %vm546, %v4397
      %4486 = vst.msk [vmem:[%s4455 + $0x169] sm:$0xff] %vm546, %v4398
      %4487 = vst.msk [vmem:[%s4455 + $0x171] sm:$0xff] %vm546, %v4399
      %v4488 = vld [vmem:[#allocation2] sm:$0xff]
      %v4489 = vld [vmem:[#allocation2 + $0x8] sm:$0xff]
      %v4490 = vld [vmem:[#allocation2 + $0x18] sm:$0xff]
      %v4491 = vld [vmem:[#allocation2 + $0x20] sm:$0xff]
      %v4492 = vld [vmem:[#allocation2 + $0x30] sm:$0xff]
      %v4493 = vld [vmem:[#allocation2 + $0x38] sm:$0xff]
      %v4494 = vld [vmem:[#allocation2 + $0x48] sm:$0xff]
      %v4495 = vld [vmem:[#allocation2 + $0x50] sm:$0xff]
      %v4496 = vld [vmem:[#allocation2 + $0x60] sm:$0xff]
      %v4497 = vld [vmem:[#allocation2 + $0x68] sm:$0xff]
      %v4498 = vld [vmem:[#allocation2 + $0x78] sm:$0xff]
      %v4499 = vld [vmem:[#allocation2 + $0x80] sm:$0xff]
      %v4500 = vld [vmem:[#allocation2 + $0x90] sm:$0xff]
      %v4501 = vld [vmem:[#allocation2 + $0x98] sm:$0xff]
      %v4502 = vld [vmem:[#allocation2 + $0xa8] sm:$0xff]
      %v4503 = vld [vmem:[#allocation2 + $0xb0] sm:$0xff]
      %v4504 = vld [vmem:[#allocation2 + $0xc0] sm:$0xff]
      %v4505 = vld [vmem:[#allocation2 + $0xc8] sm:$0xff]
      %v4506 = vld [vmem:[#allocation2 + $0xd8] sm:$0xff]
      %v4507 = vld [vmem:[#allocation2 + $0xe0] sm:$0xff]
      %v4508 = vld [vmem:[#allocation2 + $0xf0] sm:$0xff]
      %v4509 = vld [vmem:[#allocation2 + $0xf8] sm:$0xff]
      %v4510 = vld [vmem:[#allocation2 + $0x108] sm:$0xff]
      %v4511 = vld [vmem:[#allocation2 + $0x110] sm:$0xff]
      %v4512 = vld [vmem:[#allocation2 + $0x120] sm:$0xff]
      %v4513 = vld [vmem:[#allocation2 + $0x128] sm:$0xff]
      %v4514 = vld [vmem:[#allocation2 + $0x138] sm:$0xff]
      %v4515 = vld [vmem:[#allocation2 + $0x140] sm:$0xff]
      %v4516 = vld [vmem:[#allocation2 + $0x150] sm:$0xff]
      %v4517 = vld [vmem:[#allocation2 + $0x158] sm:$0xff]
      %v4518 = vld [vmem:[#allocation2 + $0x168] sm:$0xff]
      %v4519 = vld [vmem:[#allocation2 + $0x170] sm:$0xff]
      %v4520 = vld [vmem:[%s14] sm:$0x3]
      %v4521 = vpack.c.bf16 %v4489, %v4488
      %v4522 = vpack.c.bf16 %v4491, %v4490
      %v4523 = vpack.c.bf16 %v4493, %v4492
      %v4524 = vpack.c.bf16 %v4495, %v4494
      %v4525 = vpack.c.bf16 %v4497, %v4496
      %v4526 = vpack.c.bf16 %v4499, %v4498
      %v4527 = vpack.c.bf16 %v4501, %v4500
      %v4528 = vpack.c.bf16 %v4503, %v4502
      %v4529 = vpack.c.bf16 %v4505, %v4504
      %v4530 = vpack.c.bf16 %v4507, %v4506
      %v4531 = vpack.c.bf16 %v4509, %v4508
      %v4532 = vpack.c.bf16 %v4511, %v4510
      %v4533 = vpack.c.bf16 %v4513, %v4512
      %v4534 = vpack.c.bf16 %v4515, %v4514
      %v4535 = vpack.c.bf16 %v4517, %v4516
      %v4536 = vpack.c.bf16 %v4519, %v4518
      %v4537 = vld [vmem:[#allocation2 + $0x1] sm:$0xff]
      %v4538 = vld [vmem:[#allocation2 + $0x9] sm:$0xff]
      %v4539 = vld [vmem:[#allocation2 + $0x19] sm:$0xff]
      %v4540 = vld [vmem:[#allocation2 + $0x21] sm:$0xff]
      %v4541 = vld [vmem:[#allocation2 + $0x31] sm:$0xff]
      %v4542 = vld [vmem:[#allocation2 + $0x39] sm:$0xff]
      %v4543 = vld [vmem:[#allocation2 + $0x49] sm:$0xff]
      %v4544 = vld [vmem:[#allocation2 + $0x51] sm:$0xff]
      %v4545 = vld [vmem:[#allocation2 + $0x61] sm:$0xff]
      %v4546 = vld [vmem:[#allocation2 + $0x69] sm:$0xff]
      %v4547 = vld [vmem:[#allocation2 + $0x79] sm:$0xff]
      %v4548 = vld [vmem:[#allocation2 + $0x81] sm:$0xff]
      %v4549 = vld [vmem:[#allocation2 + $0x91] sm:$0xff]
      %v4550 = vld [vmem:[#allocation2 + $0x99] sm:$0xff]
      %v4551 = vld [vmem:[#allocation2 + $0xa9] sm:$0xff]
      %v4552 = vld [vmem:[#allocation2 + $0xb1] sm:$0xff]
      %v4553 = vld [vmem:[#allocation2 + $0xc1] sm:$0xff]
      %v4554 = vld [vmem:[#allocation2 + $0xc9] sm:$0xff]
      %v4555 = vld [vmem:[#allocation2 + $0xd9] sm:$0xff]
      %v4556 = vld [vmem:[#allocation2 + $0xe1] sm:$0xff]
      %v4557 = vld [vmem:[#allocation2 + $0xf1] sm:$0xff]
      %v4558 = vld [vmem:[#allocation2 + $0xf9] sm:$0xff]
      %v4559 = vld [vmem:[#allocation2 + $0x109] sm:$0xff]
      %v4560 = vld [vmem:[#allocation2 + $0x111] sm:$0xff]
      %v4561 = vld [vmem:[#allocation2 + $0x121] sm:$0xff]
      %v4562 = vld [vmem:[#allocation2 + $0x129] sm:$0xff]
      %v4563 = vld [vmem:[#allocation2 + $0x139] sm:$0xff]
      %v4564 = vld [vmem:[#allocation2 + $0x141] sm:$0xff]
      %v4565 = vld [vmem:[#allocation2 + $0x151] sm:$0xff]
      %v4566 = vld [vmem:[#allocation2 + $0x159] sm:$0xff]
      %v4567 = vld [vmem:[#allocation2 + $0x169] sm:$0xff]
      %v4568 = vld [vmem:[#allocation2 + $0x171] sm:$0xff]
      %s4569 = scalar_lea.vmem %s14, 2
      %v4570 = vld [vmem:[%s4569] sm:$0x3]
      %v4571 = vpack.c.bf16 %v4538, %v4537
      %v4572 = vpack.c.bf16 %v4540, %v4539
      %v4573 = vpack.c.bf16 %v4542, %v4541
      %v4574 = vpack.c.bf16 %v4544, %v4543
      %v4575 = vpack.c.bf16 %v4546, %v4545
      %v4576 = vpack.c.bf16 %v4548, %v4547
      %v4577 = vpack.c.bf16 %v4550, %v4549
      %v4578 = vpack.c.bf16 %v4552, %v4551
      %v4579 = vpack.c.bf16 %v4554, %v4553
      %v4580 = vpack.c.bf16 %v4556, %v4555
      %v4581 = vpack.c.bf16 %v4558, %v4557
      %v4582 = vpack.c.bf16 %v4560, %v4559
      %v4583 = vpack.c.bf16 %v4562, %v4561
      %v4584 = vpack.c.bf16 %v4564, %v4563
      %v4585 = vpack.c.bf16 %v4566, %v4565
      %v4586 = vpack.c.bf16 %v4568, %v4567
      %v4588 = vsel %vm546, %v4570, 0
      %v4591 = vsel %vm546, %v4571, 0
      %v4594 = vsel %vm546, %v4572, 0
      %v4597 = vsel %vm546, %v4573, 0
      %v4600 = vsel %vm546, %v4574, 0
      %v4603 = vsel %vm546, %v4575, 0
      %v4606 = vsel %vm546, %v4576, 0
      %v4609 = vsel %vm546, %v4577, 0
      %v4612 = vsel %vm546, %v4578, 0
      %v4615 = vsel %vm546, %v4579, 0
      %v4618 = vsel %vm546, %v4580, 0
      %v4621 = vsel %vm546, %v4581, 0
      %v4624 = vsel %vm546, %v4582, 0
      %v4627 = vsel %vm546, %v4583, 0
      %v4630 = vsel %vm546, %v4584, 0
      %v4633 = vsel %vm546, %v4585, 0
      %v4636 = vsel %vm546, %v4586, 0
      %4638 = vmatpush.bf16.xpose.msra.mxu0 %v4612
      %4639 = vmatpush.bf16.xpose.msra.mxu0 %v4609
      %4640 = vmatpush.bf16.xpose.msra.mxu0 %v4606
      %4641 = vmatpush.bf16.xpose.msra.mxu0 %v4603
      %4642 = vmatpush.bf16.xpose.msra.mxu0 %v4600
      %4643 = vmatpush.bf16.xpose.msra.mxu0 %v4597
      %4644 = vmatpush.bf16.xpose.msra.mxu0 %v4594
      %4645 = vmatpush.bf16.xpose.msra.mxu0 %v4591
      %4646 = vmatmul.bf16.gmra.mxu0 %v4588
      %v4647 = vpop.f32.mrf.mxu0
      %v4648 = vadd.f32 0.0, %v4647
      %v4649 = vpop.f32.mrf.mxu0
      %4650 = vdwg.mxu0
      %4651 = vmatpush.bf16.xpose.msra.mxu0 %v4636
      %4652 = vmatpush.bf16.xpose.msra.mxu0 %v4633
      %4653 = vmatpush.bf16.xpose.msra.mxu0 %v4630
      %4654 = vmatpush.bf16.xpose.msra.mxu0 %v4627
      %4655 = vmatpush.bf16.xpose.msra.mxu0 %v4624
      %4656 = vmatpush.bf16.xpose.msra.mxu0 %v4621
      %4657 = vmatpush.bf16.xpose.msra.mxu0 %v4618
      %4658 = vmatpush.bf16.xpose.msra.mxu0 %v4615
      %4659 = vmatmul.bf16.gmra.mxu0 %v4588
      %v4660 = vpop.f32.mrf.mxu0
      %v4661 = vadd.f32 0.0, %v4660
      %v4662 = vpop.f32.mrf.mxu0
      %4663 = vdwg.mxu0
      %v4665 = vsel %vm546, %v4520, 0
      %v4668 = vsel %vm546, %v4521, 0
      %v4671 = vsel %vm546, %v4522, 0
      %v4674 = vsel %vm546, %v4523, 0
      %v4677 = vsel %vm546, %v4524, 0
      %v4680 = vsel %vm546, %v4525, 0
      %v4683 = vsel %vm546, %v4526, 0
      %v4686 = vsel %vm546, %v4527, 0
      %v4689 = vsel %vm546, %v4528, 0
      %v4692 = vsel %vm546, %v4529, 0
      %v4695 = vsel %vm546, %v4530, 0
      %v4698 = vsel %vm546, %v4531, 0
      %v4701 = vsel %vm546, %v4532, 0
      %v4704 = vsel %vm546, %v4533, 0
      %v4707 = vsel %vm546, %v4534, 0
      %v4710 = vsel %vm546, %v4535, 0
      %v4713 = vsel %vm546, %v4536, 0
      %4715 = vmatpush.bf16.xpose.msra.mxu0 %v4689
      %4716 = vmatpush.bf16.xpose.msra.mxu0 %v4686
      %4717 = vmatpush.bf16.xpose.msra.mxu0 %v4683
      %4718 = vmatpush.bf16.xpose.msra.mxu0 %v4680
      %4719 = vmatpush.bf16.xpose.msra.mxu0 %v4677
      %4720 = vmatpush.bf16.xpose.msra.mxu0 %v4674
      %4721 = vmatpush.bf16.xpose.msra.mxu0 %v4671
      %4722 = vmatpush.bf16.xpose.msra.mxu0 %v4668
      %4723 = vmatmul.bf16.gmra.mxu0 %v4665
      %v4724 = vpop.f32.mrf.mxu0
      %v4725 = vadd.f32 %v4648, %v4724
      %v4726 = vpop.f32.mrf.mxu0
      %4727 = vdwg.mxu0
      %4728 = vmatpush.bf16.xpose.msra.mxu0 %v4713
      %4729 = vmatpush.bf16.xpose.msra.mxu0 %v4710
      %4730 = vmatpush.bf16.xpose.msra.mxu0 %v4707
      %4731 = vmatpush.bf16.xpose.msra.mxu0 %v4704
      %4732 = vmatpush.bf16.xpose.msra.mxu0 %v4701
      %4733 = vmatpush.bf16.xpose.msra.mxu0 %v4698
      %4734 = vmatpush.bf16.xpose.msra.mxu0 %v4695
      %4735 = vmatpush.bf16.xpose.msra.mxu0 %v4692
      %4736 = vmatmul.bf16.gmra.mxu0 %v4665
      %v4737 = vpop.f32.mrf.mxu0
      %v4738 = vadd.f32 %v4661, %v4737
      %v4739 = vpop.f32.mrf.mxu0
      %4740 = vdwg.mxu0
      %v4741 = vld [vmem:[#allocation2 + $0x2] sm:$0xff]
      %v4742 = vld [vmem:[#allocation2 + $0xa] sm:$0xff]
      %v4743 = vld [vmem:[#allocation2 + $0x1a] sm:$0xff]
      %v4744 = vld [vmem:[#allocation2 + $0x22] sm:$0xff]
      %v4745 = vld [vmem:[#allocation2 + $0x32] sm:$0xff]
      %v4746 = vld [vmem:[#allocation2 + $0x3a] sm:$0xff]
      %v4747 = vld [vmem:[#allocation2 + $0x4a] sm:$0xff]
      %v4748 = vld [vmem:[#allocation2 + $0x52] sm:$0xff]
      %v4749 = vld [vmem:[#allocation2 + $0x62] sm:$0xff]
      %v4750 = vld [vmem:[#allocation2 + $0x6a] sm:$0xff]
      %v4751 = vld [vmem:[#allocation2 + $0x7a] sm:$0xff]
      %v4752 = vld [vmem:[#allocation2 + $0x82] sm:$0xff]
      %v4753 = vld [vmem:[#allocation2 + $0x92] sm:$0xff]
      %v4754 = vld [vmem:[#allocation2 + $0x9a] sm:$0xff]
      %v4755 = vld [vmem:[#allocation2 + $0xaa] sm:$0xff]
      %v4756 = vld [vmem:[#allocation2 + $0xb2] sm:$0xff]
      %v4757 = vld [vmem:[#allocation2 + $0xc2] sm:$0xff]
      %v4758 = vld [vmem:[#allocation2 + $0xca] sm:$0xff]
      %v4759 = vld [vmem:[#allocation2 + $0xda] sm:$0xff]
      %v4760 = vld [vmem:[#allocation2 + $0xe2] sm:$0xff]
      %v4761 = vld [vmem:[#allocation2 + $0xf2] sm:$0xff]
      %v4762 = vld [vmem:[#allocation2 + $0xfa] sm:$0xff]
      %v4763 = vld [vmem:[#allocation2 + $0x10a] sm:$0xff]
      %v4764 = vld [vmem:[#allocation2 + $0x112] sm:$0xff]
      %v4765 = vld [vmem:[#allocation2 + $0x122] sm:$0xff]
      %v4766 = vld [vmem:[#allocation2 + $0x12a] sm:$0xff]
      %v4767 = vld [vmem:[#allocation2 + $0x13a] sm:$0xff]
      %v4768 = vld [vmem:[#allocation2 + $0x142] sm:$0xff]
      %v4769 = vld [vmem:[#allocation2 + $0x152] sm:$0xff]
      %v4770 = vld [vmem:[#allocation2 + $0x15a] sm:$0xff]
      %v4771 = vld [vmem:[#allocation2 + $0x16a] sm:$0xff]
      %v4772 = vld [vmem:[#allocation2 + $0x172] sm:$0xff]
      %s4773 = scalar_lea.vmem %s14, 4
      %v4774 = vld [vmem:[%s4773] sm:$0x3]
      %v4775 = vpack.c.bf16 %v4742, %v4741
      %v4776 = vpack.c.bf16 %v4744, %v4743
      %v4777 = vpack.c.bf16 %v4746, %v4745
      %v4778 = vpack.c.bf16 %v4748, %v4747
      %v4779 = vpack.c.bf16 %v4750, %v4749
      %v4780 = vpack.c.bf16 %v4752, %v4751
      %v4781 = vpack.c.bf16 %v4754, %v4753
      %v4782 = vpack.c.bf16 %v4756, %v4755
      %v4783 = vpack.c.bf16 %v4758, %v4757
      %v4784 = vpack.c.bf16 %v4760, %v4759
      %v4785 = vpack.c.bf16 %v4762, %v4761
      %v4786 = vpack.c.bf16 %v4764, %v4763
      %v4787 = vpack.c.bf16 %v4766, %v4765
      %v4788 = vpack.c.bf16 %v4768, %v4767
      %v4789 = vpack.c.bf16 %v4770, %v4769
      %v4790 = vpack.c.bf16 %v4772, %v4771
      %v4792 = vsel %vm546, %v4774, 0
      %v4795 = vsel %vm546, %v4775, 0
      %v4798 = vsel %vm546, %v4776, 0
      %v4801 = vsel %vm546, %v4777, 0
      %v4804 = vsel %vm546, %v4778, 0
      %v4807 = vsel %vm546, %v4779, 0
      %v4810 = vsel %vm546, %v4780, 0
      %v4813 = vsel %vm546, %v4781, 0
      %v4816 = vsel %vm546, %v4782, 0
      %v4819 = vsel %vm546, %v4783, 0
      %v4822 = vsel %vm546, %v4784, 0
      %v4825 = vsel %vm546, %v4785, 0
      %v4828 = vsel %vm546, %v4786, 0
      %v4831 = vsel %vm546, %v4787, 0
      %v4834 = vsel %vm546, %v4788, 0
      %v4837 = vsel %vm546, %v4789, 0
      %v4840 = vsel %vm546, %v4790, 0
      %4842 = vmatpush.bf16.xpose.msra.mxu0 %v4816
      %4843 = vmatpush.bf16.xpose.msra.mxu0 %v4813
      %4844 = vmatpush.bf16.xpose.msra.mxu0 %v4810
      %4845 = vmatpush.bf16.xpose.msra.mxu0 %v4807
      %4846 = vmatpush.bf16.xpose.msra.mxu0 %v4804
      %4847 = vmatpush.bf16.xpose.msra.mxu0 %v4801
      %4848 = vmatpush.bf16.xpose.msra.mxu0 %v4798
      %4849 = vmatpush.bf16.xpose.msra.mxu0 %v4795
      %4850 = vmatmul.bf16.gmra.mxu0 %v4792
      %v4851 = vpop.f32.mrf.mxu0
      %v4852 = vadd.f32 0.0, %v4851
      %v4853 = vpop.f32.mrf.mxu0
      %4854 = vdwg.mxu0
      %4855 = vmatpush.bf16.xpose.msra.mxu0 %v4840
      %4856 = vmatpush.bf16.xpose.msra.mxu0 %v4837
      %4857 = vmatpush.bf16.xpose.msra.mxu0 %v4834
      %4858 = vmatpush.bf16.xpose.msra.mxu0 %v4831
      %4859 = vmatpush.bf16.xpose.msra.mxu0 %v4828
      %4860 = vmatpush.bf16.xpose.msra.mxu0 %v4825
      %4861 = vmatpush.bf16.xpose.msra.mxu0 %v4822
      %4862 = vmatpush.bf16.xpose.msra.mxu0 %v4819
      %4863 = vmatmul.bf16.gmra.mxu0 %v4792
      %v4864 = vpop.f32.mrf.mxu0
      %v4865 = vadd.f32 0.0, %v4864
      %v4866 = vpop.f32.mrf.mxu0
      %4867 = vdwg.mxu0
      %v4868 = vadd.f32 %v4725, %v4852
      %v4869 = vadd.f32 %v4738, %v4865
      %v4870 = vld [vmem:[%s4455] sm:$0xff]
      %v4871 = vld [vmem:[%s4455 + $0x8] sm:$0xff]
      %v4872 = vld [vmem:[%s4455 + $0x18] sm:$0xff]
      %v4873 = vld [vmem:[%s4455 + $0x20] sm:$0xff]
      %v4874 = vld [vmem:[%s4455 + $0x30] sm:$0xff]
      %v4875 = vld [vmem:[%s4455 + $0x38] sm:$0xff]
      %v4876 = vld [vmem:[%s4455 + $0x48] sm:$0xff]
      %v4877 = vld [vmem:[%s4455 + $0x50] sm:$0xff]
      %v4878 = vld [vmem:[%s4455 + $0x60] sm:$0xff]
      %v4879 = vld [vmem:[%s4455 + $0x68] sm:$0xff]
      %v4880 = vld [vmem:[%s4455 + $0x78] sm:$0xff]
      %v4881 = vld [vmem:[%s4455 + $0x80] sm:$0xff]
      %v4882 = vld [vmem:[%s4455 + $0x90] sm:$0xff]
      %v4883 = vld [vmem:[%s4455 + $0x98] sm:$0xff]
      %v4884 = vld [vmem:[%s4455 + $0xa8] sm:$0xff]
      %v4885 = vld [vmem:[%s4455 + $0xb0] sm:$0xff]
      %v4886 = vld [vmem:[%s4455 + $0xc0] sm:$0xff]
      %v4887 = vld [vmem:[%s4455 + $0xc8] sm:$0xff]
      %v4888 = vld [vmem:[%s4455 + $0xd8] sm:$0xff]
      %v4889 = vld [vmem:[%s4455 + $0xe0] sm:$0xff]
      %v4890 = vld [vmem:[%s4455 + $0xf0] sm:$0xff]
      %v4891 = vld [vmem:[%s4455 + $0xf8] sm:$0xff]
      %v4892 = vld [vmem:[%s4455 + $0x108] sm:$0xff]
      %v4893 = vld [vmem:[%s4455 + $0x110] sm:$0xff]
      %v4894 = vld [vmem:[%s4455 + $0x120] sm:$0xff]
      %v4895 = vld [vmem:[%s4455 + $0x128] sm:$0xff]
      %v4896 = vld [vmem:[%s4455 + $0x138] sm:$0xff]
      %v4897 = vld [vmem:[%s4455 + $0x140] sm:$0xff]
      %v4898 = vld [vmem:[%s4455 + $0x150] sm:$0xff]
      %v4899 = vld [vmem:[%s4455 + $0x158] sm:$0xff]
      %v4900 = vld [vmem:[%s4455 + $0x168] sm:$0xff]
      %v4901 = vld [vmem:[%s4455 + $0x170] sm:$0xff]
      %s4902 = scalar_lea.vmem %s14, 6
      %v4903 = vld [vmem:[%s4902] sm:$0x3]
      %v4904 = vpack.c.bf16 %v4871, %v4870
      %v4905 = vpack.c.bf16 %v4873, %v4872
      %v4906 = vpack.c.bf16 %v4875, %v4874
      %v4907 = vpack.c.bf16 %v4877, %v4876
      %v4908 = vpack.c.bf16 %v4879, %v4878
      %v4909 = vpack.c.bf16 %v4881, %v4880
      %v4910 = vpack.c.bf16 %v4883, %v4882
      %v4911 = vpack.c.bf16 %v4885, %v4884
      %v4912 = vpack.c.bf16 %v4887, %v4886
      %v4913 = vpack.c.bf16 %v4889, %v4888
      %v4914 = vpack.c.bf16 %v4891, %v4890
      %v4915 = vpack.c.bf16 %v4893, %v4892
      %v4916 = vpack.c.bf16 %v4895, %v4894
      %v4917 = vpack.c.bf16 %v4897, %v4896
      %v4918 = vpack.c.bf16 %v4899, %v4898
      %v4919 = vpack.c.bf16 %v4901, %v4900
      %v4921 = vsel %vm546, %v4903, 0
      %v4924 = vsel %vm546, %v4904, 0
      %v4927 = vsel %vm546, %v4905, 0
      %v4930 = vsel %vm546, %v4906, 0
      %v4933 = vsel %vm546, %v4907, 0
      %v4936 = vsel %vm546, %v4908, 0
      %v4939 = vsel %vm546, %v4909, 0
      %v4942 = vsel %vm546, %v4910, 0
      %v4945 = vsel %vm546, %v4911, 0
      %v4948 = vsel %vm546, %v4912, 0
      %v4951 = vsel %vm546, %v4913, 0
      %v4954 = vsel %vm546, %v4914, 0
      %v4957 = vsel %vm546, %v4915, 0
      %v4960 = vsel %vm546, %v4916, 0
      %v4963 = vsel %vm546, %v4917, 0
      %v4966 = vsel %vm546, %v4918, 0
      %v4969 = vsel %vm546, %v4919, 0
      %4971 = vmatpush.bf16.xpose.msra.mxu0 %v4945
      %4972 = vmatpush.bf16.xpose.msra.mxu0 %v4942
      %4973 = vmatpush.bf16.xpose.msra.mxu0 %v4939
      %4974 = vmatpush.bf16.xpose.msra.mxu0 %v4936
      %4975 = vmatpush.bf16.xpose.msra.mxu0 %v4933
      %4976 = vmatpush.bf16.xpose.msra.mxu0 %v4930
      %4977 = vmatpush.bf16.xpose.msra.mxu0 %v4927
      %4978 = vmatpush.bf16.xpose.msra.mxu0 %v4924
      %4979 = vmatmul.bf16.gmra.mxu0 %v4921
      %v4980 = vpop.f32.mrf.mxu0
      %v4981 = vadd.f32 0.0, %v4980
      %v4982 = vpop.f32.mrf.mxu0
      %4983 = vdwg.mxu0
      %4984 = vmatpush.bf16.xpose.msra.mxu0 %v4969
      %4985 = vmatpush.bf16.xpose.msra.mxu0 %v4966
      %4986 = vmatpush.bf16.xpose.msra.mxu0 %v4963
      %4987 = vmatpush.bf16.xpose.msra.mxu0 %v4960
      %4988 = vmatpush.bf16.xpose.msra.mxu0 %v4957
      %4989 = vmatpush.bf16.xpose.msra.mxu0 %v4954
      %4990 = vmatpush.bf16.xpose.msra.mxu0 %v4951
      %4991 = vmatpush.bf16.xpose.msra.mxu0 %v4948
      %4992 = vmatmul.bf16.gmra.mxu0 %v4921
      %v4993 = vpop.f32.mrf.mxu0
      %v4994 = vadd.f32 0.0, %v4993
      %v4995 = vpop.f32.mrf.mxu0
      %4996 = vdwg.mxu0
      %v4997 = vadd.f32 %v4868, %v4981
      %v4998 = vadd.f32 %v4869, %v4994
      %v4999 = vld [vmem:[%s4455 + $0x1] sm:$0xff]
      %v5000 = vld [vmem:[%s4455 + $0x9] sm:$0xff]
      %v5001 = vld [vmem:[%s4455 + $0x19] sm:$0xff]
      %v5002 = vld [vmem:[%s4455 + $0x21] sm:$0xff]
      %v5003 = vld [vmem:[%s4455 + $0x31] sm:$0xff]
      %v5004 = vld [vmem:[%s4455 + $0x39] sm:$0xff]
      %v5005 = vld [vmem:[%s4455 + $0x49] sm:$0xff]
      %v5006 = vld [vmem:[%s4455 + $0x51] sm:$0xff]
      %v5007 = vld [vmem:[%s4455 + $0x61] sm:$0xff]
      %v5008 = vld [vmem:[%s4455 + $0x69] sm:$0xff]
      %v5009 = vld [vmem:[%s4455 + $0x79] sm:$0xff]
      %v5010 = vld [vmem:[%s4455 + $0x81] sm:$0xff]
      %v5011 = vld [vmem:[%s4455 + $0x91] sm:$0xff]
      %v5012 = vld [vmem:[%s4455 + $0x99] sm:$0xff]
      %v5013 = vld [vmem:[%s4455 + $0xa9] sm:$0xff]
      %v5014 = vld [vmem:[%s4455 + $0xb1] sm:$0xff]
      %v5015 = vld [vmem:[%s4455 + $0xc1] sm:$0xff]
      %v5016 = vld [vmem:[%s4455 + $0xc9] sm:$0xff]
      %v5017 = vld [vmem:[%s4455 + $0xd9] sm:$0xff]
      %v5018 = vld [vmem:[%s4455 + $0xe1] sm:$0xff]
      %v5019 = vld [vmem:[%s4455 + $0xf1] sm:$0xff]
      %v5020 = vld [vmem:[%s4455 + $0xf9] sm:$0xff]
      %v5021 = vld [vmem:[%s4455 + $0x109] sm:$0xff]
      %v5022 = vld [vmem:[%s4455 + $0x111] sm:$0xff]
      %v5023 = vld [vmem:[%s4455 + $0x121] sm:$0xff]
      %v5024 = vld [vmem:[%s4455 + $0x129] sm:$0xff]
      %v5025 = vld [vmem:[%s4455 + $0x139] sm:$0xff]
      %v5026 = vld [vmem:[%s4455 + $0x141] sm:$0xff]
      %v5027 = vld [vmem:[%s4455 + $0x151] sm:$0xff]
      %v5028 = vld [vmem:[%s4455 + $0x159] sm:$0xff]
      %v5029 = vld [vmem:[%s4455 + $0x169] sm:$0xff]
      %v5030 = vld [vmem:[%s4455 + $0x171] sm:$0xff]
      %s5031 = scalar_lea.vmem %s14, 8
      %v5032 = vld [vmem:[%s5031] sm:$0x3]
      %v5033 = vpack.c.bf16 %v5000, %v4999
      %v5034 = vpack.c.bf16 %v5002, %v5001
      %v5035 = vpack.c.bf16 %v5004, %v5003
      %v5036 = vpack.c.bf16 %v5006, %v5005
      %v5037 = vpack.c.bf16 %v5008, %v5007
      %v5038 = vpack.c.bf16 %v5010, %v5009
      %v5039 = vpack.c.bf16 %v5012, %v5011
      %v5040 = vpack.c.bf16 %v5014, %v5013
      %v5041 = vpack.c.bf16 %v5016, %v5015
      %v5042 = vpack.c.bf16 %v5018, %v5017
      %v5043 = vpack.c.bf16 %v5020, %v5019
      %v5044 = vpack.c.bf16 %v5022, %v5021
      %v5045 = vpack.c.bf16 %v5024, %v5023
      %v5046 = vpack.c.bf16 %v5026, %v5025
      %v5047 = vpack.c.bf16 %v5028, %v5027
      %v5048 = vpack.c.bf16 %v5030, %v5029
      %v5050 = vsel %vm546, %v5032, 0
      %v5053 = vsel %vm546, %v5033, 0
      %v5056 = vsel %vm546, %v5034, 0
      %v5059 = vsel %vm546, %v5035, 0
      %v5062 = vsel %vm546, %v5036, 0
      %v5065 = vsel %vm546, %v5037, 0
      %v5068 = vsel %vm546, %v5038, 0
      %v5071 = vsel %vm546, %v5039, 0
      %v5074 = vsel %vm546, %v5040, 0
      %v5077 = vsel %vm546, %v5041, 0
      %v5080 = vsel %vm546, %v5042, 0
      %v5083 = vsel %vm546, %v5043, 0
      %v5086 = vsel %vm546, %v5044, 0
      %v5089 = vsel %vm546, %v5045, 0
      %v5092 = vsel %vm546, %v5046, 0
      %v5095 = vsel %vm546, %v5047, 0
      %v5098 = vsel %vm546, %v5048, 0
      %5100 = vmatpush.bf16.xpose.msra.mxu0 %v5074
      %5101 = vmatpush.bf16.xpose.msra.mxu0 %v5071
      %5102 = vmatpush.bf16.xpose.msra.mxu0 %v5068
      %5103 = vmatpush.bf16.xpose.msra.mxu0 %v5065
      %5104 = vmatpush.bf16.xpose.msra.mxu0 %v5062
      %5105 = vmatpush.bf16.xpose.msra.mxu0 %v5059
      %5106 = vmatpush.bf16.xpose.msra.mxu0 %v5056
      %5107 = vmatpush.bf16.xpose.msra.mxu0 %v5053
      %5108 = vmatmul.bf16.gmra.mxu0 %v5050
      %v5109 = vpop.f32.mrf.mxu0
      %v5110 = vadd.f32 0.0, %v5109
      %v5111 = vpop.f32.mrf.mxu0
      %5112 = vdwg.mxu0
      %5113 = vmatpush.bf16.xpose.msra.mxu0 %v5098
      %5114 = vmatpush.bf16.xpose.msra.mxu0 %v5095
      %5115 = vmatpush.bf16.xpose.msra.mxu0 %v5092
      %5116 = vmatpush.bf16.xpose.msra.mxu0 %v5089
      %5117 = vmatpush.bf16.xpose.msra.mxu0 %v5086
      %5118 = vmatpush.bf16.xpose.msra.mxu0 %v5083
      %5119 = vmatpush.bf16.xpose.msra.mxu0 %v5080
      %5120 = vmatpush.bf16.xpose.msra.mxu0 %v5077
      %5121 = vmatmul.bf16.gmra.mxu0 %v5050
      %v5122 = vpop.f32.mrf.mxu0
      %v5123 = vadd.f32 0.0, %v5122
      %v5124 = vpop.f32.mrf.mxu0
      %5125 = vdwg.mxu0
      %v5126 = vadd.f32 %v4997, %v5110
      %v5127 = vadd.f32 %v4998, %v5123
      %v5128 = vld [vmem:[%s4455 + $0x2] sm:$0xff]
      %v5129 = vld [vmem:[%s4455 + $0xa] sm:$0xff]
      %v5130 = vld [vmem:[%s4455 + $0x1a] sm:$0xff]
      %v5131 = vld [vmem:[%s4455 + $0x22] sm:$0xff]
      %v5132 = vld [vmem:[%s4455 + $0x32] sm:$0xff]
      %v5133 = vld [vmem:[%s4455 + $0x3a] sm:$0xff]
      %v5134 = vld [vmem:[%s4455 + $0x4a] sm:$0xff]
      %v5135 = vld [vmem:[%s4455 + $0x52] sm:$0xff]
      %v5136 = vld [vmem:[%s4455 + $0x62] sm:$0xff]
      %v5137 = vld [vmem:[%s4455 + $0x6a] sm:$0xff]
      %v5138 = vld [vmem:[%s4455 + $0x7a] sm:$0xff]
      %v5139 = vld [vmem:[%s4455 + $0x82] sm:$0xff]
      %v5140 = vld [vmem:[%s4455 + $0x92] sm:$0xff]
      %v5141 = vld [vmem:[%s4455 + $0x9a] sm:$0xff]
      %v5142 = vld [vmem:[%s4455 + $0xaa] sm:$0xff]
      %v5143 = vld [vmem:[%s4455 + $0xb2] sm:$0xff]
      %v5144 = vld [vmem:[%s4455 + $0xc2] sm:$0xff]
      %v5145 = vld [vmem:[%s4455 + $0xca] sm:$0xff]
      %v5146 = vld [vmem:[%s4455 + $0xda] sm:$0xff]
      %v5147 = vld [vmem:[%s4455 + $0xe2] sm:$0xff]
      %v5148 = vld [vmem:[%s4455 + $0xf2] sm:$0xff]
      %v5149 = vld [vmem:[%s4455 + $0xfa] sm:$0xff]
      %v5150 = vld [vmem:[%s4455 + $0x10a] sm:$0xff]
      %v5151 = vld [vmem:[%s4455 + $0x112] sm:$0xff]
      %v5152 = vld [vmem:[%s4455 + $0x122] sm:$0xff]
      %v5153 = vld [vmem:[%s4455 + $0x12a] sm:$0xff]
      %v5154 = vld [vmem:[%s4455 + $0x13a] sm:$0xff]
      %v5155 = vld [vmem:[%s4455 + $0x142] sm:$0xff]
      %v5156 = vld [vmem:[%s4455 + $0x152] sm:$0xff]
      %v5157 = vld [vmem:[%s4455 + $0x15a] sm:$0xff]
      %v5158 = vld [vmem:[%s4455 + $0x16a] sm:$0xff]
      %v5159 = vld [vmem:[%s4455 + $0x172] sm:$0xff]
      %s5160 = scalar_lea.vmem %s14, 10
      %v5161 = vld [vmem:[%s5160] sm:$0x3]
      %v5162 = vpack.c.bf16 %v5129, %v5128
      %v5163 = vpack.c.bf16 %v5131, %v5130
      %v5164 = vpack.c.bf16 %v5133, %v5132
      %v5165 = vpack.c.bf16 %v5135, %v5134
      %v5166 = vpack.c.bf16 %v5137, %v5136
      %v5167 = vpack.c.bf16 %v5139, %v5138
      %v5168 = vpack.c.bf16 %v5141, %v5140
      %v5169 = vpack.c.bf16 %v5143, %v5142
      %v5170 = vpack.c.bf16 %v5145, %v5144
      %v5171 = vpack.c.bf16 %v5147, %v5146
      %v5172 = vpack.c.bf16 %v5149, %v5148
      %v5173 = vpack.c.bf16 %v5151, %v5150
      %v5174 = vpack.c.bf16 %v5153, %v5152
      %v5175 = vpack.c.bf16 %v5155, %v5154
      %v5176 = vpack.c.bf16 %v5157, %v5156
      %v5177 = vpack.c.bf16 %v5159, %v5158
      %v5179 = vsel %vm546, %v5161, 0
      %v5182 = vsel %vm546, %v5162, 0
      %v5185 = vsel %vm546, %v5163, 0
      %v5188 = vsel %vm546, %v5164, 0
      %v5191 = vsel %vm546, %v5165, 0
      %v5194 = vsel %vm546, %v5166, 0
      %v5197 = vsel %vm546, %v5167, 0
      %v5200 = vsel %vm546, %v5168, 0
      %v5203 = vsel %vm546, %v5169, 0
      %v5206 = vsel %vm546, %v5170, 0
      %v5209 = vsel %vm546, %v5171, 0
      %v5212 = vsel %vm546, %v5172, 0
      %v5215 = vsel %vm546, %v5173, 0
      %v5218 = vsel %vm546, %v5174, 0
      %v5221 = vsel %vm546, %v5175, 0
      %v5224 = vsel %vm546, %v5176, 0
      %v5227 = vsel %vm546, %v5177, 0
      %5229 = vmatpush.bf16.xpose.msra.mxu0 %v5203
      %5230 = vmatpush.bf16.xpose.msra.mxu0 %v5200
      %5231 = vmatpush.bf16.xpose.msra.mxu0 %v5197
      %5232 = vmatpush.bf16.xpose.msra.mxu0 %v5194
      %5233 = vmatpush.bf16.xpose.msra.mxu0 %v5191
      %5234 = vmatpush.bf16.xpose.msra.mxu0 %v5188
      %5235 = vmatpush.bf16.xpose.msra.mxu0 %v5185
      %5236 = vmatpush.bf16.xpose.msra.mxu0 %v5182
      %5237 = vmatmul.bf16.gmra.mxu0 %v5179
      %v5238 = vpop.f32.mrf.mxu0
      %v5239 = vadd.f32 0.0, %v5238
      %v5240 = vpop.f32.mrf.mxu0
      %5241 = vdwg.mxu0
      %5242 = vmatpush.bf16.xpose.msra.mxu0 %v5227
      %5243 = vmatpush.bf16.xpose.msra.mxu0 %v5224
      %5244 = vmatpush.bf16.xpose.msra.mxu0 %v5221
      %5245 = vmatpush.bf16.xpose.msra.mxu0 %v5218
      %5246 = vmatpush.bf16.xpose.msra.mxu0 %v5215
      %5247 = vmatpush.bf16.xpose.msra.mxu0 %v5212
      %5248 = vmatpush.bf16.xpose.msra.mxu0 %v5209
      %5249 = vmatpush.bf16.xpose.msra.mxu0 %v5206
      %5250 = vmatmul.bf16.gmra.mxu0 %v5179
      %v5251 = vpop.f32.mrf.mxu0
      %v5252 = vadd.f32 0.0, %v5251
      %v5253 = vpop.f32.mrf.mxu0
      %5254 = vdwg.mxu0
      %v5255 = vadd.f32 %v5126, %v5239
      %v5256 = vadd.f32 %v5127, %v5252
      %s5257 = scalar_lea.vmem [#allocation2], 48
      %v5258 = vld [vmem:[%s5257] sm:$0xff]
      %v5259 = vld [vmem:[%s5257 + $0x8] sm:$0xff]
      %v5260 = vld [vmem:[%s5257 + $0x18] sm:$0xff]
      %v5261 = vld [vmem:[%s5257 + $0x20] sm:$0xff]
      %v5262 = vld [vmem:[%s5257 + $0x30] sm:$0xff]
      %v5263 = vld [vmem:[%s5257 + $0x38] sm:$0xff]
      %v5264 = vld [vmem:[%s5257 + $0x48] sm:$0xff]
      %v5265 = vld [vmem:[%s5257 + $0x50] sm:$0xff]
      %v5266 = vld [vmem:[%s5257 + $0x60] sm:$0xff]
      %v5267 = vld [vmem:[%s5257 + $0x68] sm:$0xff]
      %v5268 = vld [vmem:[%s5257 + $0x78] sm:$0xff]
      %v5269 = vld [vmem:[%s5257 + $0x80] sm:$0xff]
      %v5270 = vld [vmem:[%s5257 + $0x90] sm:$0xff]
      %v5271 = vld [vmem:[%s5257 + $0x98] sm:$0xff]
      %v5272 = vld [vmem:[%s5257 + $0xa8] sm:$0xff]
      %v5273 = vld [vmem:[%s5257 + $0xb0] sm:$0xff]
      %v5274 = vld [vmem:[%s5257 + $0xc0] sm:$0xff]
      %v5275 = vld [vmem:[%s5257 + $0xc8] sm:$0xff]
      %v5276 = vld [vmem:[%s5257 + $0xd8] sm:$0xff]
      %v5277 = vld [vmem:[%s5257 + $0xe0] sm:$0xff]
      %v5278 = vld [vmem:[%s5257 + $0xf0] sm:$0xff]
      %v5279 = vld [vmem:[%s5257 + $0xf8] sm:$0xff]
      %v5280 = vld [vmem:[%s5257 + $0x108] sm:$0xff]
      %v5281 = vld [vmem:[%s5257 + $0x110] sm:$0xff]
      %v5282 = vld [vmem:[%s5257 + $0x120] sm:$0xff]
      %v5283 = vld [vmem:[%s5257 + $0x128] sm:$0xff]
      %v5284 = vld [vmem:[%s5257 + $0x138] sm:$0xff]
      %v5285 = vld [vmem:[%s5257 + $0x140] sm:$0xff]
      %v5286 = vld [vmem:[%s5257 + $0x150] sm:$0xff]
      %v5287 = vld [vmem:[%s5257 + $0x158] sm:$0xff]
      %v5288 = vld [vmem:[%s5257 + $0x168] sm:$0xff]
      %v5289 = vld [vmem:[%s5257 + $0x170] sm:$0xff]
      %s5290 = scalar_lea.vmem %s14, 12
      %v5291 = vld [vmem:[%s5290] sm:$0x3]
      %v5292 = vpack.c.bf16 %v5259, %v5258
      %v5293 = vpack.c.bf16 %v5261, %v5260
      %v5294 = vpack.c.bf16 %v5263, %v5262
      %v5295 = vpack.c.bf16 %v5265, %v5264
      %v5296 = vpack.c.bf16 %v5267, %v5266
      %v5297 = vpack.c.bf16 %v5269, %v5268
      %v5298 = vpack.c.bf16 %v5271, %v5270
      %v5299 = vpack.c.bf16 %v5273, %v5272
      %v5300 = vpack.c.bf16 %v5275, %v5274
      %v5301 = vpack.c.bf16 %v5277, %v5276
      %v5302 = vpack.c.bf16 %v5279, %v5278
      %v5303 = vpack.c.bf16 %v5281, %v5280
      %v5304 = vpack.c.bf16 %v5283, %v5282
      %v5305 = vpack.c.bf16 %v5285, %v5284
      %v5306 = vpack.c.bf16 %v5287, %v5286
      %v5307 = vpack.c.bf16 %v5289, %v5288
      %v5309 = vsel %vm546, %v5291, 0
      %v5312 = vsel %vm546, %v5292, 0
      %v5315 = vsel %vm546, %v5293, 0
      %v5318 = vsel %vm546, %v5294, 0
      %v5321 = vsel %vm546, %v5295, 0
      %v5324 = vsel %vm546, %v5296, 0
      %v5327 = vsel %vm546, %v5297, 0
      %v5330 = vsel %vm546, %v5298, 0
      %v5333 = vsel %vm546, %v5299, 0
      %v5336 = vsel %vm546, %v5300, 0
      %v5339 = vsel %vm546, %v5301, 0
      %v5342 = vsel %vm546, %v5302, 0
      %v5345 = vsel %vm546, %v5303, 0
      %v5348 = vsel %vm546, %v5304, 0
      %v5351 = vsel %vm546, %v5305, 0
      %v5354 = vsel %vm546, %v5306, 0
      %v5357 = vsel %vm546, %v5307, 0
      %5359 = vmatpush.bf16.xpose.msra.mxu0 %v5333
      %5360 = vmatpush.bf16.xpose.msra.mxu0 %v5330
      %5361 = vmatpush.bf16.xpose.msra.mxu0 %v5327
      %5362 = vmatpush.bf16.xpose.msra.mxu0 %v5324
      %5363 = vmatpush.bf16.xpose.msra.mxu0 %v5321
      %5364 = vmatpush.bf16.xpose.msra.mxu0 %v5318
      %5365 = vmatpush.bf16.xpose.msra.mxu0 %v5315
      %5366 = vmatpush.bf16.xpose.msra.mxu0 %v5312
      %5367 = vmatmul.bf16.gmra.mxu0 %v5309
      %v5368 = vpop.f32.mrf.mxu0
      %v5369 = vadd.f32 0.0, %v5368
      %v5370 = vpop.f32.mrf.mxu0
      %5371 = vdwg.mxu0
      %5372 = vmatpush.bf16.xpose.msra.mxu0 %v5357
      %5373 = vmatpush.bf16.xpose.msra.mxu0 %v5354
      %5374 = vmatpush.bf16.xpose.msra.mxu0 %v5351
      %5375 = vmatpush.bf16.xpose.msra.mxu0 %v5348
      %5376 = vmatpush.bf16.xpose.msra.mxu0 %v5345
      %5377 = vmatpush.bf16.xpose.msra.mxu0 %v5342
      %5378 = vmatpush.bf16.xpose.msra.mxu0 %v5339
      %5379 = vmatpush.bf16.xpose.msra.mxu0 %v5336
      %5380 = vmatmul.bf16.gmra.mxu0 %v5309
      %v5381 = vpop.f32.mrf.mxu0
      %v5382 = vadd.f32 0.0, %v5381
      %v5383 = vpop.f32.mrf.mxu0
      %5384 = vdwg.mxu0
      %v5385 = vadd.f32 %v5255, %v5369
      %v5386 = vadd.f32 %v5256, %v5382
      %v5387 = vld [vmem:[%s5257 + $0x1] sm:$0xff]
      %v5388 = vld [vmem:[%s5257 + $0x9] sm:$0xff]
      %v5389 = vld [vmem:[%s5257 + $0x19] sm:$0xff]
      %v5390 = vld [vmem:[%s5257 + $0x21] sm:$0xff]
      %v5391 = vld [vmem:[%s5257 + $0x31] sm:$0xff]
      %v5392 = vld [vmem:[%s5257 + $0x39] sm:$0xff]
      %v5393 = vld [vmem:[%s5257 + $0x49] sm:$0xff]
      %v5394 = vld [vmem:[%s5257 + $0x51] sm:$0xff]
      %v5395 = vld [vmem:[%s5257 + $0x61] sm:$0xff]
      %v5396 = vld [vmem:[%s5257 + $0x69] sm:$0xff]
      %v5397 = vld [vmem:[%s5257 + $0x79] sm:$0xff]
      %v5398 = vld [vmem:[%s5257 + $0x81] sm:$0xff]
      %v5399 = vld [vmem:[%s5257 + $0x91] sm:$0xff]
      %v5400 = vld [vmem:[%s5257 + $0x99] sm:$0xff]
      %v5401 = vld [vmem:[%s5257 + $0xa9] sm:$0xff]
      %v5402 = vld [vmem:[%s5257 + $0xb1] sm:$0xff]
      %v5403 = vld [vmem:[%s5257 + $0xc1] sm:$0xff]
      %v5404 = vld [vmem:[%s5257 + $0xc9] sm:$0xff]
      %v5405 = vld [vmem:[%s5257 + $0xd9] sm:$0xff]
      %v5406 = vld [vmem:[%s5257 + $0xe1] sm:$0xff]
      %v5407 = vld [vmem:[%s5257 + $0xf1] sm:$0xff]
      %v5408 = vld [vmem:[%s5257 + $0xf9] sm:$0xff]
      %v5409 = vld [vmem:[%s5257 + $0x109] sm:$0xff]
      %v5410 = vld [vmem:[%s5257 + $0x111] sm:$0xff]
      %v5411 = vld [vmem:[%s5257 + $0x121] sm:$0xff]
      %v5412 = vld [vmem:[%s5257 + $0x129] sm:$0xff]
      %v5413 = vld [vmem:[%s5257 + $0x139] sm:$0xff]
      %v5414 = vld [vmem:[%s5257 + $0x141] sm:$0xff]
      %v5415 = vld [vmem:[%s5257 + $0x151] sm:$0xff]
      %v5416 = vld [vmem:[%s5257 + $0x159] sm:$0xff]
      %v5417 = vld [vmem:[%s5257 + $0x169] sm:$0xff]
      %v5418 = vld [vmem:[%s5257 + $0x171] sm:$0xff]
      %s5419 = scalar_lea.vmem %s14, 14
      %v5420 = vld [vmem:[%s5419] sm:$0x3]
      %v5421 = vpack.c.bf16 %v5388, %v5387
      %v5422 = vpack.c.bf16 %v5390, %v5389
      %v5423 = vpack.c.bf16 %v5392, %v5391
      %v5424 = vpack.c.bf16 %v5394, %v5393
      %v5425 = vpack.c.bf16 %v5396, %v5395
      %v5426 = vpack.c.bf16 %v5398, %v5397
      %v5427 = vpack.c.bf16 %v5400, %v5399
      %v5428 = vpack.c.bf16 %v5402, %v5401
      %v5429 = vpack.c.bf16 %v5404, %v5403
      %v5430 = vpack.c.bf16 %v5406, %v5405
      %v5431 = vpack.c.bf16 %v5408, %v5407
      %v5432 = vpack.c.bf16 %v5410, %v5409
      %v5433 = vpack.c.bf16 %v5412, %v5411
      %v5434 = vpack.c.bf16 %v5414, %v5413
      %v5435 = vpack.c.bf16 %v5416, %v5415
      %v5436 = vpack.c.bf16 %v5418, %v5417
      %v5438 = vsel %vm546, %v5420, 0
      %v5441 = vsel %vm546, %v5421, 0
      %v5444 = vsel %vm546, %v5422, 0
      %v5447 = vsel %vm546, %v5423, 0
      %v5450 = vsel %vm546, %v5424, 0
      %v5453 = vsel %vm546, %v5425, 0
      %v5456 = vsel %vm546, %v5426, 0
      %v5459 = vsel %vm546, %v5427, 0
      %v5462 = vsel %vm546, %v5428, 0
      %v5465 = vsel %vm546, %v5429, 0
      %v5468 = vsel %vm546, %v5430, 0
      %v5471 = vsel %vm546, %v5431, 0
      %v5474 = vsel %vm546, %v5432, 0
      %v5477 = vsel %vm546, %v5433, 0
      %v5480 = vsel %vm546, %v5434, 0
      %v5483 = vsel %vm546, %v5435, 0
      %v5486 = vsel %vm546, %v5436, 0
      %5488 = vmatpush.bf16.xpose.msra.mxu0 %v5462
      %5489 = vmatpush.bf16.xpose.msra.mxu0 %v5459
      %5490 = vmatpush.bf16.xpose.msra.mxu0 %v5456
      %5491 = vmatpush.bf16.xpose.msra.mxu0 %v5453
      %5492 = vmatpush.bf16.xpose.msra.mxu0 %v5450
      %5493 = vmatpush.bf16.xpose.msra.mxu0 %v5447
      %5494 = vmatpush.bf16.xpose.msra.mxu0 %v5444
      %5495 = vmatpush.bf16.xpose.msra.mxu0 %v5441
      %5496 = vmatmul.bf16.gmra.mxu0 %v5438
      %v5497 = vpop.f32.mrf.mxu0
      %v5498 = vadd.f32 0.0, %v5497
      %v5499 = vpop.f32.mrf.mxu0
      %5500 = vdwg.mxu0
      %5501 = vmatpush.bf16.xpose.msra.mxu0 %v5486
      %5502 = vmatpush.bf16.xpose.msra.mxu0 %v5483
      %5503 = vmatpush.bf16.xpose.msra.mxu0 %v5480
      %5504 = vmatpush.bf16.xpose.msra.mxu0 %v5477
      %5505 = vmatpush.bf16.xpose.msra.mxu0 %v5474
      %5506 = vmatpush.bf16.xpose.msra.mxu0 %v5471
      %5507 = vmatpush.bf16.xpose.msra.mxu0 %v5468
      %5508 = vmatpush.bf16.xpose.msra.mxu0 %v5465
      %5509 = vmatmul.bf16.gmra.mxu0 %v5438
      %v5510 = vpop.f32.mrf.mxu0
      %v5511 = vadd.f32 0.0, %v5510
      %v5512 = vpop.f32.mrf.mxu0
      %5513 = vdwg.mxu0
      %v5514 = vadd.f32 %v5385, %v5498
      %v5515 = vadd.f32 %v5386, %v5511
      %v5516 = vld [vmem:[%s5257 + $0x2] sm:$0xff]
      %v5517 = vld [vmem:[%s5257 + $0xa] sm:$0xff]
      %v5518 = vld [vmem:[%s5257 + $0x1a] sm:$0xff]
      %v5519 = vld [vmem:[%s5257 + $0x22] sm:$0xff]
      %v5520 = vld [vmem:[%s5257 + $0x32] sm:$0xff]
      %v5521 = vld [vmem:[%s5257 + $0x3a] sm:$0xff]
      %v5522 = vld [vmem:[%s5257 + $0x4a] sm:$0xff]
      %v5523 = vld [vmem:[%s5257 + $0x52] sm:$0xff]
      %v5524 = vld [vmem:[%s5257 + $0x62] sm:$0xff]
      %v5525 = vld [vmem:[%s5257 + $0x6a] sm:$0xff]
      %v5526 = vld [vmem:[%s5257 + $0x7a] sm:$0xff]
      %v5527 = vld [vmem:[%s5257 + $0x82] sm:$0xff]
      %v5528 = vld [vmem:[%s5257 + $0x92] sm:$0xff]
      %v5529 = vld [vmem:[%s5257 + $0x9a] sm:$0xff]
      %v5530 = vld [vmem:[%s5257 + $0xaa] sm:$0xff]
      %v5531 = vld [vmem:[%s5257 + $0xb2] sm:$0xff]
      %v5532 = vld [vmem:[%s5257 + $0xc2] sm:$0xff]
      %v5533 = vld [vmem:[%s5257 + $0xca] sm:$0xff]
      %v5534 = vld [vmem:[%s5257 + $0xda] sm:$0xff]
      %v5535 = vld [vmem:[%s5257 + $0xe2] sm:$0xff]
      %v5536 = vld [vmem:[%s5257 + $0xf2] sm:$0xff]
      %v5537 = vld [vmem:[%s5257 + $0xfa] sm:$0xff]
      %v5538 = vld [vmem:[%s5257 + $0x10a] sm:$0xff]
      %v5539 = vld [vmem:[%s5257 + $0x112] sm:$0xff]
      %v5540 = vld [vmem:[%s5257 + $0x122] sm:$0xff]
      %v5541 = vld [vmem:[%s5257 + $0x12a] sm:$0xff]
      %v5542 = vld [vmem:[%s5257 + $0x13a] sm:$0xff]
      %v5543 = vld [vmem:[%s5257 + $0x142] sm:$0xff]
      %v5544 = vld [vmem:[%s5257 + $0x152] sm:$0xff]
      %v5545 = vld [vmem:[%s5257 + $0x15a] sm:$0xff]
      %v5546 = vld [vmem:[%s5257 + $0x16a] sm:$0xff]
      %v5547 = vld [vmem:[%s5257 + $0x172] sm:$0xff]
      %s5548 = scalar_lea.vmem %s14, 16
      %v5549 = vld [vmem:[%s5548] sm:$0x3]
      %v5550 = vpack.c.bf16 %v5517, %v5516
      %v5551 = vpack.c.bf16 %v5519, %v5518
      %v5552 = vpack.c.bf16 %v5521, %v5520
      %v5553 = vpack.c.bf16 %v5523, %v5522
      %v5554 = vpack.c.bf16 %v5525, %v5524
      %v5555 = vpack.c.bf16 %v5527, %v5526
      %v5556 = vpack.c.bf16 %v5529, %v5528
      %v5557 = vpack.c.bf16 %v5531, %v5530
      %v5558 = vpack.c.bf16 %v5533, %v5532
      %v5559 = vpack.c.bf16 %v5535, %v5534
      %v5560 = vpack.c.bf16 %v5537, %v5536
      %v5561 = vpack.c.bf16 %v5539, %v5538
      %v5562 = vpack.c.bf16 %v5541, %v5540
      %v5563 = vpack.c.bf16 %v5543, %v5542
      %v5564 = vpack.c.bf16 %v5545, %v5544
      %v5565 = vpack.c.bf16 %v5547, %v5546
      %v5567 = vsel %vm546, %v5549, 0
      %v5570 = vsel %vm546, %v5550, 0
      %v5573 = vsel %vm546, %v5551, 0
      %v5576 = vsel %vm546, %v5552, 0
      %v5579 = vsel %vm546, %v5553, 0
      %v5582 = vsel %vm546, %v5554, 0
      %v5585 = vsel %vm546, %v5555, 0
      %v5588 = vsel %vm546, %v5556, 0
      %v5591 = vsel %vm546, %v5557, 0
      %v5594 = vsel %vm546, %v5558, 0
      %v5597 = vsel %vm546, %v5559, 0
      %v5600 = vsel %vm546, %v5560, 0
      %v5603 = vsel %vm546, %v5561, 0
      %v5606 = vsel %vm546, %v5562, 0
      %v5609 = vsel %vm546, %v5563, 0
      %v5612 = vsel %vm546, %v5564, 0
      %v5615 = vsel %vm546, %v5565, 0
      %5617 = vmatpush.bf16.xpose.msra.mxu0 %v5591
      %5618 = vmatpush.bf16.xpose.msra.mxu0 %v5588
      %5619 = vmatpush.bf16.xpose.msra.mxu0 %v5585
      %5620 = vmatpush.bf16.xpose.msra.mxu0 %v5582
      %5621 = vmatpush.bf16.xpose.msra.mxu0 %v5579
      %5622 = vmatpush.bf16.xpose.msra.mxu0 %v5576
      %5623 = vmatpush.bf16.xpose.msra.mxu0 %v5573
      %5624 = vmatpush.bf16.xpose.msra.mxu0 %v5570
      %5625 = vmatmul.bf16.gmra.mxu0 %v5567
      %v5626 = vpop.f32.mrf.mxu0
      %v5627 = vadd.f32 0.0, %v5626
      %v5628 = vpop.f32.mrf.mxu0
      %5629 = vdwg.mxu0
      %5630 = vmatpush.bf16.xpose.msra.mxu0 %v5615
      %5631 = vmatpush.bf16.xpose.msra.mxu0 %v5612
      %5632 = vmatpush.bf16.xpose.msra.mxu0 %v5609
      %5633 = vmatpush.bf16.xpose.msra.mxu0 %v5606
      %5634 = vmatpush.bf16.xpose.msra.mxu0 %v5603
      %5635 = vmatpush.bf16.xpose.msra.mxu0 %v5600
      %5636 = vmatpush.bf16.xpose.msra.mxu0 %v5597
      %5637 = vmatpush.bf16.xpose.msra.mxu0 %v5594
      %5638 = vmatmul.bf16.gmra.mxu0 %v5567
      %v5639 = vpop.f32.mrf.mxu0
      %v5640 = vadd.f32 0.0, %v5639
      %v5641 = vpop.f32.mrf.mxu0
      %5642 = vdwg.mxu0
      %v5643 = vadd.f32 %v5514, %v5627
      %v5644 = vadd.f32 %v5515, %v5640
      %v5645 = vld [vmem:[%s15] sm:$0xf]
      %5647 = vset.pattern.permute.xlu0 0
      %5648 = vperm.xlu0 %5647, %v5645
      %v5649 = vpop.permute.xlu0 %5648
      %v5651 = vadd.f32 %v5643, %v5649
      %v5652 = vadd.f32 %v5644, %v5649
      %v5655 = vrot.slane %v5652, 4
      %v5656 = vsel %vm4102, %v5651, %v5655
      %5658 = vst [vmem:[%s538] sm:$0xff] %v5656
      %p5659 = scmp.lt.s32.totalorder %s27, 1
      %s5660 = scalar_select %p5659, %s27, 1
      %s5661 = smul.addr %s5660, 2
      %s5662 = smul.addr %s5661, 4
      %s5663 = scalar_lea.vmem %s16, %s5662
      // Predicated region
      $region85: #{unet_wrapper_forward.1} parent=83 // pred_check
        %p5664 = pneg %p391
      $region86: #{unet_wrapper_forward.1} parent=83 // pred_check_branch
        %5666 = sbr.rel (%p5664) target = $region88
      $region87: #{unet_wrapper_forward.1} parent=83 // pred_region
        _
      $region88: #{unet_wrapper_forward.1} parent=83 // pred_fallthru
        _
    $region84: #{unet_wrapper_forward.1} parent=5 // pred_fallthru
      _
    %p5667 = scmp.le.s32.totalorder 2, %s22
    // Predicated region
    $region89: #{unet_wrapper_forward.1} parent=5 // pred_check
      %p5668 = pneg %p5667
    $region90: #{unet_wrapper_forward.1} parent=5 // pred_check_branch
      %5670 = sbr.rel (%p5668) target = $region92
    $region91: #{unet_wrapper_forward.1} parent=5 // pred_region
      %s5671 = ssub.s32 %s22, 2
      // Predicated region
      $region93: #{unet_wrapper_forward.1} parent=91 // pred_check
        %p5672 = pneg %p397
      $region94: #{unet_wrapper_forward.1} parent=91 // pred_check_branch
        %5674 = sbr.rel (%p5672) target = $region96
      $region95: #{unet_wrapper_forward.1} parent=91 // pred_region
        %p5675 = scmp.lt.s32.totalorder %s28, 1
        %s5676 = scalar_select %p5675, %s28, 1
        %s5677 = smul.addr %s5676, 2
        %s5678 = smul.addr %s5677, 4
        %s5679 = scalar_lea.vmem %s16, %s5678
      $region96: #{unet_wrapper_forward.1} parent=91 // pred_fallthru
        _
    $region92: #{unet_wrapper_forward.1} parent=5 // pred_fallthru
      _
  $region6: #{unet_wrapper_forward.1} parent=0 // loop_footer
    %s26 = sadd.s32 1, %s22
  $region7: #{unet_wrapper_forward.1} parent=0 // loop_footer_branch
    %21 = sbr.rel target = $region3
  $region8: #{unet_wrapper_forward.1} parent=0 // loop_exit
    _

</llo_original>
